<compile_context>
chip_gen: v6e
topology: v6e:2x2x1
jax: 0.10.0
libtpu: 0.0.40
codegen_flags: <defaults>
</compile_context>

<pallas_src>
import functools

import jax
import jax.numpy as jnp
from jax.experimental import pallas as pl
from jax.experimental.pallas import tpu as pltpu


def _round_up(x, m):
    return (x + m - 1) // m * m


def _cc_decoder_kernel(emb_ref, h0_ref, c0_ref, ctx_ref, ctxp_ref, mask_ref,
                       w_e_ref, b_ref, w_rec_ref, w_out_ref,
                       out_ref, hfin_ref, cfin_ref,
                       gp_ref, *, approx_recip: bool):
    """Whole decode loop in one invocation; recurrent state carried in vregs."""
    Bp, T, Hp = out_ref.shape
    cdt = w_rec_ref.dtype          # MXU operand dtype (bf16 or f32)
    f32 = jnp.float32

    # ---- Prologue: hoist the non-recurrent input projection out of the loop.
    # One (T*Bp, E) @ (E, 4Hp) matmul (+ bias) replaces T degenerate M=Bp dots.
    gp_ref[...] = (jnp.dot(emb_ref[...], w_e_ref[...],
                           preferred_element_type=f32) + b_ref[...])

    h = h0_ref[...]                # (Bp, Hp) f32
    c = c0_ref[...]
    h_tilde = h0_ref[...]          # input-feeding init: h_tilde := h0

    # Static unroll: T is small here (see TODO for lax.fori_loop at large T).
    for t in range(T):
        # ---- LSTM gates (i, f, g, o): single K=2Hp dot on [h_tilde | h] ----
        x_rec = jnp.concatenate([h_tilde, h], axis=-1).astype(cdt)   # tile concat
        gates = (gp_ref[pl.ds(t * Bp, Bp), :]                        # static slice
                 + jnp.dot(x_rec, w_rec_ref[...], preferred_element_type=f32))
        i_g = jax.nn.sigmoid(gates[:, 0 * Hp:1 * Hp])                # lane-aligned
        f_g = jax.nn.sigmoid(gates[:, 1 * Hp:2 * Hp])
        g_g = jnp.tanh(gates[:, 2 * Hp:3 * Hp])
        o_g = jax.nn.sigmoid(gates[:, 3 * Hp:4 * Hp])
        c = f_g * c + i_g * g_g
        h = o_g * jnp.tanh(c)                                        # (Bp, Hp)

        # ---- Luong "general" attention, q=1: VPU + XLU path (no MXU) ----
        # scores[b,s] = h[b,:] . ctx_proj[b,s,:]   (ctx_proj = ctx @ W_in^T,
        # precomputed once in the wrapper).  Mask stays f32.
        scores = (jnp.sum(h[:, None, :] * ctxp_ref[...], axis=-1, keepdims=True)
                  + mask_ref[...])                                   # (Bp, S, 1)
        scores = scores - jnp.max(scores, axis=1, keepdims=True)
        e = jnp.exp(scores)
        denom = jnp.sum(e, axis=1, keepdims=True)
        if approx_recip:
            attn = e * pl.reciprocal(denom, approx=True)             # EUP slot
        else:
            attn = e / denom                                         # exact parity
        weighted = jnp.sum(attn * ctx_ref[...], axis=1)              # (Bp, Hp) f32

        # ---- h_tilde = tanh([weighted | h] @ [w_oc; w_oh]): one K=2Hp dot ----
        x_out = jnp.concatenate([weighted, h], axis=-1).astype(cdt)
        h_tilde = jnp.tanh(jnp.dot(x_out, w_out_ref[...],
                                   preferred_element_type=f32))
        out_ref[:, t, :] = h_tilde            # resident output block, static index

    hfin_ref[...] = h
    cfin_ref[...] = c


def cc_decoder_forward(trg_emb, hidden, ctx, src_len, params,
                       mxu_dtype=jnp.bfloat16, approx_softmax=True):
    """Pallas implementation of CCDecoder.forward.

    trg_emb: (B, T, E), hidden: (h0, c0) each (B, H) or (1, B, H),
    ctx: (B, S, H), src_len: (B,) int.
    Returns (output (B, T, H) f32, (h_n (1, B, H), c_n (1, B, H))).
    """
    w_ih, w_hh, b, w_in, w_out = params
    h0, c0 = hidden
    if h0.ndim == 3:
        h0, c0 = h0[0], c0[0]
    B, T, E = trg_emb.shape
    S = ctx.shape[1]
    H = h0.shape[-1]
    Bp = _round_up(B, 8)          # sublane multiple
    Hp = _round_up(H, 128)        # lane multiple -> aligned gate slices / stores
    f32 = jnp.float32

    w_ih = w_ih.astype(f32)
    w_hh = w_hh.astype(f32)
    w_in = w_in.astype(f32)
    w_out = w_out.astype(f32)

    def pad_gate_cols(w):         # (X, 4H) -> (X, 4*Hp), zero-pad each gate block
        x = w.reshape(w.shape[0], 4, H)
        return jnp.pad(x, ((0, 0), (0, 0), (0, Hp - H))).reshape(w.shape[0], 4 * Hp)

    def pad_rows(w):              # zero-pad rows H..Hp-1
        return jnp.pad(w, ((0, Hp - w.shape[0]), (0, 0)))

    def pad2(w):                  # (H, H) -> (Hp, Hp)
        return jnp.pad(w, ((0, Hp - H), (0, Hp - H)))

    # Non-recurrent input projection (used once in the kernel prologue).
    w_e = pad_gate_cols(w_ih[:E]).astype(mxu_dtype)                      # (E, 4Hp)
    b_p = pad_gate_cols(b.reshape(1, 4 * H).astype(f32))                 # (1, 4Hp) f32
    # Merged recurrent weights: rows [0,Hp) multiply h_tilde (input feeding,
    # w_ih[E:]), rows [Hp,2Hp) multiply h (w_hh).  Zero pad rows/cols keep the
    # padded lanes mathematically inert.
    w_rec = jnp.concatenate([pad_rows(pad_gate_cols(w_ih[E:])),
                             pad_rows(pad_gate_cols(w_hh))],
                            axis=0).astype(mxu_dtype)                    # (2Hp, 4Hp)
    # Merged output projection: rows [0,Hp) multiply weighted ctx, rows
    # [Hp,2Hp) multiply h.
    w_out_m = jnp.concatenate([pad2(w_out[:H]), pad2(w_out[H:])],
                              axis=0).astype(mxu_dtype)                  # (2Hp, Hp)
    w_in_p = pad2(w_in)                                                  # (Hp, Hp)

    # Activations.  Padded batch rows / hidden lanes are inert (zero weights).
    emb_p = jnp.pad(trg_emb.astype(f32), ((0, Bp - B), (0, 0), (0, 0)))
    # Time-major flatten so the kernel's per-step read of the precomputed gate
    # input is a static, sublane-aligned (Bp, 4Hp) slice (no in-kernel reshape).
    emb_tb = jnp.transpose(emb_p, (1, 0, 2)).reshape(T * Bp, E).astype(mxu_dtype)
    h0_p = jnp.pad(h0.astype(f32), ((0, Bp - B), (0, Hp - H)))
    c0_p = jnp.pad(c0.astype(f32), ((0, Bp - B), (0, Hp - H)))
    ctx_p = jnp.pad(ctx.astype(f32), ((0, Bp - B), (0, 0), (0, Hp - H)))  # f32 (VPU path)
    # Luong "general": scores = h . (ctx @ W_in^T).  Project ctx ONCE here
    # (one well-shaped matmul) so no per-step `h @ w_in` remains in the kernel.
    ctx_proj = jnp.einsum('bsk,jk->bsj', ctx_p.astype(mxu_dtype),
                          w_in_p.astype(mxu_dtype),
                          preferred_element_type=f32)                    # (Bp, S, Hp) f32
    src_len_p = jnp.concatenate(
        [src_len.reshape(-1).astype(jnp.int32),
         jnp.full((Bp - B,), S, jnp.int32)])
    # Additive length mask, kept in f32 (must never be cast to bf16).
    mask3 = jnp.where(jnp.arange(S)[None, :] < src_len_p[:, None],
                      0.0, -1e9).astype(f32)[:, :, None]                 # (Bp, S, 1)

    inputs = (emb_tb, h0_p, c0_p, ctx_p, ctx_proj, mask3,
              w_e, b_p, w_rec, w_out_m)

    flops = int(2 * T * Bp * E * 4 * Hp                 # prologue gate matmul
                + T * (2 * Bp * (2 * Hp) * (4 * Hp)     # recurrent gate dot
                       + 2 * Bp * (2 * Hp) * Hp         # output projection dot
                       + 4 * Bp * S * Hp))              # attention VPU contractions
    transcendentals = int(T * Bp * (6 * Hp + S + 1))
    bytes_accessed = int(sum(x.size * x.dtype.itemsize for x in inputs)
                         + (Bp * T * Hp + 2 * Bp * Hp) * 4)

    vmem = pl.BlockSpec(memory_space=pltpu.MemorySpace.VMEM)
    kern = functools.partial(_cc_decoder_kernel, approx_recip=approx_softmax)
    out_p, hfin_p, cfin_p = pl.pallas_call(
        kern,
        out_shape=(jax.ShapeDtypeStruct((Bp, T, Hp), f32),
                   jax.ShapeDtypeStruct((Bp, Hp), f32),
                   jax.ShapeDtypeStruct((Bp, Hp), f32)),
        in_specs=[vmem] * len(inputs),
        out_specs=(vmem, vmem, vmem),
        scratch_shapes=[pltpu.VMEM((T * Bp, 4 * Hp), f32)],   # gates_pre buffer
        cost_estimate=pl.CostEstimate(flops=flops,
                                      transcendentals=transcendentals,
                                      bytes_accessed=bytes_accessed),
    )(*inputs)

    output = out_p[:B, :, :H]
    return output, (hfin_p[:B, :H][None], cfin_p[:B, :H][None])


def cc_decoder_reference(trg_emb, hidden, ctx, src_len, params):
    """Pure-JAX reference matching the PyTorch forward semantics."""
    w_ih, w_hh, b, w_in, w_out = params
    h, c = hidden
    if h.ndim == 3:
        h, c = h[0], c[0]
    B, T, E = trg_emb.shape
    S = ctx.shape[1]
    H = h.shape[-1]
    mask = jnp.where(jnp.arange(S)[None, :] < src_len.reshape(-1)[:, None],
                     0.0, -1e9).astype(jnp.float32)
    h_tilde = h
    outs = []
    for t in range(T):
        emb_t = trg_emb[:, t, :]
        x = jnp.concatenate([emb_t, h_tilde], axis=1)
        gates = x @ w_ih + h @ w_hh + b
        i_g = jax.nn.sigmoid(gates[:, :H])
        f_g = jax.nn.sigmoid(gates[:, H:2 * H])
        g_g = jnp.tanh(gates[:, 2 * H:3 * H])
        o_g = jax.nn.sigmoid(gates[:, 3 * H:])
        c = f_g * c + i_g * g_g
        h = o_g * jnp.tanh(c)
        target = h @ w_in
        scores = jnp.einsum('bh,bsh->bs', target, ctx) + mask
        attn = jax.nn.softmax(scores, axis=-1)
        weighted = jnp.einsum('bs,bsh->bh', attn, ctx)
        h_tilde = jnp.tanh(jnp.concatenate([weighted, h], axis=1) @ w_out)
        outs.append(h_tilde)
    return jnp.stack(outs, axis=1), (h[None], c[None])


def make_params(key, emb_dim, hidden_size):
    """Deterministic synthetic parameters (shapes match nn.LSTM + attention)."""
    ks = jax.random.split(key, 6)
    lstm_in = emb_dim + hidden_size                     # input_feeding=True
    scale = 0.1
    w_ih = scale * jax.random.normal(ks[0], (lstm_in, 4 * hidden_size), jnp.float32)
    w_hh = scale * jax.random.normal(ks[1], (hidden_size, 4 * hidden_size), jnp.float32)
    b_ih = scale * jax.random.normal(ks[2], (4 * hidden_size,), jnp.float32)
    b_hh = scale * jax.random.normal(ks[3], (4 * hidden_size,), jnp.float32)
    b = (b_ih + b_hh).reshape(1, 4 * hidden_size)
    w_in = scale * jax.random.normal(ks[4], (hidden_size, hidden_size), jnp.float32)
    w_out = scale * jax.random.normal(ks[5], (2 * hidden_size, hidden_size), jnp.float32)
    return (w_ih, w_hh, b, w_in, w_out)


if __name__ == "__main__":
    B, T, S = 2, 6, 8
    emb_dim, hidden_size, num_class = 16, 32, 5

    key = jax.random.PRNGKey(0)
    k_emb, k_ctx, k_h, k_c, k_p = jax.random.split(key, 5)

    trg_emb = jax.random.normal(k_emb, (B, T, emb_dim), jnp.float32)
    ctx = jax.random.normal(k_ctx, (B, S, hidden_size), jnp.float32)
    h0 = jax.random.normal(k_h, (B, hidden_size), jnp.float32)
    c0 = jax.random.normal(k_c, (B, hidden_size), jnp.float32)
    src_len = jnp.array([5, 8], dtype=jnp.int32)
    params = make_params(k_p, emb_dim, hidden_size)

    ref_out, (ref_h, ref_c) = cc_decoder_reference(
        trg_emb, (h0, c0), ctx, src_len, params)

    # f32 MXU operands + exact softmax division: stricter semantic check.
    fwd_f32 = jax.jit(functools.partial(cc_decoder_forward,
                                        mxu_dtype=jnp.float32,
                                        approx_softmax=False))
    out32, (h32, c32) = fwd_f32(trg_emb, (h0, c0), ctx, src_len, params)
    jax.block_until_ready((out32, h32, c32))
    assert out32.shape == (B, T, hidden_size)
    assert h32.shape == (1, B, hidden_size) and c32.shape == (1, B, hidden_size)
    assert jnp.allclose(out32, ref_out, atol=2e-2, rtol=2e-2)
    assert jnp.allclose(h32, ref_h, atol=2e-2, rtol=2e-2)
    assert jnp.allclose(c32, ref_c, atol=2e-2, rtol=2e-2)

    # bf16 MXU operands (default v6e/v7x fast path), f32 accumulation,
    # approximate softmax reciprocal (EUP).
    fwd_bf16 = jax.jit(cc_decoder_forward)
    out_bf, (h_bf, c_bf) = fwd_bf16(trg_emb, (h0, c0), ctx, src_len, params)
    jax.block_until_ready((out_bf, h_bf, c_bf))
    assert out_bf.shape == (B, T, hidden_size)
    assert jnp.allclose(out_bf, ref_out, atol=5e-2, rtol=5e-2)
    assert jnp.allclose(h_bf, ref_h, atol=5e-2, rtol=5e-2)
    assert jnp.allclose(c_bf, ref_c, atol=5e-2, rtol=5e-2)

    print("KERNEL_OK")
</pallas_src>

<mosaic_0001>
module attributes {stable_mosaic.version = 11 : i64} {
  func.func @_cc_decoder_kernel(%arg0: memref<48x16xf32, #tpu.memory_space<vmem>>, %arg1: memref<8x128xf32, #tpu.memory_space<vmem>>, %arg2: memref<8x128xf32, #tpu.memory_space<vmem>>, %arg3: memref<8x8x128xf32, #tpu.memory_space<vmem>>, %arg4: memref<8x8x128xf32, #tpu.memory_space<vmem>>, %arg5: memref<8x8x1xf32, #tpu.memory_space<vmem>>, %arg6: memref<16x512xf32, #tpu.memory_space<vmem>>, %arg7: memref<1x512xf32, #tpu.memory_space<vmem>>, %arg8: memref<256x512xf32, #tpu.memory_space<vmem>>, %arg9: memref<256x128xf32, #tpu.memory_space<vmem>>, %arg10: memref<8x6x128xf32, #tpu.memory_space<vmem>>, %arg11: memref<8x128xf32, #tpu.memory_space<vmem>>, %arg12: memref<8x128xf32, #tpu.memory_space<vmem>>, %arg13: memref<48x512xf32, #tpu.memory_space<vmem>>) attributes {dimension_semantics = [], scalar_prefetch = 0 : i64, scratch_operands = 1 : i64, tpu.core_type = #tpu.core_type<tc>} {
    %c0 = arith.constant 0 : index
    %c0_0 = arith.constant 0 : index
    %0 = vector.load %arg0[%c0, %c0_0] : memref<48x16xf32, #tpu.memory_space<vmem>>, vector<48x16xf32>
    %c0_1 = arith.constant 0 : index
    %c0_2 = arith.constant 0 : index
    %1 = vector.load %arg6[%c0_1, %c0_2] : memref<16x512xf32, #tpu.memory_space<vmem>>, vector<16x512xf32>
    %cst = arith.constant dense<0.000000e+00> : vector<48x512xf32>
    %2 = tpu.matmul %0, %1, %cst {dimension_numbers = #tpu.dot_dimension_numbers<[1], [0], [0], [1], [0, 0, 1, 1], [], []>} : vector<48x16xf32>, vector<16x512xf32>, vector<48x512xf32> -> vector<48x512xf32>
    %c0_3 = arith.constant 0 : index
    %c0_4 = arith.constant 0 : index
    %3 = vector.load %arg7[%c0_3, %c0_4] : memref<1x512xf32, #tpu.memory_space<vmem>>, vector<1x512xf32>
    %4 = vector.broadcast %3 : vector<1x512xf32> to vector<48x512xf32>
    %5 = arith.addf %2, %4 : vector<48x512xf32>
    %c0_5 = arith.constant 0 : index
    %c0_6 = arith.constant 0 : index
    %6 = vector.load %arg13[%c0_5, %c0_6] : memref<48x512xf32, #tpu.memory_space<vmem>>, vector<48x512xf32>
    tpu.vector_store %arg13[%c0_5, %c0_6], %5 {strides = array<i32>} : memref<48x512xf32, #tpu.memory_space<vmem>>, vector<48x512xf32>,
    %c0_7 = arith.constant 0 : index
    %c0_8 = arith.constant 0 : index
    %7 = vector.load %arg1[%c0_7, %c0_8] : memref<8x128xf32, #tpu.memory_space<vmem>>, vector<8x128xf32>
    %c0_9 = arith.constant 0 : index
    %c0_10 = arith.constant 0 : index
    %8 = vector.load %arg2[%c0_9, %c0_10] : memref<8x128xf32, #tpu.memory_space<vmem>>, vector<8x128xf32>
    %c0_11 = arith.constant 0 : index
    %c0_12 = arith.constant 0 : index
    %9 = vector.load %arg1[%c0_11, %c0_12] : memref<8x128xf32, #tpu.memory_space<vmem>>, vector<8x128xf32>
    %10 = tpu.concatenate %9, %7 in 1 : vector<8x128xf32>, vector<8x128xf32> -> vector<8x256xf32>
    %c0_13 = arith.constant 0 : index
    %c0_14 = arith.constant 0 : index
    %11 = vector.load %arg13[%c0_13, %c0_14] : memref<48x512xf32, #tpu.memory_space<vmem>>, vector<8x512xf32>
    %c0_15 = arith.constant 0 : index
    %c0_16 = arith.constant 0 : index
    %12 = vector.load %arg8[%c0_15, %c0_16] : memref<256x512xf32, #tpu.memory_space<vmem>>, vector<256x512xf32>
    %cst_17 = arith.constant dense<0.000000e+00> : vector<8x512xf32>
    %13 = tpu.matmul %10, %12, %cst_17 {dimension_numbers = #tpu.dot_dimension_numbers<[1], [0], [0], [1], [0, 0, 1, 1], [], []>} : vector<8x256xf32>, vector<256x512xf32>, vector<8x512xf32> -> vector<8x512xf32>
    %14 = arith.addf %11, %13 : vector<8x512xf32>
    %15 = vector.extract_strided_slice %14 {offsets = [0, 0], sizes = [8, 128], strides = [1, 1]} : vector<8x512xf32> to vector<8x128xf32>
    %16 = arith.negf %15 : vector<8x128xf32>
    %17 = math.exp %16 : vector<8x128xf32>
    %cst_18 = arith.constant 1.000000e+00 : f32
    %18 = vector.broadcast %cst_18 : f32 to vector<8x128xf32>
    %19 = arith.addf %18, %17 : vector<8x128xf32>
    %20 = arith.divf %18, %19 : vector<8x128xf32>
    %21 = vector.extract_strided_slice %14 {offsets = [0, 128], sizes = [8, 128], strides = [1, 1]} : vector<8x512xf32> to vector<8x128xf32>
    %22 = arith.negf %21 : vector<8x128xf32>
    %23 = math.exp %22 : vector<8x128xf32>
    %cst_19 = arith.constant 1.000000e+00 : f32
    %24 = vector.broadcast %cst_19 : f32 to vector<8x128xf32>
    %25 = arith.addf %24, %23 : vector<8x128xf32>
    %26 = arith.divf %24, %25 : vector<8x128xf32>
    %27 = vector.extract_strided_slice %14 {offsets = [0, 256], sizes = [8, 128], strides = [1, 1]} : vector<8x512xf32> to vector<8x128xf32>
    %28 = math.tanh %27 : vector<8x128xf32>
    %29 = vector.extract_strided_slice %14 {offsets = [0, 384], sizes = [8, 128], strides = [1, 1]} : vector<8x512xf32> to vector<8x128xf32>
    %30 = arith.negf %29 : vector<8x128xf32>
    %31 = math.exp %30 : vector<8x128xf32>
    %cst_20 = arith.constant 1.000000e+00 : f32
    %32 = vector.broadcast %cst_20 : f32 to vector<8x128xf32>
    %33 = arith.addf %32, %31 : vector<8x128xf32>
    %34 = arith.divf %32, %33 : vector<8x128xf32>
    %35 = arith.mulf %26, %8 : vector<8x128xf32>
    %36 = arith.mulf %20, %28 : vector<8x128xf32>
    %37 = arith.addf %35, %36 : vector<8x128xf32>
    %38 = math.tanh %37 : vector<8x128xf32>
    %39 = arith.mulf %34, %38 : vector<8x128xf32>
    %40 = vector.shape_cast %39 : vector<8x128xf32> to vector<8x1x128xf32>
    %c0_21 = arith.constant 0 : index
    %c0_22 = arith.constant 0 : index
    %c0_23 = arith.constant 0 : index
    %41 = vector.load %arg4[%c0_21, %c0_22, %c0_23] : memref<8x8x128xf32, #tpu.memory_space<vmem>>, vector<8x8x128xf32>
    %42 = vector.broadcast %40 : vector<8x1x128xf32> to vector<8x8x128xf32>
    %43 = arith.mulf %42, %41 : vector<8x8x128xf32>
    %cst_24 = arith.constant dense<0.000000e+00> : vector<8x8xf32>
    %44 = vector.multi_reduction <add>, %43, %cst_24 [2] : vector<8x8x128xf32> to vector<8x8xf32>
    %45 = vector.shape_cast %44 : vector<8x8xf32> to vector<8x8x1xf32>
    %c0_25 = arith.constant 0 : index
    %c0_26 = arith.constant 0 : index
    %c0_27 = arith.constant 0 : index
    %46 = vector.load %arg5[%c0_25, %c0_26, %c0_27] : memref<8x8x1xf32, #tpu.memory_space<vmem>>, vector<8x8x1xf32>
    %47 = arith.addf %45, %46 : vector<8x8x1xf32>
    %cst_28 = arith.constant dense<0xFF800000> : vector<8x1xf32>
    %48 = vector.multi_reduction <maximumf>, %47, %cst_28 [1] : vector<8x8x1xf32> to vector<8x1xf32>
    %49 = vector.shape_cast %48 : vector<8x1xf32> to vector<8x1x1xf32>
    %50 = vector.broadcast %49 : vector<8x1x1xf32> to vector<8x8x1xf32>
    %51 = arith.subf %47, %50 : vector<8x8x1xf32>
    %52 = math.exp %51 : vector<8x8x1xf32>
    %cst_29 = arith.constant dense<0.000000e+00> : vector<8x1xf32>
    %53 = vector.multi_reduction <add>, %52, %cst_29 [1] : vector<8x8x1xf32> to vector<8x1xf32>
    %54 = vector.shape_cast %53 : vector<8x1xf32> to vector<8x1x1xf32>
    %55 = vector.broadcast %54 : vector<8x1x1xf32> to vector<8x8x1xf32>
    %56 = arith.divf %52, %55 : vector<8x8x1xf32>
    %c0_30 = arith.constant 0 : index
    %c0_31 = arith.constant 0 : index
    %c0_32 = arith.constant 0 : index
    %57 = vector.load %arg3[%c0_30, %c0_31, %c0_32] : memref<8x8x128xf32, #tpu.memory_space<vmem>>, vector<8x8x128xf32>
    %58 = vector.broadcast %56 : vector<8x8x1xf32> to vector<8x8x128xf32>
    %59 = arith.mulf %58, %57 : vector<8x8x128xf32>
    %cst_33 = arith.constant dense<0.000000e+00> : vector<8x128xf32>
    %60 = vector.multi_reduction <add>, %59, %cst_33 [1] : vector<8x8x128xf32> to vector<8x128xf32>
    %61 = tpu.concatenate %60, %39 in 1 : vector<8x128xf32>, vector<8x128xf32> -> vector<8x256xf32>
    %c0_34 = arith.constant 0 : index
    %c0_35 = arith.constant 0 : index
    %62 = vector.load %arg9[%c0_34, %c0_35] : memref<256x128xf32, #tpu.memory_space<vmem>>, vector<256x128xf32>
    %cst_36 = arith.constant dense<0.000000e+00> : vector<8x128xf32>
    %63 = tpu.matmul %61, %62, %cst_36 {dimension_numbers = #tpu.dot_dimension_numbers<[1], [0], [0], [1], [0, 0, 1, 1], [], []>} : vector<8x256xf32>, vector<256x128xf32>, vector<8x128xf32> -> vector<8x128xf32>
    %64 = math.tanh %63 : vector<8x128xf32>
    %c0_37 = arith.constant 0 : index
    %c0_38 = arith.constant 0 : index
    %c0_39 = arith.constant 0 : index
    %65 = vector.load %arg10[%c0_37, %c0_38, %c0_39] : memref<8x6x128xf32, #tpu.memory_space<vmem>>, vector<8x1x128xf32>
    %66 = vector.shape_cast %65 : vector<8x1x128xf32> to vector<8x128xf32>
    %67 = vector.shape_cast %64 : vector<8x128xf32> to vector<8x1x128xf32>
    tpu.vector_store %arg10[%c0_37, %c0_38, %c0_39], %67 {strides = array<i32>} : memref<8x6x128xf32, #tpu.memory_space<vmem>>, vector<8x1x128xf32>,
    %68 = tpu.concatenate %64, %39 in 1 : vector<8x128xf32>, vector<8x128xf32> -> vector<8x256xf32>
    %c8 = arith.constant 8 : index
    %c0_40 = arith.constant 0 : index
    %69 = vector.load %arg13[%c8, %c0_40] : memref<48x512xf32, #tpu.memory_space<vmem>>, vector<8x512xf32>
    %c0_41 = arith.constant 0 : index
    %c0_42 = arith.constant 0 : index
    %70 = vector.load %arg8[%c0_41, %c0_42] : memref<256x512xf32, #tpu.memory_space<vmem>>, vector<256x512xf32>
    %cst_43 = arith.constant dense<0.000000e+00> : vector<8x512xf32>
    %71 = tpu.matmul %68, %70, %cst_43 {dimension_numbers = #tpu.dot_dimension_numbers<[1], [0], [0], [1], [0, 0, 1, 1], [], []>} : vector<8x256xf32>, vector<256x512xf32>, vector<8x512xf32> -> vector<8x512xf32>
    %72 = arith.addf %69, %71 : vector<8x512xf32>
    %73 = vector.extract_strided_slice %72 {offsets = [0, 0], sizes = [8, 128], strides = [1, 1]} : vector<8x512xf32> to vector<8x128xf32>
    %74 = arith.negf %73 : vector<8x128xf32>
    %75 = math.exp %74 : vector<8x128xf32>
    %cst_44 = arith.constant 1.000000e+00 : f32
    %76 = vector.broadcast %cst_44 : f32 to vector<8x128xf32>
    %77 = arith.addf %76, %75 : vector<8x128xf32>
    %78 = arith.divf %76, %77 : vector<8x128xf32>
    %79 = vector.extract_strided_slice %72 {offsets = [0, 128], sizes = [8, 128], strides = [1, 1]} : vector<8x512xf32> to vector<8x128xf32>
    %80 = arith.negf %79 : vector<8x128xf32>
    %81 = math.exp %80 : vector<8x128xf32>
    %cst_45 = arith.constant 1.000000e+00 : f32
    %82 = vector.broadcast %cst_45 : f32 to vector<8x128xf32>
    %83 = arith.addf %82, %81 : vector<8x128xf32>
    %84 = arith.divf %82, %83 : vector<8x128xf32>
    %85 = vector.extract_strided_slice %72 {offsets = [0, 256], sizes = [8, 128], strides = [1, 1]} : vector<8x512xf32> to vector<8x128xf32>
    %86 = math.tanh %85 : vector<8x128xf32>
    %87 = vector.extract_strided_slice %72 {offsets = [0, 384], sizes = [8, 128], strides = [1, 1]} : vector<8x512xf32> to vector<8x128xf32>
    %88 = arith.negf %87 : vector<8x128xf32>
    %89 = math.exp %88 : vector<8x128xf32>
    %cst_46 = arith.constant 1.000000e+00 : f32
    %90 = vector.broadcast %cst_46 : f32 to vector<8x128xf32>
    %91 = arith.addf %90, %89 : vector<8x128xf32>
    %92 = arith.divf %90, %91 : vector<8x128xf32>
    %93 = arith.mulf %84, %37 : vector<8x128xf32>
    %94 = arith.mulf %78, %86 : vector<8x128xf32>
    %95 = arith.addf %93, %94 : vector<8x128xf32>
    %96 = math.tanh %95 : vector<8x128xf32>
    %97 = arith.mulf %92, %96 : vector<8x128xf32>
    %98 = vector.shape_cast %97 : vector<8x128xf32> to vector<8x1x128xf32>
    %c0_47 = arith.constant 0 : index
    %c0_48 = arith.constant 0 : index
    %c0_49 = arith.constant 0 : index
    %99 = vector.load %arg4[%c0_47, %c0_48, %c0_49] : memref<8x8x128xf32, #tpu.memory_space<vmem>>, vector<8x8x128xf32>
    %100 = vector.broadcast %98 : vector<8x1x128xf32> to vector<8x8x128xf32>
    %101 = arith.mulf %100, %99 : vector<8x8x128xf32>
    %cst_50 = arith.constant dense<0.000000e+00> : vector<8x8xf32>
    %102 = vector.multi_reduction <add>, %101, %cst_50 [2] : vector<8x8x128xf32> to vector<8x8xf32>
    %103 = vector.shape_cast %102 : vector<8x8xf32> to vector<8x8x1xf32>
    %c0_51 = arith.constant 0 : index
    %c0_52 = arith.constant 0 : index
    %c0_53 = arith.constant 0 : index
    %104 = vector.load %arg5[%c0_51, %c0_52, %c0_53] : memref<8x8x1xf32, #tpu.memory_space<vmem>>, vector<8x8x1xf32>
    %105 = arith.addf %103, %104 : vector<8x8x1xf32>
    %cst_54 = arith.constant dense<0xFF800000> : vector<8x1xf32>
    %106 = vector.multi_reduction <maximumf>, %105, %cst_54 [1] : vector<8x8x1xf32> to vector<8x1xf32>
    %107 = vector.shape_cast %106 : vector<8x1xf32> to vector<8x1x1xf32>
    %108 = vector.broadcast %107 : vector<8x1x1xf32> to vector<8x8x1xf32>
    %109 = arith.subf %105, %108 : vector<8x8x1xf32>
    %110 = math.exp %109 : vector<8x8x1xf32>
    %cst_55 = arith.constant dense<0.000000e+00> : vector<8x1xf32>
    %111 = vector.multi_reduction <add>, %110, %cst_55 [1] : vector<8x8x1xf32> to vector<8x1xf32>
    %112 = vector.shape_cast %111 : vector<8x1xf32> to vector<8x1x1xf32>
    %113 = vector.broadcast %112 : vector<8x1x1xf32> to vector<8x8x1xf32>
    %114 = arith.divf %110, %113 : vector<8x8x1xf32>
    %c0_56 = arith.constant 0 : index
    %c0_57 = arith.constant 0 : index
    %c0_58 = arith.constant 0 : index
    %115 = vector.load %arg3[%c0_56, %c0_57, %c0_58] : memref<8x8x128xf32, #tpu.memory_space<vmem>>, vector<8x8x128xf32>
    %116 = vector.broadcast %114 : vector<8x8x1xf32> to vector<8x8x128xf32>
    %117 = arith.mulf %116, %115 : vector<8x8x128xf32>
    %cst_59 = arith.constant dense<0.000000e+00> : vector<8x128xf32>
    %118 = vector.multi_reduction <add>, %117, %cst_59 [1] : vector<8x8x128xf32> to vector<8x128xf32>
    %119 = tpu.concatenate %118, %97 in 1 : vector<8x128xf32>, vector<8x128xf32> -> vector<8x256xf32>
    %c0_60 = arith.constant 0 : index
    %c0_61 = arith.constant 0 : index
    %120 = vector.load %arg9[%c0_60, %c0_61] : memref<256x128xf32, #tpu.memory_space<vmem>>, vector<256x128xf32>
    %cst_62 = arith.constant dense<0.000000e+00> : vector<8x128xf32>
    %121 = tpu.matmul %119, %120, %cst_62 {dimension_numbers = #tpu.dot_dimension_numbers<[1], [0], [0], [1], [0, 0, 1, 1], [], []>} : vector<8x256xf32>, vector<256x128xf32>, vector<8x128xf32> -> vector<8x128xf32>
    %122 = math.tanh %121 : vector<8x128xf32>
    %c0_63 = arith.constant 0 : index
    %c1 = arith.constant 1 : index
    %c0_64 = arith.constant 0 : index
    %123 = vector.load %arg10[%c0_63, %c1, %c0_64] : memref<8x6x128xf32, #tpu.memory_space<vmem>>, vector<8x1x128xf32>
    %124 = vector.shape_cast %123 : vector<8x1x128xf32> to vector<8x128xf32>
    %125 = vector.shape_cast %122 : vector<8x128xf32> to vector<8x1x128xf32>
    tpu.vector_store %arg10[%c0_63, %c1, %c0_64], %125 {strides = array<i32>} : memref<8x6x128xf32, #tpu.memory_space<vmem>>, vector<8x1x128xf32>,
    %126 = tpu.concatenate %122, %97 in 1 : vector<8x128xf32>, vector<8x128xf32> -> vector<8x256xf32>
    %c16 = arith.constant 16 : index
    %c0_65 = arith.constant 0 : index
    %127 = vector.load %arg13[%c16, %c0_65] : memref<48x512xf32, #tpu.memory_space<vmem>>, vector<8x512xf32>
    %c0_66 = arith.constant 0 : index
    %c0_67 = arith.constant 0 : index
    %128 = vector.load %arg8[%c0_66, %c0_67] : memref<256x512xf32, #tpu.memory_space<vmem>>, vector<256x512xf32>
    %cst_68 = arith.constant dense<0.000000e+00> : vector<8x512xf32>
    %129 = tpu.matmul %126, %128, %cst_68 {dimension_numbers = #tpu.dot_dimension_numbers<[1], [0], [0], [1], [0, 0, 1, 1], [], []>} : vector<8x256xf32>, vector<256x512xf32>, vector<8x512xf32> -> vector<8x512xf32>
    %130 = arith.addf %127, %129 : vector<8x512xf32>
    %131 = vector.extract_strided_slice %130 {offsets = [0, 0], sizes = [8, 128], strides = [1, 1]} : vector<8x512xf32> to vector<8x128xf32>
    %132 = arith.negf %131 : vector<8x128xf32>
    %133 = math.exp %132 : vector<8x128xf32>
    %cst_69 = arith.constant 1.000000e+00 : f32
    %134 = vector.broadcast %cst_69 : f32 to vector<8x128xf32>
    %135 = arith.addf %134, %133 : vector<8x128xf32>
    %136 = arith.divf %134, %135 : vector<8x128xf32>
    %137 = vector.extract_strided_slice %130 {offsets = [0, 128], sizes = [8, 128], strides = [1, 1]} : vector<8x512xf32> to vector<8x128xf32>
    %138 = arith.negf %137 : vector<8x128xf32>
    %139 = math.exp %138 : vector<8x128xf32>
    %cst_70 = arith.constant 1.000000e+00 : f32
    %140 = vector.broadcast %cst_70 : f32 to vector<8x128xf32>
    %141 = arith.addf %140, %139 : vector<8x128xf32>
    %142 = arith.divf %140, %141 : vector<8x128xf32>
    %143 = vector.extract_strided_slice %130 {offsets = [0, 256], sizes = [8, 128], strides = [1, 1]} : vector<8x512xf32> to vector<8x128xf32>
    %144 = math.tanh %143 : vector<8x128xf32>
    %145 = vector.extract_strided_slice %130 {offsets = [0, 384], sizes = [8, 128], strides = [1, 1]} : vector<8x512xf32> to vector<8x128xf32>
    %146 = arith.negf %145 : vector<8x128xf32>
    %147 = math.exp %146 : vector<8x128xf32>
    %cst_71 = arith.constant 1.000000e+00 : f32
    %148 = vector.broadcast %cst_71 : f32 to vector<8x128xf32>
    %149 = arith.addf %148, %147 : vector<8x128xf32>
    %150 = arith.divf %148, %149 : vector<8x128xf32>
    %151 = arith.mulf %142, %95 : vector<8x128xf32>
    %152 = arith.mulf %136, %144 : vector<8x128xf32>
    %153 = arith.addf %151, %152 : vector<8x128xf32>
    %154 = math.tanh %153 : vector<8x128xf32>
    %155 = arith.mulf %150, %154 : vector<8x128xf32>
    %156 = vector.shape_cast %155 : vector<8x128xf32> to vector<8x1x128xf32>
    %c0_72 = arith.constant 0 : index
    %c0_73 = arith.constant 0 : index
    %c0_74 = arith.constant 0 : index
    %157 = vector.load %arg4[%c0_72, %c0_73, %c0_74] : memref<8x8x128xf32, #tpu.memory_space<vmem>>, vector<8x8x128xf32>
    %158 = vector.broadcast %156 : vector<8x1x128xf32> to vector<8x8x128xf32>
    %159 = arith.mulf %158, %157 : vector<8x8x128xf32>
    %cst_75 = arith.constant dense<0.000000e+00> : vector<8x8xf32>
    %160 = vector.multi_reduction <add>, %159, %cst_75 [2] : vector<8x8x128xf32> to vector<8x8xf32>
    %161 = vector.shape_cast %160 : vector<8x8xf32> to vector<8x8x1xf32>
    %c0_76 = arith.constant 0 : index
    %c0_77 = arith.constant 0 : index
    %c0_78 = arith.constant 0 : index
    %162 = vector.load %arg5[%c0_76, %c0_77, %c0_78] : memref<8x8x1xf32, #tpu.memory_space<vmem>>, vector<8x8x1xf32>
    %163 = arith.addf %161, %162 : vector<8x8x1xf32>
    %cst_79 = arith.constant dense<0xFF800000> : vector<8x1xf32>
    %164 = vector.multi_reduction <maximumf>, %163, %cst_79 [1] : vector<8x8x1xf32> to vector<8x1xf32>
    %165 = vector.shape_cast %164 : vector<8x1xf32> to vector<8x1x1xf32>
    %166 = vector.broadcast %165 : vector<8x1x1xf32> to vector<8x8x1xf32>
    %167 = arith.subf %163, %166 : vector<8x8x1xf32>
    %168 = math.exp %167 : vector<8x8x1xf32>
    %cst_80 = arith.constant dense<0.000000e+00> : vector<8x1xf32>
    %169 = vector.multi_reduction <add>, %168, %cst_80 [1] : vector<8x8x1xf32> to vector<8x1xf32>
    %170 = vector.shape_cast %169 : vector<8x1xf32> to vector<8x1x1xf32>
    %171 = vector.broadcast %170 : vector<8x1x1xf32> to vector<8x8x1xf32>
    %172 = arith.divf %168, %171 : vector<8x8x1xf32>
    %c0_81 = arith.constant 0 : index
    %c0_82 = arith.constant 0 : index
    %c0_83 = arith.constant 0 : index
    %173 = vector.load %arg3[%c0_81, %c0_82, %c0_83] : memref<8x8x128xf32, #tpu.memory_space<vmem>>, vector<8x8x128xf32>
    %174 = vector.broadcast %172 : vector<8x8x1xf32> to vector<8x8x128xf32>
    %175 = arith.mulf %174, %173 : vector<8x8x128xf32>
    %cst_84 = arith.constant dense<0.000000e+00> : vector<8x128xf32>
    %176 = vector.multi_reduction <add>, %175, %cst_84 [1] : vector<8x8x128xf32> to vector<8x128xf32>
    %177 = tpu.concatenate %176, %155 in 1 : vector<8x128xf32>, vector<8x128xf32> -> vector<8x256xf32>
    %c0_85 = arith.constant 0 : index
    %c0_86 = arith.constant 0 : index
    %178 = vector.load %arg9[%c0_85, %c0_86] : memref<256x128xf32, #tpu.memory_space<vmem>>, vector<256x128xf32>
    %cst_87 = arith.constant dense<0.000000e+00> : vector<8x128xf32>
    %179 = tpu.matmul %177, %178, %cst_87 {dimension_numbers = #tpu.dot_dimension_numbers<[1], [0], [0], [1], [0, 0, 1, 1], [], []>} : vector<8x256xf32>, vector<256x128xf32>, vector<8x128xf32> -> vector<8x128xf32>
    %180 = math.tanh %179 : vector<8x128xf32>
    %c0_88 = arith.constant 0 : index
    %c2 = arith.constant 2 : index
    %c0_89 = arith.constant 0 : index
    %181 = vector.load %arg10[%c0_88, %c2, %c0_89] : memref<8x6x128xf32, #tpu.memory_space<vmem>>, vector<8x1x128xf32>
    %182 = vector.shape_cast %181 : vector<8x1x128xf32> to vector<8x128xf32>
    %183 = vector.shape_cast %180 : vector<8x128xf32> to vector<8x1x128xf32>
    tpu.vector_store %arg10[%c0_88, %c2, %c0_89], %183 {strides = array<i32>} : memref<8x6x128xf32, #tpu.memory_space<vmem>>, vector<8x1x128xf32>,
    %184 = tpu.concatenate %180, %155 in 1 : vector<8x128xf32>, vector<8x128xf32> -> vector<8x256xf32>
    %c24 = arith.constant 24 : index
    %c0_90 = arith.constant 0 : index
    %185 = vector.load %arg13[%c24, %c0_90] : memref<48x512xf32, #tpu.memory_space<vmem>>, vector<8x512xf32>
    %c0_91 = arith.constant 0 : index
    %c0_92 = arith.constant 0 : index
    %186 = vector.load %arg8[%c0_91, %c0_92] : memref<256x512xf32, #tpu.memory_space<vmem>>, vector<256x512xf32>
    %cst_93 = arith.constant dense<0.000000e+00> : vector<8x512xf32>
    %187 = tpu.matmul %184, %186, %cst_93 {dimension_numbers = #tpu.dot_dimension_numbers<[1], [0], [0], [1], [0, 0, 1, 1], [], []>} : vector<8x256xf32>, vector<256x512xf32>, vector<8x512xf32> -> vector<8x512xf32>
    %188 = arith.addf %185, %187 : vector<8x512xf32>
    %189 = vector.extract_strided_slice %188 {offsets = [0, 0], sizes = [8, 128], strides = [1, 1]} : vector<8x512xf32> to vector<8x128xf32>
    %190 = arith.negf %189 : vector<8x128xf32>
    %191 = math.exp %190 : vector<8x128xf32>
    %cst_94 = arith.constant 1.000000e+00 : f32
    %192 = vector.broadcast %cst_94 : f32 to vector<8x128xf32>
    %193 = arith.addf %192, %191 : vector<8x128xf32>
    %194 = arith.divf %192, %193 : vector<8x128xf32>
    %195 = vector.extract_strided_slice %188 {offsets = [0, 128], sizes = [8, 128], strides = [1, 1]} : vector<8x512xf32> to vector<8x128xf32>
    %196 = arith.negf %195 : vector<8x128xf32>
    %197 = math.exp %196 : vector<8x128xf32>
    %cst_95 = arith.constant 1.000000e+00 : f32
    %198 = vector.broadcast %cst_95 : f32 to vector<8x128xf32>
    %199 = arith.addf %198, %197 : vector<8x128xf32>
    %200 = arith.divf %198, %199 : vector<8x128xf32>
    %201 = vector.extract_strided_slice %188 {offsets = [0, 256], sizes = [8, 128], strides = [1, 1]} : vector<8x512xf32> to vector<8x128xf32>
    %202 = math.tanh %201 : vector<8x128xf32>
    %203 = vector.extract_strided_slice %188 {offsets = [0, 384], sizes = [8, 128], strides = [1, 1]} : vector<8x512xf32> to vector<8x128xf32>
    %204 = arith.negf %203 : vector<8x128xf32>
    %205 = math.exp %204 : vector<8x128xf32>
    %cst_96 = arith.constant 1.000000e+00 : f32
    %206 = vector.broadcast %cst_96 : f32 to vector<8x128xf32>
    %207 = arith.addf %206, %205 : vector<8x128xf32>
    %208 = arith.divf %206, %207 : vector<8x128xf32>
    %209 = arith.mulf %200, %153 : vector<8x128xf32>
    %210 = arith.mulf %194, %202 : vector<8x128xf32>
    %211 = arith.addf %209, %210 : vector<8x128xf32>
    %212 = math.tanh %211 : vector<8x128xf32>
    %213 = arith.mulf %208, %212 : vector<8x128xf32>
    %214 = vector.shape_cast %213 : vector<8x128xf32> to vector<8x1x128xf32>
    %c0_97 = arith.constant 0 : index
    %c0_98 = arith.constant 0 : index
    %c0_99 = arith.constant 0 : index
    %215 = vector.load %arg4[%c0_97, %c0_98, %c0_99] : memref<8x8x128xf32, #tpu.memory_space<vmem>>, vector<8x8x128xf32>
    %216 = vector.broadcast %214 : vector<8x1x128xf32> to vector<8x8x128xf32>
    %217 = arith.mulf %216, %215 : vector<8x8x128xf32>
    %cst_100 = arith.constant dense<0.000000e+00> : vector<8x8xf32>
    %218 = vector.multi_reduction <add>, %217, %cst_100 [2] : vector<8x8x128xf32> to vector<8x8xf32>
    %219 = vector.shape_cast %218 : vector<8x8xf32> to vector<8x8x1xf32>
    %c0_101 = arith.constant 0 : index
    %c0_102 = arith.constant 0 : index
    %c0_103 = arith.constant 0 : index
    %220 = vector.load %arg5[%c0_101, %c0_102, %c0_103] : memref<8x8x1xf32, #tpu.memory_space<vmem>>, vector<8x8x1xf32>
    %221 = arith.addf %219, %220 : vector<8x8x1xf32>
    %cst_104 = arith.constant dense<0xFF800000> : vector<8x1xf32>
    %222 = vector.multi_reduction <maximumf>, %221, %cst_104 [1] : vector<8x8x1xf32> to vector<8x1xf32>
    %223 = vector.shape_cast %222 : vector<8x1xf32> to vector<8x1x1xf32>
    %224 = vector.broadcast %223 : vector<8x1x1xf32> to vector<8x8x1xf32>
    %225 = arith.subf %221, %224 : vector<8x8x1xf32>
    %226 = math.exp %225 : vector<8x8x1xf32>
    %cst_105 = arith.constant dense<0.000000e+00> : vector<8x1xf32>
    %227 = vector.multi_reduction <add>, %226, %cst_105 [1] : vector<8x8x1xf32> to vector<8x1xf32>
    %228 = vector.shape_cast %227 : vector<8x1xf32> to vector<8x1x1xf32>
    %229 = vector.broadcast %228 : vector<8x1x1xf32> to vector<8x8x1xf32>
    %230 = arith.divf %226, %229 : vector<8x8x1xf32>
    %c0_106 = arith.constant 0 : index
    %c0_107 = arith.constant 0 : index
    %c0_108 = arith.constant 0 : index
    %231 = vector.load %arg3[%c0_106, %c0_107, %c0_108] : memref<8x8x128xf32, #tpu.memory_space<vmem>>, vector<8x8x128xf32>
    %232 = vector.broadcast %230 : vector<8x8x1xf32> to vector<8x8x128xf32>
    %233 = arith.mulf %232, %231 : vector<8x8x128xf32>
    %cst_109 = arith.constant dense<0.000000e+00> : vector<8x128xf32>
    %234 = vector.multi_reduction <add>, %233, %cst_109 [1] : vector<8x8x128xf32> to vector<8x128xf32>
    %235 = tpu.concatenate %234, %213 in 1 : vector<8x128xf32>, vector<8x128xf32> -> vector<8x256xf32>
    %c0_110 = arith.constant 0 : index
    %c0_111 = arith.constant 0 : index
    %236 = vector.load %arg9[%c0_110, %c0_111] : memref<256x128xf32, #tpu.memory_space<vmem>>, vector<256x128xf32>
    %cst_112 = arith.constant dense<0.000000e+00> : vector<8x128xf32>
    %237 = tpu.matmul %235, %236, %cst_112 {dimension_numbers = #tpu.dot_dimension_numbers<[1], [0], [0], [1], [0, 0, 1, 1], [], []>} : vector<8x256xf32>, vector<256x128xf32>, vector<8x128xf32> -> vector<8x128xf32>
    %238 = math.tanh %237 : vector<8x128xf32>
    %c0_113 = arith.constant 0 : index
    %c3 = arith.constant 3 : index
    %c0_114 = arith.constant 0 : index
    %239 = vector.load %arg10[%c0_113, %c3, %c0_114] : memref<8x6x128xf32, #tpu.memory_space<vmem>>, vector<8x1x128xf32>
    %240 = vector.shape_cast %239 : vector<8x1x128xf32> to vector<8x128xf32>
    %241 = vector.shape_cast %238 : vector<8x128xf32> to vector<8x1x128xf32>
    tpu.vector_store %arg10[%c0_113, %c3, %c0_114], %241 {strides = array<i32>} : memref<8x6x128xf32, #tpu.memory_space<vmem>>, vector<8x1x128xf32>,
    %242 = tpu.concatenate %238, %213 in 1 : vector<8x128xf32>, vector<8x128xf32> -> vector<8x256xf32>
    %c32 = arith.constant 32 : index
    %c0_115 = arith.constant 0 : index
    %243 = vector.load %arg13[%c32, %c0_115] : memref<48x512xf32, #tpu.memory_space<vmem>>, vector<8x512xf32>
    %c0_116 = arith.constant 0 : index
    %c0_117 = arith.constant 0 : index
    %244 = vector.load %arg8[%c0_116, %c0_117] : memref<256x512xf32, #tpu.memory_space<vmem>>, vector<256x512xf32>
    %cst_118 = arith.constant dense<0.000000e+00> : vector<8x512xf32>
    %245 = tpu.matmul %242, %244, %cst_118 {dimension_numbers = #tpu.dot_dimension_numbers<[1], [0], [0], [1], [0, 0, 1, 1], [], []>} : vector<8x256xf32>, vector<256x512xf32>, vector<8x512xf32> -> vector<8x512xf32>
    %246 = arith.addf %243, %245 : vector<8x512xf32>
    %247 = vector.extract_strided_slice %246 {offsets = [0, 0], sizes = [8, 128], strides = [1, 1]} : vector<8x512xf32> to vector<8x128xf32>
    %248 = arith.negf %247 : vector<8x128xf32>
    %249 = math.exp %248 : vector<8x128xf32>
    %cst_119 = arith.constant 1.000000e+00 : f32
    %250 = vector.broadcast %cst_119 : f32 to vector<8x128xf32>
    %251 = arith.addf %250, %249 : vector<8x128xf32>
    %252 = arith.divf %250, %251 : vector<8x128xf32>
    %253 = vector.extract_strided_slice %246 {offsets = [0, 128], sizes = [8, 128], strides = [1, 1]} : vector<8x512xf32> to vector<8x128xf32>
    %254 = arith.negf %253 : vector<8x128xf32>
    %255 = math.exp %254 : vector<8x128xf32>
    %cst_120 = arith.constant 1.000000e+00 : f32
    %256 = vector.broadcast %cst_120 : f32 to vector<8x128xf32>
    %257 = arith.addf %256, %255 : vector<8x128xf32>
    %258 = arith.divf %256, %257 : vector<8x128xf32>
    %259 = vector.extract_strided_slice %246 {offsets = [0, 256], sizes = [8, 128], strides = [1, 1]} : vector<8x512xf32> to vector<8x128xf32>
    %260 = math.tanh %259 : vector<8x128xf32>
    %261 = vector.extract_strided_slice %246 {offsets = [0, 384], sizes = [8, 128], strides = [1, 1]} : vector<8x512xf32> to vector<8x128xf32>
    %262 = arith.negf %261 : vector<8x128xf32>
    %263 = math.exp %262 : vector<8x128xf32>
    %cst_121 = arith.constant 1.000000e+00 : f32
    %264 = vector.broadcast %cst_121 : f32 to vector<8x128xf32>
    %265 = arith.addf %264, %263 : vector<8x128xf32>
    %266 = arith.divf %264, %265 : vector<8x128xf32>
    %267 = arith.mulf %258, %211 : vector<8x128xf32>
    %268 = arith.mulf %252, %260 : vector<8x128xf32>
    %269 = arith.addf %267, %268 : vector<8x128xf32>
    %270 = math.tanh %269 : vector<8x128xf32>
    %271 = arith.mulf %266, %270 : vector<8x128xf32>
    %272 = vector.shape_cast %271 : vector<8x128xf32> to vector<8x1x128xf32>
    %c0_122 = arith.constant 0 : index
    %c0_123 = arith.constant 0 : index
    %c0_124 = arith.constant 0 : index
    %273 = vector.load %arg4[%c0_122, %c0_123, %c0_124] : memref<8x8x128xf32, #tpu.memory_space<vmem>>, vector<8x8x128xf32>
    %274 = vector.broadcast %272 : vector<8x1x128xf32> to vector<8x8x128xf32>
    %275 = arith.mulf %274, %273 : vector<8x8x128xf32>
    %cst_125 = arith.constant dense<0.000000e+00> : vector<8x8xf32>
    %276 = vector.multi_reduction <add>, %275, %cst_125 [2] : vector<8x8x128xf32> to vector<8x8xf32>
    %277 = vector.shape_cast %276 : vector<8x8xf32> to vector<8x8x1xf32>
    %c0_126 = arith.constant 0 : index
    %c0_127 = arith.constant 0 : index
    %c0_128 = arith.constant 0 : index
    %278 = vector.load %arg5[%c0_126, %c0_127, %c0_128] : memref<8x8x1xf32, #tpu.memory_space<vmem>>, vector<8x8x1xf32>
    %279 = arith.addf %277, %278 : vector<8x8x1xf32>
    %cst_129 = arith.constant dense<0xFF800000> : vector<8x1xf32>
    %280 = vector.multi_reduction <maximumf>, %279, %cst_129 [1] : vector<8x8x1xf32> to vector<8x1xf32>
    %281 = vector.shape_cast %280 : vector<8x1xf32> to vector<8x1x1xf32>
    %282 = vector.broadcast %281 : vector<8x1x1xf32> to vector<8x8x1xf32>
    %283 = arith.subf %279, %282 : vector<8x8x1xf32>
    %284 = math.exp %283 : vector<8x8x1xf32>
    %cst_130 = arith.constant dense<0.000000e+00> : vector<8x1xf32>
    %285 = vector.multi_reduction <add>, %284, %cst_130 [1] : vector<8x8x1xf32> to vector<8x1xf32>
    %286 = vector.shape_cast %285 : vector<8x1xf32> to vector<8x1x1xf32>
    %287 = vector.broadcast %286 : vector<8x1x1xf32> to vector<8x8x1xf32>
    %288 = arith.divf %284, %287 : vector<8x8x1xf32>
    %c0_131 = arith.constant 0 : index
    %c0_132 = arith.constant 0 : index
    %c0_133 = arith.constant 0 : index
    %289 = vector.load %arg3[%c0_131, %c0_132, %c0_133] : memref<8x8x128xf32, #tpu.memory_space<vmem>>, vector<8x8x128xf32>
    %290 = vector.broadcast %288 : vector<8x8x1xf32> to vector<8x8x128xf32>
    %291 = arith.mulf %290, %289 : vector<8x8x128xf32>
    %cst_134 = arith.constant dense<0.000000e+00> : vector<8x128xf32>
    %292 = vector.multi_reduction <add>, %291, %cst_134 [1] : vector<8x8x128xf32> to vector<8x128xf32>
    %293 = tpu.concatenate %292, %271 in 1 : vector<8x128xf32>, vector<8x128xf32> -> vector<8x256xf32>
    %c0_135 = arith.constant 0 : index
    %c0_136 = arith.constant 0 : index
    %294 = vector.load %arg9[%c0_135, %c0_136] : memref<256x128xf32, #tpu.memory_space<vmem>>, vector<256x128xf32>
    %cst_137 = arith.constant dense<0.000000e+00> : vector<8x128xf32>
    %295 = tpu.matmul %293, %294, %cst_137 {dimension_numbers = #tpu.dot_dimension_numbers<[1], [0], [0], [1], [0, 0, 1, 1], [], []>} : vector<8x256xf32>, vector<256x128xf32>, vector<8x128xf32> -> vector<8x128xf32>
    %296 = math.tanh %295 : vector<8x128xf32>
    %c0_138 = arith.constant 0 : index
    %c4 = arith.constant 4 : index
    %c0_139 = arith.constant 0 : index
    %297 = vector.load %arg10[%c0_138, %c4, %c0_139] : memref<8x6x128xf32, #tpu.memory_space<vmem>>, vector<8x1x128xf32>
    %298 = vector.shape_cast %297 : vector<8x1x128xf32> to vector<8x128xf32>
    %299 = vector.shape_cast %296 : vector<8x128xf32> to vector<8x1x128xf32>
    tpu.vector_store %arg10[%c0_138, %c4, %c0_139], %299 {strides = array<i32>} : memref<8x6x128xf32, #tpu.memory_space<vmem>>, vector<8x1x128xf32>,
    %300 = tpu.concatenate %296, %271 in 1 : vector<8x128xf32>, vector<8x128xf32> -> vector<8x256xf32>
    %c40 = arith.constant 40 : index
    %c0_140 = arith.constant 0 : index
    %301 = vector.load %arg13[%c40, %c0_140] : memref<48x512xf32, #tpu.memory_space<vmem>>, vector<8x512xf32>
    %c0_141 = arith.constant 0 : index
    %c0_142 = arith.constant 0 : index
    %302 = vector.load %arg8[%c0_141, %c0_142] : memref<256x512xf32, #tpu.memory_space<vmem>>, vector<256x512xf32>
    %cst_143 = arith.constant dense<0.000000e+00> : vector<8x512xf32>
    %303 = tpu.matmul %300, %302, %cst_143 {dimension_numbers = #tpu.dot_dimension_numbers<[1], [0], [0], [1], [0, 0, 1, 1], [], []>} : vector<8x256xf32>, vector<256x512xf32>, vector<8x512xf32> -> vector<8x512xf32>
    %304 = arith.addf %301, %303 : vector<8x512xf32>
    %305 = vector.extract_strided_slice %304 {offsets = [0, 0], sizes = [8, 128], strides = [1, 1]} : vector<8x512xf32> to vector<8x128xf32>
    %306 = arith.negf %305 : vector<8x128xf32>
    %307 = math.exp %306 : vector<8x128xf32>
    %cst_144 = arith.constant 1.000000e+00 : f32
    %308 = vector.broadcast %cst_144 : f32 to vector<8x128xf32>
    %309 = arith.addf %308, %307 : vector<8x128xf32>
    %310 = arith.divf %308, %309 : vector<8x128xf32>
    %311 = vector.extract_strided_slice %304 {offsets = [0, 128], sizes = [8, 128], strides = [1, 1]} : vector<8x512xf32> to vector<8x128xf32>
    %312 = arith.negf %311 : vector<8x128xf32>
    %313 = math.exp %312 : vector<8x128xf32>
    %cst_145 = arith.constant 1.000000e+00 : f32
    %314 = vector.broadcast %cst_145 : f32 to vector<8x128xf32>
    %315 = arith.addf %314, %313 : vector<8x128xf32>
    %316 = arith.divf %314, %315 : vector<8x128xf32>
    %317 = vector.extract_strided_slice %304 {offsets = [0, 256], sizes = [8, 128], strides = [1, 1]} : vector<8x512xf32> to vector<8x128xf32>
    %318 = math.tanh %317 : vector<8x128xf32>
    %319 = vector.extract_strided_slice %304 {offsets = [0, 384], sizes = [8, 128], strides = [1, 1]} : vector<8x512xf32> to vector<8x128xf32>
    %320 = arith.negf %319 : vector<8x128xf32>
    %321 = math.exp %320 : vector<8x128xf32>
    %cst_146 = arith.constant 1.000000e+00 : f32
    %322 = vector.broadcast %cst_146 : f32 to vector<8x128xf32>
    %323 = arith.addf %322, %321 : vector<8x128xf32>
    %324 = arith.divf %322, %323 : vector<8x128xf32>
    %325 = arith.mulf %316, %269 : vector<8x128xf32>
    %326 = arith.mulf %310, %318 : vector<8x128xf32>
    %327 = arith.addf %325, %326 : vector<8x128xf32>
    %328 = math.tanh %327 : vector<8x128xf32>
    %329 = arith.mulf %324, %328 : vector<8x128xf32>
    %330 = vector.shape_cast %329 : vector<8x128xf32> to vector<8x1x128xf32>
    %c0_147 = arith.constant 0 : index
    %c0_148 = arith.constant 0 : index
    %c0_149 = arith.constant 0 : index
    %331 = vector.load %arg4[%c0_147, %c0_148, %c0_149] : memref<8x8x128xf32, #tpu.memory_space<vmem>>, vector<8x8x128xf32>
    %332 = vector.broadcast %330 : vector<8x1x128xf32> to vector<8x8x128xf32>
    %333 = arith.mulf %332, %331 : vector<8x8x128xf32>
    %cst_150 = arith.constant dense<0.000000e+00> : vector<8x8xf32>
    %334 = vector.multi_reduction <add>, %333, %cst_150 [2] : vector<8x8x128xf32> to vector<8x8xf32>
    %335 = vector.shape_cast %334 : vector<8x8xf32> to vector<8x8x1xf32>
    %c0_151 = arith.constant 0 : index
    %c0_152 = arith.constant 0 : index
    %c0_153 = arith.constant 0 : index
    %336 = vector.load %arg5[%c0_151, %c0_152, %c0_153] : memref<8x8x1xf32, #tpu.memory_space<vmem>>, vector<8x8x1xf32>
    %337 = arith.addf %335, %336 : vector<8x8x1xf32>
    %cst_154 = arith.constant dense<0xFF800000> : vector<8x1xf32>
    %338 = vector.multi_reduction <maximumf>, %337, %cst_154 [1] : vector<8x8x1xf32> to vector<8x1xf32>
    %339 = vector.shape_cast %338 : vector<8x1xf32> to vector<8x1x1xf32>
    %340 = vector.broadcast %339 : vector<8x1x1xf32> to vector<8x8x1xf32>
    %341 = arith.subf %337, %340 : vector<8x8x1xf32>
    %342 = math.exp %341 : vector<8x8x1xf32>
    %cst_155 = arith.constant dense<0.000000e+00> : vector<8x1xf32>
    %343 = vector.multi_reduction <add>, %342, %cst_155 [1] : vector<8x8x1xf32> to vector<8x1xf32>
    %344 = vector.shape_cast %343 : vector<8x1xf32> to vector<8x1x1xf32>
    %345 = vector.broadcast %344 : vector<8x1x1xf32> to vector<8x8x1xf32>
    %346 = arith.divf %342, %345 : vector<8x8x1xf32>
    %c0_156 = arith.constant 0 : index
    %c0_157 = arith.constant 0 : index
    %c0_158 = arith.constant 0 : index
    %347 = vector.load %arg3[%c0_156, %c0_157, %c0_158] : memref<8x8x128xf32, #tpu.memory_space<vmem>>, vector<8x8x128xf32>
    %348 = vector.broadcast %346 : vector<8x8x1xf32> to vector<8x8x128xf32>
    %349 = arith.mulf %348, %347 : vector<8x8x128xf32>
    %cst_159 = arith.constant dense<0.000000e+00> : vector<8x128xf32>
    %350 = vector.multi_reduction <add>, %349, %cst_159 [1] : vector<8x8x128xf32> to vector<8x128xf32>
    %351 = tpu.concatenate %350, %329 in 1 : vector<8x128xf32>, vector<8x128xf32> -> vector<8x256xf32>
    %c0_160 = arith.constant 0 : index
    %c0_161 = arith.constant 0 : index
    %352 = vector.load %arg9[%c0_160, %c0_161] : memref<256x128xf32, #tpu.memory_space<vmem>>, vector<256x128xf32>
    %cst_162 = arith.constant dense<0.000000e+00> : vector<8x128xf32>
    %353 = tpu.matmul %351, %352, %cst_162 {dimension_numbers = #tpu.dot_dimension_numbers<[1], [0], [0], [1], [0, 0, 1, 1], [], []>} : vector<8x256xf32>, vector<256x128xf32>, vector<8x128xf32> -> vector<8x128xf32>
    %354 = math.tanh %353 : vector<8x128xf32>
    %c0_163 = arith.constant 0 : index
    %c5 = arith.constant 5 : index
    %c0_164 = arith.constant 0 : index
    %355 = vector.load %arg10[%c0_163, %c5, %c0_164] : memref<8x6x128xf32, #tpu.memory_space<vmem>>, vector<8x1x128xf32>
    %356 = vector.shape_cast %355 : vector<8x1x128xf32> to vector<8x128xf32>
    %357 = vector.shape_cast %354 : vector<8x128xf32> to vector<8x1x128xf32>
    tpu.vector_store %arg10[%c0_163, %c5, %c0_164], %357 {strides = array<i32>} : memref<8x6x128xf32, #tpu.memory_space<vmem>>, vector<8x1x128xf32>,
    %c0_165 = arith.constant 0 : index
    %c0_166 = arith.constant 0 : index
    %358 = vector.load %arg11[%c0_165, %c0_166] : memref<8x128xf32, #tpu.memory_space<vmem>>, vector<8x128xf32>
    tpu.vector_store %arg11[%c0_165, %c0_166], %329 {strides = array<i32>} : memref<8x128xf32, #tpu.memory_space<vmem>>, vector<8x128xf32>,
    %c0_167 = arith.constant 0 : index
    %c0_168 = arith.constant 0 : index
    %359 = vector.load %arg12[%c0_167, %c0_168] : memref<8x128xf32, #tpu.memory_space<vmem>>, vector<8x128xf32>
    tpu.vector_store %arg12[%c0_167, %c0_168], %327 {strides = array<i32>} : memref<8x128xf32, #tpu.memory_space<vmem>>, vector<8x128xf32>,
    return
  }
}

</mosaic_0001>

<llo_original>
// kernel: cc_decoder_forward.1
$region0: #{cc_decoder_forward.1}
  #allocation0 [shape = 'u32[]', space=smem, size = 0x4, offset = 0x4, fixed_abs, tag = 'smem constant byte address 0x4 - core index']
  #allocation1 [shape = 'u32[144,128]{1,0:T(1,128)}', space=vmem, size = 0x12000, scoped, tag = 'internal scratch']
  #allocation2 [shape = 'f32[48,512]{1,0:T(8,128)}', space=vmem, size = 0x18000, scoped, tag = 'scratch operand']
  %s0 = inlined_call_operand.vmem [shape: f32[48,16], index: 0, kind: input, shape index: {}]
  %s1 = inlined_call_operand.vmem [shape: f32[8,128], index: 1, kind: input, shape index: {}]
  %s2 = inlined_call_operand.vmem [shape: f32[8,128], index: 2, kind: input, shape index: {}]
  %s3 = inlined_call_operand.vmem [shape: f32[8,8,128], index: 3, kind: input, shape index: {}]
  %s4 = inlined_call_operand.vmem [shape: f32[8,8,128], index: 4, kind: input, shape index: {}]
  %s5 = inlined_call_operand.vmem [shape: f32[8,8,1], index: 5, kind: input, shape index: {}]
  %s6 = inlined_call_operand.vmem [shape: f32[16,512], index: 6, kind: input, shape index: {}]
  %s7 = inlined_call_operand.vmem [shape: f32[1,512], index: 7, kind: input, shape index: {}]
  %s8 = inlined_call_operand.vmem [shape: f32[256,512], index: 8, kind: input, shape index: {}]
  %s9 = inlined_call_operand.vmem [shape: f32[256,128], index: 9, kind: input, shape index: {}]
  %s10 = inlined_call_operand.vmem [shape: f32[8,6,128], index: 10, kind: output, shape index: {0}]
  %s11 = inlined_call_operand.vmem [shape: f32[8,128], index: 11, kind: output, shape index: {1}]
  %s12 = inlined_call_operand.vmem [shape: f32[8,128], index: 12, kind: output, shape index: {2}]
  %13 = xla_tuple %s10, %s11, %s12
  %s14 = sld [smem:[#allocation0]]
  $region66: #{cc_decoder_forward.1} parent=0
    _
  %s16 = ssub.s32 1, %s14
  %s17 = scalar_select 0, %s16, %s14
  // Predicated region
  $region2: #{cc_decoder_forward.1} parent=0 // pred_check
    _
  $region3: #{cc_decoder_forward.1} parent=0 // pred_check_branch
    %19 = sbr.rel (0) target = $region5
  $region4: #{cc_decoder_forward.1} parent=0 // pred_region
    _
  $region5: #{cc_decoder_forward.1} parent=0 // pred_fallthru
    _
  // Predicated region
  $region6: #{cc_decoder_forward.1} parent=0 // pred_check
    _
  $region7: #{cc_decoder_forward.1} parent=0 // pred_check_branch
    %21 = sbr.rel (0) target = $region9
  $region8: #{cc_decoder_forward.1} parent=0 // pred_region
    _
  $region9: #{cc_decoder_forward.1} parent=0 // pred_fallthru
    _
  // Predicated region
  $region10: #{cc_decoder_forward.1} parent=0 // pred_check
    _
  $region11: #{cc_decoder_forward.1} parent=0 // pred_check_branch
    %23 = sbr.rel (0) target = $region13
  $region12: #{cc_decoder_forward.1} parent=0 // pred_region
    _
  $region13: #{cc_decoder_forward.1} parent=0 // pred_fallthru
    _
  // Predicated region
  $region14: #{cc_decoder_forward.1} parent=0 // pred_check
    _
  $region15: #{cc_decoder_forward.1} parent=0 // pred_check_branch
    %25 = sbr.rel (0) target = $region17
  $region16: #{cc_decoder_forward.1} parent=0 // pred_region
    _
  $region17: #{cc_decoder_forward.1} parent=0 // pred_fallthru
    _
  // Predicated region
  $region18: #{cc_decoder_forward.1} parent=0 // pred_check
    _
  $region19: #{cc_decoder_forward.1} parent=0 // pred_check_branch
    %27 = sbr.rel (0) target = $region21
  $region20: #{cc_decoder_forward.1} parent=0 // pred_region
    _
  $region21: #{cc_decoder_forward.1} parent=0 // pred_fallthru
    _
  // Predicated region
  $region22: #{cc_decoder_forward.1} parent=0 // pred_check
    _
  $region23: #{cc_decoder_forward.1} parent=0 // pred_check_branch
    %29 = sbr.rel (0) target = $region25
  $region24: #{cc_decoder_forward.1} parent=0 // pred_region
    _
  $region25: #{cc_decoder_forward.1} parent=0 // pred_fallthru
    _
  // Predicated region
  $region26: #{cc_decoder_forward.1} parent=0 // pred_check
    _
  $region27: #{cc_decoder_forward.1} parent=0 // pred_check_branch
    %31 = sbr.rel (0) target = $region29
  $region28: #{cc_decoder_forward.1} parent=0 // pred_region
    _
  $region29: #{cc_decoder_forward.1} parent=0 // pred_fallthru
    _
  // Predicated region
  $region30: #{cc_decoder_forward.1} parent=0 // pred_check
    _
  $region31: #{cc_decoder_forward.1} parent=0 // pred_check_branch
    %33 = sbr.rel (0) target = $region33
  $region32: #{cc_decoder_forward.1} parent=0 // pred_region
    _
  $region33: #{cc_decoder_forward.1} parent=0 // pred_fallthru
    _
  // Predicated region
  $region34: #{cc_decoder_forward.1} parent=0 // pred_check
    _
  $region35: #{cc_decoder_forward.1} parent=0 // pred_check_branch
    %35 = sbr.rel (0) target = $region37
  $region36: #{cc_decoder_forward.1} parent=0 // pred_region
    _
  $region37: #{cc_decoder_forward.1} parent=0 // pred_fallthru
    _
  // Predicated region
  $region38: #{cc_decoder_forward.1} parent=0 // pred_check
    _
  $region39: #{cc_decoder_forward.1} parent=0 // pred_check_branch
    %37 = sbr.rel (0) target = $region41
  $region40: #{cc_decoder_forward.1} parent=0 // pred_region
    _
  $region41: #{cc_decoder_forward.1} parent=0 // pred_fallthru
    _
  %v38 = vld [vmem:[%s0] sm:$0xff]
  %v39 = vld [vmem:[%s0 + $0x8] sm:$0xff]
  %v40 = vld [vmem:[%s0 + $0x10] sm:$0xff]
  %v41 = vld [vmem:[%s0 + $0x18] sm:$0xff]
  %v42 = vld [vmem:[%s0 + $0x20] sm:$0xff]
  %v43 = vld [vmem:[%s0 + $0x28] sm:$0xff]
  %v44 = vld [vmem:[%s6] sm:$0xff]
  %v45 = vld [vmem:[%s6 + $0x8] sm:$0xff]
  %v46 = vld [vmem:[%s6 + $0x10] sm:$0xff]
  %v47 = vld [vmem:[%s6 + $0x18] sm:$0xff]
  %v48 = vld [vmem:[%s6 + $0x20] sm:$0xff]
  %v49 = vld [vmem:[%s6 + $0x28] sm:$0xff]
  %v50 = vld [vmem:[%s6 + $0x30] sm:$0xff]
  %v51 = vld [vmem:[%s6 + $0x38] sm:$0xff]
  %v52 = vld [vmem:[%s7] sm:$0xf]
  %v54 = vlaneseq
  %v55 = vshrl.u32 %v54, 7
  %v56 = vsub.s32 0, %v55
  %v57 = vrot.slane %v52, %v56
  %v58 = vlaneseq
  %v59 = vshrl.u32 %v58, 7
  %v60 = vsub.s32 1, %v59
  %v61 = vrot.slane %v52, %v60
  %v62 = vlaneseq
  %v63 = vshrl.u32 %v62, 7
  %v64 = vsub.s32 2, %v63
  %v65 = vrot.slane %v52, %v64
  %v66 = vlaneseq
  %v67 = vshrl.u32 %v66, 7
  %v68 = vsub.s32 3, %v67
  %v69 = vrot.slane %v52, %v68
  %vm74 = vcmask 130048
  %v76 = vsel %vm74, %v38, 0
  %v79 = vsel %vm74, %v39, 0
  %v82 = vsel %vm74, %v40, 0
  %v85 = vsel %vm74, %v41, 0
  %v88 = vsel %vm74, %v42, 0
  %v91 = vsel %vm74, %v43, 0
  %93 = vmatprep.subr.mxu0 0.0
  %94 = vmatpush1.msra.mxu0 0.0
  %95 = vmatprep.subr.mxu0 0.0
  %96 = vmatpush1.msra.mxu0 0.0
  %97 = vmatprep.subr.mxu0 0.0
  %98 = vmatpush1.msra.mxu0 0.0
  %99 = vmatprep.subr.mxu0 0.0
  %100 = vmatpush1.msra.mxu0 0.0
  %101 = vmatprep.subr.mxu0 0.0
  %102 = vmatpush1.msra.mxu0 0.0
  %103 = vmatprep.subr.mxu0 0.0
  %104 = vmatpush1.msra.mxu0 0.0
  %105 = vmatprep.subr.mxu0 0.0
  %106 = vmatpush1.msra.mxu0 0.0
  %107 = vmatprep.subr.mxu0 0.0
  %108 = vmatpush1.msra.mxu0 0.0
  %109 = vmatprep.subr.mxu0 0.0
  %110 = vmatpush1.msra.mxu0 0.0
  %111 = vmatprep.subr.mxu0 0.0
  %112 = vmatpush1.msra.mxu0 0.0
  %113 = vmatprep.subr.mxu0 0.0
  %114 = vmatpush1.msra.mxu0 0.0
  %115 = vmatprep.subr.mxu0 0.0
  %116 = vmatpush1.msra.mxu0 0.0
  %117 = vmatprep.subr.mxu0 0.0
  %118 = vmatpush1.msra.mxu0 0.0
  %119 = vmatprep.subr.mxu0 0.0
  %120 = vmatpush1.msra.mxu0 0.0
  %121 = vmatprep.subr.mxu0 %v49
  %122 = vmatpush1.msra.mxu0 %v48
  %123 = vmatprep.subr.mxu0 %v45
  %124 = vmatpush1.msra.mxu0 %v44
  %125 = vmatprep.subr.mxu0 0.0
  %126 = vmatpush2.msra.mxu0 0.0
  %127 = vmatprep.subr.mxu0 0.0
  %128 = vmatpush2.msra.mxu0 0.0
  %129 = vmatprep.subr.mxu0 0.0
  %130 = vmatpush2.msra.mxu0 0.0
  %131 = vmatprep.subr.mxu0 0.0
  %132 = vmatpush2.msra.mxu0 0.0
  %133 = vmatprep.subr.mxu0 0.0
  %134 = vmatpush2.msra.mxu0 0.0
  %135 = vmatprep.subr.mxu0 0.0
  %136 = vmatpush2.msra.mxu0 0.0
  %137 = vmatprep.subr.mxu0 0.0
  %138 = vmatpush2.msra.mxu0 0.0
  %139 = vmatprep.subr.mxu0 0.0
  %140 = vmatpush2.msra.mxu0 0.0
  %141 = vmatprep.subr.mxu0 0.0
  %142 = vmatpush2.msra.mxu0 0.0
  %143 = vmatprep.subr.mxu0 0.0
  %144 = vmatpush2.msra.mxu0 0.0
  %145 = vmatprep.subr.mxu0 0.0
  %146 = vmatpush2.msra.mxu0 0.0
  %147 = vmatprep.subr.mxu0 0.0
  %148 = vmatpush2.msra.mxu0 0.0
  %149 = vmatprep.subr.mxu0 0.0
  %150 = vmatpush2.msra.mxu0 0.0
  %151 = vmatprep.subr.mxu0 0.0
  %152 = vmatpush2.msra.mxu0 0.0
  %153 = vmatprep.subr.mxu0 0.0
  %154 = vmatpush2.msra.mxu0 0.0
  %155 = vmatprep.subr.mxu0 0.0
  %156 = vmatpush2.msra.mxu0 0.0
  %157 = vmatprep.mubr.f32.mxu0 0.0
  %158 = vmatmul.mubr.f32.gmra.mxu0 %v76
  %v159 = vpop.f32.mrf.mxu0
  %v160 = vadd.f32 %v57, %v159
  %v161 = vpop.f32.mrf.mxu0
  %v162 = vadd.f32 %v61, %v161
  %163 = vmatprep.mubr.f32.mxu0 0.0
  %164 = vmatmul.mubr.f32.gmra.mxu0 %v79
  %v165 = vpop.f32.mrf.mxu0
  %v166 = vadd.f32 %v57, %v165
  %v167 = vpop.f32.mrf.mxu0
  %v168 = vadd.f32 %v61, %v167
  %169 = vmatprep.mubr.f32.mxu0 0.0
  %170 = vmatmul.mubr.f32.gmra.mxu0 %v82
  %v171 = vpop.f32.mrf.mxu0
  %v172 = vadd.f32 %v57, %v171
  %v173 = vpop.f32.mrf.mxu0
  %v174 = vadd.f32 %v61, %v173
  %175 = vmatprep.mubr.f32.mxu0 0.0
  %176 = vmatmul.mubr.f32.gmra.mxu0 %v85
  %v177 = vpop.f32.mrf.mxu0
  %v178 = vadd.f32 %v57, %v177
  %v179 = vpop.f32.mrf.mxu0
  %v180 = vadd.f32 %v61, %v179
  %181 = vmatprep.mubr.f32.mxu0 0.0
  %182 = vmatmul.mubr.f32.gmra.mxu0 %v88
  %v183 = vpop.f32.mrf.mxu0
  %v184 = vadd.f32 %v57, %v183
  %v185 = vpop.f32.mrf.mxu0
  %v186 = vadd.f32 %v61, %v185
  %187 = vmatprep.mubr.f32.mxu0 0.0
  %188 = vmatmul.mubr.f32.gmra.mxu0 %v91
  %v189 = vpop.f32.mrf.mxu0
  %v190 = vadd.f32 %v57, %v189
  %v191 = vpop.f32.mrf.mxu0
  %v192 = vadd.f32 %v61, %v191
  %193 = vdwg.mxu0
  %194 = vmatprep.subr.mxu0 0.0
  %195 = vmatpush1.msra.mxu0 0.0
  %196 = vmatprep.subr.mxu0 0.0
  %197 = vmatpush1.msra.mxu0 0.0
  %198 = vmatprep.subr.mxu0 0.0
  %199 = vmatpush1.msra.mxu0 0.0
  %200 = vmatprep.subr.mxu0 0.0
  %201 = vmatpush1.msra.mxu0 0.0
  %202 = vmatprep.subr.mxu0 0.0
  %203 = vmatpush1.msra.mxu0 0.0
  %204 = vmatprep.subr.mxu0 0.0
  %205 = vmatpush1.msra.mxu0 0.0
  %206 = vmatprep.subr.mxu0 0.0
  %207 = vmatpush1.msra.mxu0 0.0
  %208 = vmatprep.subr.mxu0 0.0
  %209 = vmatpush1.msra.mxu0 0.0
  %210 = vmatprep.subr.mxu0 0.0
  %211 = vmatpush1.msra.mxu0 0.0
  %212 = vmatprep.subr.mxu0 0.0
  %213 = vmatpush1.msra.mxu0 0.0
  %214 = vmatprep.subr.mxu0 0.0
  %215 = vmatpush1.msra.mxu0 0.0
  %216 = vmatprep.subr.mxu0 0.0
  %217 = vmatpush1.msra.mxu0 0.0
  %218 = vmatprep.subr.mxu0 0.0
  %219 = vmatpush1.msra.mxu0 0.0
  %220 = vmatprep.subr.mxu0 0.0
  %221 = vmatpush1.msra.mxu0 0.0
  %222 = vmatprep.subr.mxu0 %v51
  %223 = vmatpush1.msra.mxu0 %v50
  %224 = vmatprep.subr.mxu0 %v47
  %225 = vmatpush1.msra.mxu0 %v46
  %226 = vmatprep.subr.mxu0 0.0
  %227 = vmatpush2.msra.mxu0 0.0
  %228 = vmatprep.subr.mxu0 0.0
  %229 = vmatpush2.msra.mxu0 0.0
  %230 = vmatprep.subr.mxu0 0.0
  %231 = vmatpush2.msra.mxu0 0.0
  %232 = vmatprep.subr.mxu0 0.0
  %233 = vmatpush2.msra.mxu0 0.0
  %234 = vmatprep.subr.mxu0 0.0
  %235 = vmatpush2.msra.mxu0 0.0
  %236 = vmatprep.subr.mxu0 0.0
  %237 = vmatpush2.msra.mxu0 0.0
  %238 = vmatprep.subr.mxu0 0.0
  %239 = vmatpush2.msra.mxu0 0.0
  %240 = vmatprep.subr.mxu0 0.0
  %241 = vmatpush2.msra.mxu0 0.0
  %242 = vmatprep.subr.mxu0 0.0
  %243 = vmatpush2.msra.mxu0 0.0
  %244 = vmatprep.subr.mxu0 0.0
  %245 = vmatpush2.msra.mxu0 0.0
  %246 = vmatprep.subr.mxu0 0.0
  %247 = vmatpush2.msra.mxu0 0.0
  %248 = vmatprep.subr.mxu0 0.0
  %249 = vmatpush2.msra.mxu0 0.0
  %250 = vmatprep.subr.mxu0 0.0
  %251 = vmatpush2.msra.mxu0 0.0
  %252 = vmatprep.subr.mxu0 0.0
  %253 = vmatpush2.msra.mxu0 0.0
  %254 = vmatprep.subr.mxu0 0.0
  %255 = vmatpush2.msra.mxu0 0.0
  %256 = vmatprep.subr.mxu0 0.0
  %257 = vmatpush2.msra.mxu0 0.0
  %258 = vmatprep.mubr.f32.mxu0 0.0
  %259 = vmatmul.mubr.f32.gmra.mxu0 %v76
  %v260 = vpop.f32.mrf.mxu0
  %v261 = vadd.f32 %v65, %v260
  %v262 = vpop.f32.mrf.mxu0
  %v263 = vadd.f32 %v69, %v262
  %264 = vmatprep.mubr.f32.mxu0 0.0
  %265 = vmatmul.mubr.f32.gmra.mxu0 %v79
  %v266 = vpop.f32.mrf.mxu0
  %v267 = vadd.f32 %v65, %v266
  %v268 = vpop.f32.mrf.mxu0
  %v269 = vadd.f32 %v69, %v268
  %270 = vmatprep.mubr.f32.mxu0 0.0
  %271 = vmatmul.mubr.f32.gmra.mxu0 %v82
  %v272 = vpop.f32.mrf.mxu0
  %v273 = vadd.f32 %v65, %v272
  %v274 = vpop.f32.mrf.mxu0
  %v275 = vadd.f32 %v69, %v274
  %276 = vmatprep.mubr.f32.mxu0 0.0
  %277 = vmatmul.mubr.f32.gmra.mxu0 %v85
  %v278 = vpop.f32.mrf.mxu0
  %v279 = vadd.f32 %v65, %v278
  %v280 = vpop.f32.mrf.mxu0
  %v281 = vadd.f32 %v69, %v280
  %282 = vmatprep.mubr.f32.mxu0 0.0
  %283 = vmatmul.mubr.f32.gmra.mxu0 %v88
  %v284 = vpop.f32.mrf.mxu0
  %v285 = vadd.f32 %v65, %v284
  %v286 = vpop.f32.mrf.mxu0
  %v287 = vadd.f32 %v69, %v286
  %288 = vmatprep.mubr.f32.mxu0 0.0
  %289 = vmatmul.mubr.f32.gmra.mxu0 %v91
  %v290 = vpop.f32.mrf.mxu0
  %v291 = vadd.f32 %v65, %v290
  %v292 = vpop.f32.mrf.mxu0
  %v293 = vadd.f32 %v69, %v292
  %294 = vdwg.mxu0
  %295 = vst [vmem:[#allocation2] sm:$0xff] %v160
  %296 = vst [vmem:[#allocation2 + $0x8] sm:$0xff] %v162
  %297 = vst [vmem:[#allocation2 + $0x10] sm:$0xff] %v261
  %298 = vst [vmem:[#allocation2 + $0x18] sm:$0xff] %v263
  %299 = vst [vmem:[#allocation2 + $0x20] sm:$0xff] %v166
  %300 = vst [vmem:[#allocation2 + $0x28] sm:$0xff] %v168
  %301 = vst [vmem:[#allocation2 + $0x30] sm:$0xff] %v267
  %302 = vst [vmem:[#allocation2 + $0x38] sm:$0xff] %v269
  %303 = vst [vmem:[#allocation2 + $0x40] sm:$0xff] %v172
  %304 = vst [vmem:[#allocation2 + $0x48] sm:$0xff] %v174
  %305 = vst [vmem:[#allocation2 + $0x50] sm:$0xff] %v273
  %306 = vst [vmem:[#allocation2 + $0x58] sm:$0xff] %v275
  %307 = vst [vmem:[#allocation2 + $0x60] sm:$0xff] %v178
  %308 = vst [vmem:[#allocation2 + $0x68] sm:$0xff] %v180
  %309 = vst [vmem:[#allocation2 + $0x70] sm:$0xff] %v279
  %310 = vst [vmem:[#allocation2 + $0x78] sm:$0xff] %v281
  %311 = vst [vmem:[#allocation2 + $0x80] sm:$0xff] %v184
  %312 = vst [vmem:[#allocation2 + $0x88] sm:$0xff] %v186
  %313 = vst [vmem:[#allocation2 + $0x90] sm:$0xff] %v285
  %314 = vst [vmem:[#allocation2 + $0x98] sm:$0xff] %v287
  %315 = vst [vmem:[#allocation2 + $0xa0] sm:$0xff] %v190
  %316 = vst [vmem:[#allocation2 + $0xa8] sm:$0xff] %v192
  %317 = vst [vmem:[#allocation2 + $0xb0] sm:$0xff] %v291
  %318 = vst [vmem:[#allocation2 + $0xb8] sm:$0xff] %v293
  %v319 = vld [vmem:[%s1] sm:$0xff]
  %v320 = vld [vmem:[%s2] sm:$0xff]
  %v321 = vld [vmem:[#allocation2] sm:$0xff]
  %v322 = vld [vmem:[#allocation2 + $0x8] sm:$0xff]
  %v323 = vld [vmem:[#allocation2 + $0x10] sm:$0xff]
  %v324 = vld [vmem:[#allocation2 + $0x18] sm:$0xff]
  %v325 = vld [vmem:[%s8] sm:$0xff]
  %v326 = vld [vmem:[%s8 + $0x8] sm:$0xff]
  %v327 = vld [vmem:[%s8 + $0x10] sm:$0xff]
  %v328 = vld [vmem:[%s8 + $0x18] sm:$0xff]
  %v329 = vld [vmem:[%s8 + $0x20] sm:$0xff]
  %v330 = vld [vmem:[%s8 + $0x28] sm:$0xff]
  %v331 = vld [vmem:[%s8 + $0x30] sm:$0xff]
  %v332 = vld [vmem:[%s8 + $0x38] sm:$0xff]
  %v333 = vld [vmem:[%s8 + $0x40] sm:$0xff]
  %v334 = vld [vmem:[%s8 + $0x48] sm:$0xff]
  %v335 = vld [vmem:[%s8 + $0x50] sm:$0xff]
  %v336 = vld [vmem:[%s8 + $0x58] sm:$0xff]
  %v337 = vld [vmem:[%s8 + $0x60] sm:$0xff]
  %v338 = vld [vmem:[%s8 + $0x68] sm:$0xff]
  %v339 = vld [vmem:[%s8 + $0x70] sm:$0xff]
  %v340 = vld [vmem:[%s8 + $0x78] sm:$0xff]
  %v341 = vld [vmem:[%s8 + $0x80] sm:$0xff]
  %v342 = vld [vmem:[%s8 + $0x88] sm:$0xff]
  %v343 = vld [vmem:[%s8 + $0x90] sm:$0xff]
  %v344 = vld [vmem:[%s8 + $0x98] sm:$0xff]
  %v345 = vld [vmem:[%s8 + $0xa0] sm:$0xff]
  %v346 = vld [vmem:[%s8 + $0xa8] sm:$0xff]
  %v347 = vld [vmem:[%s8 + $0xb0] sm:$0xff]
  %v348 = vld [vmem:[%s8 + $0xb8] sm:$0xff]
  %v349 = vld [vmem:[%s8 + $0xc0] sm:$0xff]
  %v350 = vld [vmem:[%s8 + $0xc8] sm:$0xff]
  %v351 = vld [vmem:[%s8 + $0xd0] sm:$0xff]
  %v352 = vld [vmem:[%s8 + $0xd8] sm:$0xff]
  %v353 = vld [vmem:[%s8 + $0xe0] sm:$0xff]
  %v354 = vld [vmem:[%s8 + $0xe8] sm:$0xff]
  %v355 = vld [vmem:[%s8 + $0xf0] sm:$0xff]
  %v356 = vld [vmem:[%s8 + $0xf8] sm:$0xff]
  %v357 = vld [vmem:[%s8 + $0x100] sm:$0xff]
  %v358 = vld [vmem:[%s8 + $0x108] sm:$0xff]
  %v359 = vld [vmem:[%s8 + $0x110] sm:$0xff]
  %v360 = vld [vmem:[%s8 + $0x118] sm:$0xff]
  %v361 = vld [vmem:[%s8 + $0x120] sm:$0xff]
  %v362 = vld [vmem:[%s8 + $0x128] sm:$0xff]
  %v363 = vld [vmem:[%s8 + $0x130] sm:$0xff]
  %v364 = vld [vmem:[%s8 + $0x138] sm:$0xff]
  %v365 = vld [vmem:[%s8 + $0x140] sm:$0xff]
  %v366 = vld [vmem:[%s8 + $0x148] sm:$0xff]
  %v367 = vld [vmem:[%s8 + $0x150] sm:$0xff]
  %v368 = vld [vmem:[%s8 + $0x158] sm:$0xff]
  %v369 = vld [vmem:[%s8 + $0x160] sm:$0xff]
  %v370 = vld [vmem:[%s8 + $0x168] sm:$0xff]
  %v371 = vld [vmem:[%s8 + $0x170] sm:$0xff]
  %v372 = vld [vmem:[%s8 + $0x178] sm:$0xff]
  %v373 = vld [vmem:[%s8 + $0x180] sm:$0xff]
  %v374 = vld [vmem:[%s8 + $0x188] sm:$0xff]
  %v375 = vld [vmem:[%s8 + $0x190] sm:$0xff]
  %v376 = vld [vmem:[%s8 + $0x198] sm:$0xff]
  %v377 = vld [vmem:[%s8 + $0x1a0] sm:$0xff]
  %v378 = vld [vmem:[%s8 + $0x1a8] sm:$0xff]
  %v379 = vld [vmem:[%s8 + $0x1b0] sm:$0xff]
  %v380 = vld [vmem:[%s8 + $0x1b8] sm:$0xff]
  %v381 = vld [vmem:[%s8 + $0x1c0] sm:$0xff]
  %v382 = vld [vmem:[%s8 + $0x1c8] sm:$0xff]
  %v383 = vld [vmem:[%s8 + $0x1d0] sm:$0xff]
  %v384 = vld [vmem:[%s8 + $0x1d8] sm:$0xff]
  %v385 = vld [vmem:[%s8 + $0x1e0] sm:$0xff]
  %v386 = vld [vmem:[%s8 + $0x1e8] sm:$0xff]
  %v387 = vld [vmem:[%s8 + $0x1f0] sm:$0xff]
  %v388 = vld [vmem:[%s8 + $0x1f8] sm:$0xff]
  %v389 = vld [vmem:[%s8 + $0x200] sm:$0xff]
  %v390 = vld [vmem:[%s8 + $0x208] sm:$0xff]
  %v391 = vld [vmem:[%s8 + $0x210] sm:$0xff]
  %v392 = vld [vmem:[%s8 + $0x218] sm:$0xff]
  %v393 = vld [vmem:[%s8 + $0x220] sm:$0xff]
  %v394 = vld [vmem:[%s8 + $0x228] sm:$0xff]
  %v395 = vld [vmem:[%s8 + $0x230] sm:$0xff]
  %v396 = vld [vmem:[%s8 + $0x238] sm:$0xff]
  %v397 = vld [vmem:[%s8 + $0x240] sm:$0xff]
  %v398 = vld [vmem:[%s8 + $0x248] sm:$0xff]
  %v399 = vld [vmem:[%s8 + $0x250] sm:$0xff]
  %v400 = vld [vmem:[%s8 + $0x258] sm:$0xff]
  %v401 = vld [vmem:[%s8 + $0x260] sm:$0xff]
  %v402 = vld [vmem:[%s8 + $0x268] sm:$0xff]
  %v403 = vld [vmem:[%s8 + $0x270] sm:$0xff]
  %v404 = vld [vmem:[%s8 + $0x278] sm:$0xff]
  %v405 = vld [vmem:[%s8 + $0x280] sm:$0xff]
  %v406 = vld [vmem:[%s8 + $0x288] sm:$0xff]
  %v407 = vld [vmem:[%s8 + $0x290] sm:$0xff]
  %v408 = vld [vmem:[%s8 + $0x298] sm:$0xff]
  %v409 = vld [vmem:[%s8 + $0x2a0] sm:$0xff]
  %v410 = vld [vmem:[%s8 + $0x2a8] sm:$0xff]
  %v411 = vld [vmem:[%s8 + $0x2b0] sm:$0xff]
  %v412 = vld [vmem:[%s8 + $0x2b8] sm:$0xff]
  %v413 = vld [vmem:[%s8 + $0x2c0] sm:$0xff]
  %v414 = vld [vmem:[%s8 + $0x2c8] sm:$0xff]
  %v415 = vld [vmem:[%s8 + $0x2d0] sm:$0xff]
  %v416 = vld [vmem:[%s8 + $0x2d8] sm:$0xff]
  %v417 = vld [vmem:[%s8 + $0x2e0] sm:$0xff]
  %v418 = vld [vmem:[%s8 + $0x2e8] sm:$0xff]
  %v419 = vld [vmem:[%s8 + $0x2f0] sm:$0xff]
  %v420 = vld [vmem:[%s8 + $0x2f8] sm:$0xff]
  %v421 = vld [vmem:[%s8 + $0x300] sm:$0xff]
  %v422 = vld [vmem:[%s8 + $0x308] sm:$0xff]
  %v423 = vld [vmem:[%s8 + $0x310] sm:$0xff]
  %v424 = vld [vmem:[%s8 + $0x318] sm:$0xff]
  %v425 = vld [vmem:[%s8 + $0x320] sm:$0xff]
  %v426 = vld [vmem:[%s8 + $0x328] sm:$0xff]
  %v427 = vld [vmem:[%s8 + $0x330] sm:$0xff]
  %v428 = vld [vmem:[%s8 + $0x338] sm:$0xff]
  %v429 = vld [vmem:[%s8 + $0x340] sm:$0xff]
  %v430 = vld [vmem:[%s8 + $0x348] sm:$0xff]
  %v431 = vld [vmem:[%s8 + $0x350] sm:$0xff]
  %v432 = vld [vmem:[%s8 + $0x358] sm:$0xff]
  %v433 = vld [vmem:[%s8 + $0x360] sm:$0xff]
  %v434 = vld [vmem:[%s8 + $0x368] sm:$0xff]
  %v435 = vld [vmem:[%s8 + $0x370] sm:$0xff]
  %v436 = vld [vmem:[%s8 + $0x378] sm:$0xff]
  %v437 = vld [vmem:[%s8 + $0x380] sm:$0xff]
  %v438 = vld [vmem:[%s8 + $0x388] sm:$0xff]
  %v439 = vld [vmem:[%s8 + $0x390] sm:$0xff]
  %v440 = vld [vmem:[%s8 + $0x398] sm:$0xff]
  %v441 = vld [vmem:[%s8 + $0x3a0] sm:$0xff]
  %v442 = vld [vmem:[%s8 + $0x3a8] sm:$0xff]
  %v443 = vld [vmem:[%s8 + $0x3b0] sm:$0xff]
  %v444 = vld [vmem:[%s8 + $0x3b8] sm:$0xff]
  %v445 = vld [vmem:[%s8 + $0x3c0] sm:$0xff]
  %v446 = vld [vmem:[%s8 + $0x3c8] sm:$0xff]
  %v447 = vld [vmem:[%s8 + $0x3d0] sm:$0xff]
  %v448 = vld [vmem:[%s8 + $0x3d8] sm:$0xff]
  %v449 = vld [vmem:[%s8 + $0x3e0] sm:$0xff]
  %v450 = vld [vmem:[%s8 + $0x3e8] sm:$0xff]
  %v451 = vld [vmem:[%s8 + $0x3f0] sm:$0xff]
  %v452 = vld [vmem:[%s8 + $0x3f8] sm:$0xff]
  %453 = vmatprep.subr.mxu0 %v386
  %454 = vmatpush1.msra.mxu0 %v385
  %455 = vmatprep.subr.mxu0 %v382
  %456 = vmatpush1.msra.mxu0 %v381
  %457 = vmatprep.subr.mxu0 %v378
  %458 = vmatpush1.msra.mxu0 %v377
  %459 = vmatprep.subr.mxu0 %v374
  %460 = vmatpush1.msra.mxu0 %v373
  %461 = vmatprep.subr.mxu0 %v370
  %462 = vmatpush1.msra.mxu0 %v369
  %463 = vmatprep.subr.mxu0 %v366
  %464 = vmatpush1.msra.mxu0 %v365
  %465 = vmatprep.subr.mxu0 %v362
  %466 = vmatpush1.msra.mxu0 %v361
  %467 = vmatprep.subr.mxu0 %v358
  %468 = vmatpush1.msra.mxu0 %v357
  %469 = vmatprep.subr.mxu0 %v354
  %470 = vmatpush1.msra.mxu0 %v353
  %471 = vmatprep.subr.mxu0 %v350
  %472 = vmatpush1.msra.mxu0 %v349
  %473 = vmatprep.subr.mxu0 %v346
  %474 = vmatpush1.msra.mxu0 %v345
  %475 = vmatprep.subr.mxu0 %v342
  %476 = vmatpush1.msra.mxu0 %v341
  %477 = vmatprep.subr.mxu0 %v338
  %478 = vmatpush1.msra.mxu0 %v337
  %479 = vmatprep.subr.mxu0 %v334
  %480 = vmatpush1.msra.mxu0 %v333
  %481 = vmatprep.subr.mxu0 %v330
  %482 = vmatpush1.msra.mxu0 %v329
  %483 = vmatprep.subr.mxu0 %v326
  %484 = vmatpush1.msra.mxu0 %v325
  %485 = vmatprep.subr.mxu0 %v450
  %486 = vmatpush2.msra.mxu0 %v449
  %487 = vmatprep.subr.mxu0 %v446
  %488 = vmatpush2.msra.mxu0 %v445
  %489 = vmatprep.subr.mxu0 %v442
  %490 = vmatpush2.msra.mxu0 %v441
  %491 = vmatprep.subr.mxu0 %v438
  %492 = vmatpush2.msra.mxu0 %v437
  %493 = vmatprep.subr.mxu0 %v434
  %494 = vmatpush2.msra.mxu0 %v433
  %495 = vmatprep.subr.mxu0 %v430
  %496 = vmatpush2.msra.mxu0 %v429
  %497 = vmatprep.subr.mxu0 %v426
  %498 = vmatpush2.msra.mxu0 %v425
  %499 = vmatprep.subr.mxu0 %v422
  %500 = vmatpush2.msra.mxu0 %v421
  %501 = vmatprep.subr.mxu0 %v418
  %502 = vmatpush2.msra.mxu0 %v417
  %503 = vmatprep.subr.mxu0 %v414
  %504 = vmatpush2.msra.mxu0 %v413
  %505 = vmatprep.subr.mxu0 %v410
  %506 = vmatpush2.msra.mxu0 %v409
  %507 = vmatprep.subr.mxu0 %v406
  %508 = vmatpush2.msra.mxu0 %v405
  %509 = vmatprep.subr.mxu0 %v402
  %510 = vmatpush2.msra.mxu0 %v401
  %511 = vmatprep.subr.mxu0 %v398
  %512 = vmatpush2.msra.mxu0 %v397
  %513 = vmatprep.subr.mxu0 %v394
  %514 = vmatpush2.msra.mxu0 %v393
  %515 = vmatprep.subr.mxu0 %v390
  %516 = vmatpush2.msra.mxu0 %v389
  %517 = vmatprep.mubr.f32.mxu0 %v319
  %518 = vmatmul.mubr.f32.gmra.mxu0 %v319
  %v519 = vpop.f32.mrf.mxu0
  %v520 = vadd.f32 0.0, %v519
  %v521 = vpop.f32.mrf.mxu0
  %v522 = vadd.f32 0.0, %v521
  %523 = vdwg.mxu0
  %524 = vmatprep.subr.mxu0 %v388
  %525 = vmatpush1.msra.mxu0 %v387
  %526 = vmatprep.subr.mxu0 %v384
  %527 = vmatpush1.msra.mxu0 %v383
  %528 = vmatprep.subr.mxu0 %v380
  %529 = vmatpush1.msra.mxu0 %v379
  %530 = vmatprep.subr.mxu0 %v376
  %531 = vmatpush1.msra.mxu0 %v375
  %532 = vmatprep.subr.mxu0 %v372
  %533 = vmatpush1.msra.mxu0 %v371
  %534 = vmatprep.subr.mxu0 %v368
  %535 = vmatpush1.msra.mxu0 %v367
  %536 = vmatprep.subr.mxu0 %v364
  %537 = vmatpush1.msra.mxu0 %v363
  %538 = vmatprep.subr.mxu0 %v360
  %539 = vmatpush1.msra.mxu0 %v359
  %540 = vmatprep.subr.mxu0 %v356
  %541 = vmatpush1.msra.mxu0 %v355
  %542 = vmatprep.subr.mxu0 %v352
  %543 = vmatpush1.msra.mxu0 %v351
  %544 = vmatprep.subr.mxu0 %v348
  %545 = vmatpush1.msra.mxu0 %v347
  %546 = vmatprep.subr.mxu0 %v344
  %547 = vmatpush1.msra.mxu0 %v343
  %548 = vmatprep.subr.mxu0 %v340
  %549 = vmatpush1.msra.mxu0 %v339
  %550 = vmatprep.subr.mxu0 %v336
  %551 = vmatpush1.msra.mxu0 %v335
  %552 = vmatprep.subr.mxu0 %v332
  %553 = vmatpush1.msra.mxu0 %v331
  %554 = vmatprep.subr.mxu0 %v328
  %555 = vmatpush1.msra.mxu0 %v327
  %556 = vmatprep.subr.mxu0 %v452
  %557 = vmatpush2.msra.mxu0 %v451
  %558 = vmatprep.subr.mxu0 %v448
  %559 = vmatpush2.msra.mxu0 %v447
  %560 = vmatprep.subr.mxu0 %v444
  %561 = vmatpush2.msra.mxu0 %v443
  %562 = vmatprep.subr.mxu0 %v440
  %563 = vmatpush2.msra.mxu0 %v439
  %564 = vmatprep.subr.mxu0 %v436
  %565 = vmatpush2.msra.mxu0 %v435
  %566 = vmatprep.subr.mxu0 %v432
  %567 = vmatpush2.msra.mxu0 %v431
  %568 = vmatprep.subr.mxu0 %v428
  %569 = vmatpush2.msra.mxu0 %v427
  %570 = vmatprep.subr.mxu0 %v424
  %571 = vmatpush2.msra.mxu0 %v423
  %572 = vmatprep.subr.mxu0 %v420
  %573 = vmatpush2.msra.mxu0 %v419
  %574 = vmatprep.subr.mxu0 %v416
  %575 = vmatpush2.msra.mxu0 %v415
  %576 = vmatprep.subr.mxu0 %v412
  %577 = vmatpush2.msra.mxu0 %v411
  %578 = vmatprep.subr.mxu0 %v408
  %579 = vmatpush2.msra.mxu0 %v407
  %580 = vmatprep.subr.mxu0 %v404
  %581 = vmatpush2.msra.mxu0 %v403
  %582 = vmatprep.subr.mxu0 %v400
  %583 = vmatpush2.msra.mxu0 %v399
  %584 = vmatprep.subr.mxu0 %v396
  %585 = vmatpush2.msra.mxu0 %v395
  %586 = vmatprep.subr.mxu0 %v392
  %587 = vmatpush2.msra.mxu0 %v391
  %588 = vmatprep.mubr.f32.mxu0 %v319
  %589 = vmatmul.mubr.f32.gmra.mxu0 %v319
  %v590 = vpop.f32.mrf.mxu0
  %v591 = vadd.f32 0.0, %v590
  %v592 = vpop.f32.mrf.mxu0
  %v593 = vadd.f32 0.0, %v592
  %594 = vdwg.mxu0
  %v595 = vadd.f32 %v321, %v520
  %v596 = vadd.f32 %v322, %v522
  %v597 = vadd.f32 %v323, %v591
  %v598 = vadd.f32 %v324, %v593
  %v599 = vxor.u32 %v595, 2147483648
  %v600 = vmul.f32 %v599, 1.442695
  %v601 = vpow.pop %v600
  %v602 = vadd.f32 %v601, 1.0
  %v603 = vrcp.pop %v602
  %v604 = vmul.f32 1.0, %v603
  %v605 = vxor.u32 %v596, 2147483648
  %v606 = vmul.f32 %v605, 1.442695
  %v607 = vpow.pop %v606
  %v608 = vadd.f32 %v607, 1.0
  %v609 = vrcp.pop %v608
  %v610 = vmul.f32 1.0, %v609
  %v611 = vtanh.pop %v597
  %v612 = vxor.u32 %v598, 2147483648
  %v613 = vmul.f32 %v612, 1.442695
  %v614 = vpow.pop %v613
  %v615 = vadd.f32 %v614, 1.0
  %v616 = vrcp.pop %v615
  %v617 = vmul.f32 1.0, %v616
  %v618 = vmul.f32 %v610, %v320
  %v619 = vmul.f32 %v604, %v611
  %v620 = vadd.f32 %v618, %v619
  %v621 = vtanh.pop %v620
  %v622 = vmul.f32 %v617, %v621
  %v624 = vcombine.high %v622, %v622
  %v626 = vunpack.c.l.s4 1966171168
  %v627 = vunpack.c.0.s8 %v626
  %v628 = vlaneseq
  %v629 = vshrl.u32 %v628, 7
  %v630 = vsub.s32 %v627, %v629
  %v631 = vrot.slane %v622, %v630
  %v633 = vunpack.c.l.s4 1966171168
  %v634 = vunpack.c.0.s8 %v633
  %v635 = vlaneseq
  %v636 = vshrl.u32 %v635, 7
  %v637 = vsub.s32 %v634, %v636
  %v638 = vrot.slane %v624, %v637
  %v639 = vcombine.high %v631, %v631
  %v640 = vcombine.high %v638, %v638
  %v642 = vunpack.c.l.s4 1966171168
  %v643 = vunpack.c.0.s8 %v642
  %v644 = vlaneseq
  %v645 = vshrl.u32 %v644, 7
  %v646 = vsub.s32 %v643, %v645
  %v647 = vrot.slane %v631, %v646
  %v649 = vunpack.c.l.s4 1966171168
  %v650 = vunpack.c.0.s8 %v649
  %v651 = vlaneseq
  %v652 = vshrl.u32 %v651, 7
  %v653 = vsub.s32 %v650, %v652
  %v654 = vrot.slane %v638, %v653
  %v656 = vunpack.c.l.s4 1966171168
  %v657 = vunpack.c.0.s8 %v656
  %v658 = vlaneseq
  %v659 = vshrl.u32 %v658, 7
  %v660 = vsub.s32 %v657, %v659
  %v661 = vrot.slane %v639, %v660
  %v663 = vunpack.c.l.s4 1966171168
  %v664 = vunpack.c.0.s8 %v663
  %v665 = vlaneseq
  %v666 = vshrl.u32 %v665, 7
  %v667 = vsub.s32 %v664, %v666
  %v668 = vrot.slane %v640, %v667
  %v669 = vcombine.high %v647, %v647
  %v670 = vcombine.high %v654, %v654
  %v671 = vcombine.high %v661, %v661
  %v672 = vcombine.high %v668, %v668
  %v673 = vld [vmem:[%s4] sm:$0xff]
  %v674 = vld [vmem:[%s4 + $0x8] sm:$0xff]
  %v675 = vld [vmem:[%s4 + $0x10] sm:$0xff]
  %v676 = vld [vmem:[%s4 + $0x18] sm:$0xff]
  %v677 = vld [vmem:[%s4 + $0x20] sm:$0xff]
  %v678 = vld [vmem:[%s4 + $0x28] sm:$0xff]
  %v679 = vld [vmem:[%s4 + $0x30] sm:$0xff]
  %v680 = vld [vmem:[%s4 + $0x38] sm:$0xff]
  %v681 = vlaneseq
  %v682 = vshrl.u32 %v681, 7
  %v683 = vsub.s32 0, %v682
  %v684 = vrot.slane %v647, %v683
  %v685 = vlaneseq
  %v686 = vshrl.u32 %v685, 7
  %v687 = vsub.s32 0, %v686
  %v688 = vrot.slane %v661, %v687
  %v689 = vlaneseq
  %v690 = vshrl.u32 %v689, 7
  %v691 = vsub.s32 0, %v690
  %v692 = vrot.slane %v669, %v691
  %v693 = vlaneseq
  %v694 = vshrl.u32 %v693, 7
  %v695 = vsub.s32 0, %v694
  %v696 = vrot.slane %v671, %v695
  %v697 = vlaneseq
  %v698 = vshrl.u32 %v697, 7
  %v699 = vsub.s32 0, %v698
  %v700 = vrot.slane %v654, %v699
  %v701 = vlaneseq
  %v702 = vshrl.u32 %v701, 7
  %v703 = vsub.s32 0, %v702
  %v704 = vrot.slane %v668, %v703
  %v705 = vlaneseq
  %v706 = vshrl.u32 %v705, 7
  %v707 = vsub.s32 0, %v706
  %v708 = vrot.slane %v670, %v707
  %v709 = vlaneseq
  %v710 = vshrl.u32 %v709, 7
  %v711 = vsub.s32 0, %v710
  %v712 = vrot.slane %v672, %v711
  %v721 = vmul.f32 %v684, %v673
  %v722 = vmul.f32 %v688, %v674
  %v723 = vmul.f32 %v692, %v675
  %v724 = vmul.f32 %v696, %v676
  %v725 = vmul.f32 %v700, %v677
  %v726 = vmul.f32 %v704, %v678
  %v727 = vmul.f32 %v708, %v679
  %v728 = vmul.f32 %v712, %v680
  %729 = vadd.xlane.f32.xlu0 %v721
  %v730 = vpop.xlane.xlu0 %729
  %731 = vadd.xlane.f32.xlu0 %v722
  %v732 = vpop.xlane.xlu0 %731
  %733 = vadd.xlane.f32.xlu0 %v723
  %v734 = vpop.xlane.xlu0 %733
  %735 = vadd.xlane.f32.xlu0 %v724
  %v736 = vpop.xlane.xlu0 %735
  %737 = vadd.xlane.f32.xlu0 %v725
  %v738 = vpop.xlane.xlu0 %737
  %739 = vadd.xlane.f32.xlu0 %v726
  %v740 = vpop.xlane.xlu0 %739
  %741 = vadd.xlane.f32.xlu0 %v727
  %v742 = vpop.xlane.xlu0 %741
  %743 = vadd.xlane.f32.xlu0 %v728
  %v744 = vpop.xlane.xlu0 %743
  %v745 = vld [vmem:[%s5] sm:$0xff]
  %v746 = vld [vmem:[%s5 + $0x8] sm:$0xff]
  %v747 = vld [vmem:[%s5 + $0x10] sm:$0xff]
  %v748 = vld [vmem:[%s5 + $0x18] sm:$0xff]
  %v749 = vld [vmem:[%s5 + $0x20] sm:$0xff]
  %v750 = vld [vmem:[%s5 + $0x28] sm:$0xff]
  %v751 = vld [vmem:[%s5 + $0x30] sm:$0xff]
  %v752 = vld [vmem:[%s5 + $0x38] sm:$0xff]
  %v753 = vadd.f32 %v730, %v745
  %v754 = vadd.f32 %v732, %v746
  %v755 = vadd.f32 %v734, %v747
  %v756 = vadd.f32 %v736, %v748
  %v757 = vadd.f32 %v738, %v749
  %v758 = vadd.f32 %v740, %v750
  %v759 = vadd.f32 %v742, %v751
  %v760 = vadd.f32 %v744, %v752
  %vm761 = vcmask 7168
  %v762 = vsel %vm761, %v753, -inf
  %v763 = vrot.slane %v762, 4
  %v764 = vmax.f32 %v762, %v763
  %v765 = vrot.slane %v764, 2
  %v766 = vmax.f32 %v764, %v765
  %v767 = vrot.slane %v766, 1
  %v768 = vmax.f32 %v766, %v767
  %v769 = vsel %vm761, %v754, -inf
  %v770 = vrot.slane %v769, 4
  %v771 = vmax.f32 %v769, %v770
  %v772 = vrot.slane %v771, 2
  %v773 = vmax.f32 %v771, %v772
  %v774 = vrot.slane %v773, 1
  %v775 = vmax.f32 %v773, %v774
  %v776 = vsel %vm761, %v755, -inf
  %v777 = vrot.slane %v776, 4
  %v778 = vmax.f32 %v776, %v777
  %v779 = vrot.slane %v778, 2
  %v780 = vmax.f32 %v778, %v779
  %v781 = vrot.slane %v780, 1
  %v782 = vmax.f32 %v780, %v781
  %v783 = vsel %vm761, %v756, -inf
  %v784 = vrot.slane %v783, 4
  %v785 = vmax.f32 %v783, %v784
  %v786 = vrot.slane %v785, 2
  %v787 = vmax.f32 %v785, %v786
  %v788 = vrot.slane %v787, 1
  %v789 = vmax.f32 %v787, %v788
  %v790 = vsel %vm761, %v757, -inf
  %v791 = vrot.slane %v790, 4
  %v792 = vmax.f32 %v790, %v791
  %v793 = vrot.slane %v792, 2
  %v794 = vmax.f32 %v792, %v793
  %v795 = vrot.slane %v794, 1
  %v796 = vmax.f32 %v794, %v795
  %v797 = vsel %vm761, %v758, -inf
  %v798 = vrot.slane %v797, 4
  %v799 = vmax.f32 %v797, %v798
  %v800 = vrot.slane %v799, 2
  %v801 = vmax.f32 %v799, %v800
  %v802 = vrot.slane %v801, 1
  %v803 = vmax.f32 %v801, %v802
  %v804 = vsel %vm761, %v759, -inf
  %v805 = vrot.slane %v804, 4
  %v806 = vmax.f32 %v804, %v805
  %v807 = vrot.slane %v806, 2
  %v808 = vmax.f32 %v806, %v807
  %v809 = vrot.slane %v808, 1
  %v810 = vmax.f32 %v808, %v809
  %v811 = vsel %vm761, %v760, -inf
  %v812 = vrot.slane %v811, 4
  %v813 = vmax.f32 %v811, %v812
  %v814 = vrot.slane %v813, 2
  %v815 = vmax.f32 %v813, %v814
  %v816 = vrot.slane %v815, 1
  %v817 = vmax.f32 %v815, %v816
  %v818 = vsub.f32 %v753, %v768
  %v819 = vsub.f32 %v754, %v775
  %v820 = vsub.f32 %v755, %v782
  %v821 = vsub.f32 %v756, %v789
  %v822 = vsub.f32 %v757, %v796
  %v823 = vsub.f32 %v758, %v803
  %v824 = vsub.f32 %v759, %v810
  %v825 = vsub.f32 %v760, %v817
  %v826 = vmul.f32 %v818, 1.442695
  %v827 = vpow.pop %v826
  %v828 = vmul.f32 %v819, 1.442695
  %v829 = vpow.pop %v828
  %v830 = vmul.f32 %v820, 1.442695
  %v831 = vpow.pop %v830
  %v832 = vmul.f32 %v821, 1.442695
  %v833 = vpow.pop %v832
  %v834 = vmul.f32 %v822, 1.442695
  %v835 = vpow.pop %v834
  %v836 = vmul.f32 %v823, 1.442695
  %v837 = vpow.pop %v836
  %v838 = vmul.f32 %v824, 1.442695
  %v839 = vpow.pop %v838
  %v840 = vmul.f32 %v825, 1.442695
  %v841 = vpow.pop %v840
  %v842 = vsel %vm761, %v827, 0.0
  %v843 = vrot.slane %v842, 4
  %v844 = vadd.f32 %v842, %v843
  %v845 = vrot.slane %v844, 2
  %v846 = vadd.f32 %v844, %v845
  %v847 = vrot.slane %v846, 1
  %v848 = vadd.f32 %v846, %v847
  %v849 = vsel %vm761, %v829, 0.0
  %v850 = vrot.slane %v849, 4
  %v851 = vadd.f32 %v849, %v850
  %v852 = vrot.slane %v851, 2
  %v853 = vadd.f32 %v851, %v852
  %v854 = vrot.slane %v853, 1
  %v855 = vadd.f32 %v853, %v854
  %v856 = vsel %vm761, %v831, 0.0
  %v857 = vrot.slane %v856, 4
  %v858 = vadd.f32 %v856, %v857
  %v859 = vrot.slane %v858, 2
  %v860 = vadd.f32 %v858, %v859
  %v861 = vrot.slane %v860, 1
  %v862 = vadd.f32 %v860, %v861
  %v863 = vsel %vm761, %v833, 0.0
  %v864 = vrot.slane %v863, 4
  %v865 = vadd.f32 %v863, %v864
  %v866 = vrot.slane %v865, 2
  %v867 = vadd.f32 %v865, %v866
  %v868 = vrot.slane %v867, 1
  %v869 = vadd.f32 %v867, %v868
  %v870 = vsel %vm761, %v835, 0.0
  %v871 = vrot.slane %v870, 4
  %v872 = vadd.f32 %v870, %v871
  %v873 = vrot.slane %v872, 2
  %v874 = vadd.f32 %v872, %v873
  %v875 = vrot.slane %v874, 1
  %v876 = vadd.f32 %v874, %v875
  %v877 = vsel %vm761, %v837, 0.0
  %v878 = vrot.slane %v877, 4
  %v879 = vadd.f32 %v877, %v878
  %v880 = vrot.slane %v879, 2
  %v881 = vadd.f32 %v879, %v880
  %v882 = vrot.slane %v881, 1
  %v883 = vadd.f32 %v881, %v882
  %v884 = vsel %vm761, %v839, 0.0
  %v885 = vrot.slane %v884, 4
  %v886 = vadd.f32 %v884, %v885
  %v887 = vrot.slane %v886, 2
  %v888 = vadd.f32 %v886, %v887
  %v889 = vrot.slane %v888, 1
  %v890 = vadd.f32 %v888, %v889
  %v891 = vsel %vm761, %v841, 0.0
  %v892 = vrot.slane %v891, 4
  %v893 = vadd.f32 %v891, %v892
  %v894 = vrot.slane %v893, 2
  %v895 = vadd.f32 %v893, %v894
  %v896 = vrot.slane %v895, 1
  %v897 = vadd.f32 %v895, %v896
  %v898 = vrcp.pop %v848
  %v899 = vmul.f32 %v827, %v898
  %v900 = vrcp.pop %v855
  %v901 = vmul.f32 %v829, %v900
  %v902 = vrcp.pop %v862
  %v903 = vmul.f32 %v831, %v902
  %v904 = vrcp.pop %v869
  %v905 = vmul.f32 %v833, %v904
  %v906 = vrcp.pop %v876
  %v907 = vmul.f32 %v835, %v906
  %v908 = vrcp.pop %v883
  %v909 = vmul.f32 %v837, %v908
  %v910 = vrcp.pop %v890
  %v911 = vmul.f32 %v839, %v910
  %v912 = vrcp.pop %v897
  %v913 = vmul.f32 %v841, %v912
  %v914 = vld [vmem:[%s3] sm:$0xff]
  %v915 = vld [vmem:[%s3 + $0x8] sm:$0xff]
  %v916 = vld [vmem:[%s3 + $0x10] sm:$0xff]
  %v917 = vld [vmem:[%s3 + $0x18] sm:$0xff]
  %v918 = vld [vmem:[%s3 + $0x20] sm:$0xff]
  %v919 = vld [vmem:[%s3 + $0x28] sm:$0xff]
  %v920 = vld [vmem:[%s3 + $0x30] sm:$0xff]
  %v921 = vld [vmem:[%s3 + $0x38] sm:$0xff]
  %923 = vset.pattern.permute.xlu0 0
  %924 = vperm.xlu0 %923, %v899
  %v925 = vpop.permute.xlu0 %924
  %928 = vset.pattern.permute.xlu0 0
  %929 = vperm.xlu0 %928, %v901
  %v930 = vpop.permute.xlu0 %929
  %933 = vset.pattern.permute.xlu0 0
  %934 = vperm.xlu0 %933, %v903
  %v935 = vpop.permute.xlu0 %934
  %938 = vset.pattern.permute.xlu0 0
  %939 = vperm.xlu0 %938, %v905
  %v940 = vpop.permute.xlu0 %939
  %943 = vset.pattern.permute.xlu0 0
  %944 = vperm.xlu0 %943, %v907
  %v945 = vpop.permute.xlu0 %944
  %948 = vset.pattern.permute.xlu0 0
  %949 = vperm.xlu0 %948, %v909
  %v950 = vpop.permute.xlu0 %949
  %953 = vset.pattern.permute.xlu0 0
  %954 = vperm.xlu0 %953, %v911
  %v955 = vpop.permute.xlu0 %954
  %958 = vset.pattern.permute.xlu0 0
  %959 = vperm.xlu0 %958, %v913
  %v960 = vpop.permute.xlu0 %959
  %v962 = vmul.f32 %v925, %v914
  %v963 = vmul.f32 %v930, %v915
  %v964 = vmul.f32 %v935, %v916
  %v965 = vmul.f32 %v940, %v917
  %v966 = vmul.f32 %v945, %v918
  %v967 = vmul.f32 %v950, %v919
  %v968 = vmul.f32 %v955, %v920
  %v969 = vmul.f32 %v960, %v921
  %v970 = vrot.slane %v962, 4
  %v971 = vadd.f32 %v962, %v970
  %v972 = vrot.slane %v971, 2
  %v973 = vadd.f32 %v971, %v972
  %v974 = vrot.slane %v973, 1
  %v975 = vadd.f32 %v973, %v974
  %v976 = vrot.slane %v963, 4
  %v977 = vadd.f32 %v963, %v976
  %v978 = vrot.slane %v977, 2
  %v979 = vadd.f32 %v977, %v978
  %v980 = vrot.slane %v979, 1
  %v981 = vadd.f32 %v979, %v980
  %v982 = vrot.slane %v964, 4
  %v983 = vadd.f32 %v964, %v982
  %v984 = vrot.slane %v983, 2
  %v985 = vadd.f32 %v983, %v984
  %v986 = vrot.slane %v985, 1
  %v987 = vadd.f32 %v985, %v986
  %v988 = vrot.slane %v965, 4
  %v989 = vadd.f32 %v965, %v988
  %v990 = vrot.slane %v989, 2
  %v991 = vadd.f32 %v989, %v990
  %v992 = vrot.slane %v991, 1
  %v993 = vadd.f32 %v991, %v992
  %v994 = vrot.slane %v966, 4
  %v995 = vadd.f32 %v966, %v994
  %v996 = vrot.slane %v995, 2
  %v997 = vadd.f32 %v995, %v996
  %v998 = vrot.slane %v997, 1
  %v999 = vadd.f32 %v997, %v998
  %v1000 = vrot.slane %v967, 4
  %v1001 = vadd.f32 %v967, %v1000
  %v1002 = vrot.slane %v1001, 2
  %v1003 = vadd.f32 %v1001, %v1002
  %v1004 = vrot.slane %v1003, 1
  %v1005 = vadd.f32 %v1003, %v1004
  %v1006 = vrot.slane %v968, 4
  %v1007 = vadd.f32 %v968, %v1006
  %v1008 = vrot.slane %v1007, 2
  %v1009 = vadd.f32 %v1007, %v1008
  %v1010 = vrot.slane %v1009, 1
  %v1011 = vadd.f32 %v1009, %v1010
  %v1012 = vrot.slane %v969, 4
  %v1013 = vadd.f32 %v969, %v1012
  %v1014 = vrot.slane %v1013, 2
  %v1015 = vadd.f32 %v1013, %v1014
  %v1016 = vrot.slane %v1015, 1
  %v1017 = vadd.f32 %v1015, %v1016
  %vm1026 = vcmask 1041409
  %v1027 = vsel %vm1026, %v981, %v975
  %vm1028 = vcmask 1042434
  %v1029 = vsel %vm1028, %v987, %v1027
  %vm1030 = vcmask 1043459
  %v1031 = vsel %vm1030, %v993, %v1029
  %vm1032 = vcmask 1044484
  %v1033 = vsel %vm1032, %v999, %v1031
  %vm1034 = vcmask 1045509
  %v1035 = vsel %vm1034, %v1005, %v1033
  %vm1036 = vcmask 1046534
  %v1037 = vsel %vm1036, %v1011, %v1035
  %vm1038 = vcmask 1047559
  %v1039 = vsel %vm1038, %v1017, %v1037
  %v1041 = vld [vmem:[%s9] sm:$0xff]
  %v1042 = vld [vmem:[%s9 + $0x8] sm:$0xff]
  %v1043 = vld [vmem:[%s9 + $0x10] sm:$0xff]
  %v1044 = vld [vmem:[%s9 + $0x18] sm:$0xff]
  %v1045 = vld [vmem:[%s9 + $0x20] sm:$0xff]
  %v1046 = vld [vmem:[%s9 + $0x28] sm:$0xff]
  %v1047 = vld [vmem:[%s9 + $0x30] sm:$0xff]
  %v1048 = vld [vmem:[%s9 + $0x38] sm:$0xff]
  %v1049 = vld [vmem:[%s9 + $0x40] sm:$0xff]
  %v1050 = vld [vmem:[%s9 + $0x48] sm:$0xff]
  %v1051 = vld [vmem:[%s9 + $0x50] sm:$0xff]
  %v1052 = vld [vmem:[%s9 + $0x58] sm:$0xff]
  %v1053 = vld [vmem:[%s9 + $0x60] sm:$0xff]
  %v1054 = vld [vmem:[%s9 + $0x68] sm:$0xff]
  %v1055 = vld [vmem:[%s9 + $0x70] sm:$0xff]
  %v1056 = vld [vmem:[%s9 + $0x78] sm:$0xff]
  %v1057 = vld [vmem:[%s9 + $0x80] sm:$0xff]
  %v1058 = vld [vmem:[%s9 + $0x88] sm:$0xff]
  %v1059 = vld [vmem:[%s9 + $0x90] sm:$0xff]
  %v1060 = vld [vmem:[%s9 + $0x98] sm:$0xff]
  %v1061 = vld [vmem:[%s9 + $0xa0] sm:$0xff]
  %v1062 = vld [vmem:[%s9 + $0xa8] sm:$0xff]
  %v1063 = vld [vmem:[%s9 + $0xb0] sm:$0xff]
  %v1064 = vld [vmem:[%s9 + $0xb8] sm:$0xff]
  %v1065 = vld [vmem:[%s9 + $0xc0] sm:$0xff]
  %v1066 = vld [vmem:[%s9 + $0xc8] sm:$0xff]
  %v1067 = vld [vmem:[%s9 + $0xd0] sm:$0xff]
  %v1068 = vld [vmem:[%s9 + $0xd8] sm:$0xff]
  %v1069 = vld [vmem:[%s9 + $0xe0] sm:$0xff]
  %v1070 = vld [vmem:[%s9 + $0xe8] sm:$0xff]
  %v1071 = vld [vmem:[%s9 + $0xf0] sm:$0xff]
  %v1072 = vld [vmem:[%s9 + $0xf8] sm:$0xff]
  %1073 = vmatprep.subr.mxu0 0.0
  %1074 = vmatpush1.msra.mxu0 %v1056
  %1075 = vmatprep.subr.mxu0 0.0
  %1076 = vmatpush1.msra.mxu0 %v1055
  %1077 = vmatprep.subr.mxu0 0.0
  %1078 = vmatpush1.msra.mxu0 %v1054
  %1079 = vmatprep.subr.mxu0 0.0
  %1080 = vmatpush1.msra.mxu0 %v1053
  %1081 = vmatprep.subr.mxu0 0.0
  %1082 = vmatpush1.msra.mxu0 %v1052
  %1083 = vmatprep.subr.mxu0 0.0
  %1084 = vmatpush1.msra.mxu0 %v1051
  %1085 = vmatprep.subr.mxu0 0.0
  %1086 = vmatpush1.msra.mxu0 %v1050
  %1087 = vmatprep.subr.mxu0 0.0
  %1088 = vmatpush1.msra.mxu0 %v1049
  %1089 = vmatprep.subr.mxu0 0.0
  %1090 = vmatpush1.msra.mxu0 %v1048
  %1091 = vmatprep.subr.mxu0 0.0
  %1092 = vmatpush1.msra.mxu0 %v1047
  %1093 = vmatprep.subr.mxu0 0.0
  %1094 = vmatpush1.msra.mxu0 %v1046
  %1095 = vmatprep.subr.mxu0 0.0
  %1096 = vmatpush1.msra.mxu0 %v1045
  %1097 = vmatprep.subr.mxu0 0.0
  %1098 = vmatpush1.msra.mxu0 %v1044
  %1099 = vmatprep.subr.mxu0 0.0
  %1100 = vmatpush1.msra.mxu0 %v1043
  %1101 = vmatprep.subr.mxu0 0.0
  %1102 = vmatpush1.msra.mxu0 %v1042
  %1103 = vmatprep.subr.mxu0 0.0
  %1104 = vmatpush1.msra.mxu0 %v1041
  %1105 = vmatprep.subr.mxu0 0.0
  %1106 = vmatpush2.msra.mxu0 %v1072
  %1107 = vmatprep.subr.mxu0 0.0
  %1108 = vmatpush2.msra.mxu0 %v1071
  %1109 = vmatprep.subr.mxu0 0.0
  %1110 = vmatpush2.msra.mxu0 %v1070
  %1111 = vmatprep.subr.mxu0 0.0
  %1112 = vmatpush2.msra.mxu0 %v1069
  %1113 = vmatprep.subr.mxu0 0.0
  %1114 = vmatpush2.msra.mxu0 %v1068
  %1115 = vmatprep.subr.mxu0 0.0
  %1116 = vmatpush2.msra.mxu0 %v1067
  %1117 = vmatprep.subr.mxu0 0.0
  %1118 = vmatpush2.msra.mxu0 %v1066
  %1119 = vmatprep.subr.mxu0 0.0
  %1120 = vmatpush2.msra.mxu0 %v1065
  %1121 = vmatprep.subr.mxu0 0.0
  %1122 = vmatpush2.msra.mxu0 %v1064
  %1123 = vmatprep.subr.mxu0 0.0
  %1124 = vmatpush2.msra.mxu0 %v1063
  %1125 = vmatprep.subr.mxu0 0.0
  %1126 = vmatpush2.msra.mxu0 %v1062
  %1127 = vmatprep.subr.mxu0 0.0
  %1128 = vmatpush2.msra.mxu0 %v1061
  %1129 = vmatprep.subr.mxu0 0.0
  %1130 = vmatpush2.msra.mxu0 %v1060
  %1131 = vmatprep.subr.mxu0 0.0
  %1132 = vmatpush2.msra.mxu0 %v1059
  %1133 = vmatprep.subr.mxu0 0.0
  %1134 = vmatpush2.msra.mxu0 %v1058
  %1135 = vmatprep.subr.mxu0 0.0
  %1136 = vmatpush2.msra.mxu0 %v1057
  %1137 = vmatprep.mubr.f32.mxu0 %v622
  %1138 = vmatmul.mubr.f32.gmra.mxu0 %v1039
  %v1139 = vpop.f32.mrf.mxu0
  %v1140 = vadd.f32 0.0, %v1139
  %v1141 = vpop.f32.mrf.mxu0
  %1142 = vdwg.mxu0
  %v1143 = vtanh.pop %v1140
  %v1145 = vcombine.high %v1143, %v1143
  %v1147 = vunpack.c.l.s4 1966171168
  %v1148 = vunpack.c.0.s8 %v1147
  %v1149 = vlaneseq
  %v1150 = vshrl.u32 %v1149, 7
  %v1151 = vsub.s32 %v1148, %v1150
  %v1152 = vrot.slane %v1143, %v1151
  %v1154 = vunpack.c.l.s4 1966171168
  %v1155 = vunpack.c.0.s8 %v1154
  %v1156 = vlaneseq
  %v1157 = vshrl.u32 %v1156, 7
  %v1158 = vsub.s32 %v1155, %v1157
  %v1159 = vrot.slane %v1145, %v1158
  %v1160 = vcombine.high %v1152, %v1152
  %v1161 = vcombine.high %v1159, %v1159
  %v1163 = vunpack.c.l.s4 1966171168
  %v1164 = vunpack.c.0.s8 %v1163
  %v1165 = vlaneseq
  %v1166 = vshrl.u32 %v1165, 7
  %v1167 = vsub.s32 %v1164, %v1166
  %v1168 = vrot.slane %v1152, %v1167
  %v1170 = vunpack.c.l.s4 1966171168
  %v1171 = vunpack.c.0.s8 %v1170
  %v1172 = vlaneseq
  %v1173 = vshrl.u32 %v1172, 7
  %v1174 = vsub.s32 %v1171, %v1173
  %v1175 = vrot.slane %v1159, %v1174
  %v1177 = vunpack.c.l.s4 1966171168
  %v1178 = vunpack.c.0.s8 %v1177
  %v1179 = vlaneseq
  %v1180 = vshrl.u32 %v1179, 7
  %v1181 = vsub.s32 %v1178, %v1180
  %v1182 = vrot.slane %v1160, %v1181
  %v1184 = vunpack.c.l.s4 1966171168
  %v1185 = vunpack.c.0.s8 %v1184
  %v1186 = vlaneseq
  %v1187 = vshrl.u32 %v1186, 7
  %v1188 = vsub.s32 %v1185, %v1187
  %v1189 = vrot.slane %v1161, %v1188
  %v1190 = vcombine.high %v1168, %v1168
  %v1191 = vcombine.high %v1175, %v1175
  %v1192 = vcombine.high %v1182, %v1182
  %v1193 = vcombine.high %v1189, %v1189
  %1202 = vst [vmem:[%s10] sm:$0x1] %v1168
  %1203 = vst [vmem:[%s10 + $0x8] sm:$0x1] %v1182
  %1204 = vst [vmem:[%s10 + $0x10] sm:$0x1] %v1190
  %1205 = vst [vmem:[%s10 + $0x18] sm:$0x1] %v1192
  %1206 = vst [vmem:[%s10 + $0x20] sm:$0x1] %v1175
  %1207 = vst [vmem:[%s10 + $0x28] sm:$0x1] %v1189
  %1208 = vst [vmem:[%s10 + $0x30] sm:$0x1] %v1191
  %1209 = vst [vmem:[%s10 + $0x38] sm:$0x1] %v1193
  %v1210 = vld [vmem:[#allocation2 + $0x20] sm:$0xff]
  %v1211 = vld [vmem:[#allocation2 + $0x28] sm:$0xff]
  %v1212 = vld [vmem:[#allocation2 + $0x30] sm:$0xff]
  %v1213 = vld [vmem:[#allocation2 + $0x38] sm:$0xff]
  %v1214 = vld [vmem:[%s8] sm:$0xff]
  %v1215 = vld [vmem:[%s8 + $0x8] sm:$0xff]
  %v1216 = vld [vmem:[%s8 + $0x10] sm:$0xff]
  %v1217 = vld [vmem:[%s8 + $0x18] sm:$0xff]
  %v1218 = vld [vmem:[%s8 + $0x20] sm:$0xff]
  %v1219 = vld [vmem:[%s8 + $0x28] sm:$0xff]
  %v1220 = vld [vmem:[%s8 + $0x30] sm:$0xff]
  %v1221 = vld [vmem:[%s8 + $0x38] sm:$0xff]
  %v1222 = vld [vmem:[%s8 + $0x40] sm:$0xff]
  %v1223 = vld [vmem:[%s8 + $0x48] sm:$0xff]
  %v1224 = vld [vmem:[%s8 + $0x50] sm:$0xff]
  %v1225 = vld [vmem:[%s8 + $0x58] sm:$0xff]
  %v1226 = vld [vmem:[%s8 + $0x60] sm:$0xff]
  %v1227 = vld [vmem:[%s8 + $0x68] sm:$0xff]
  %v1228 = vld [vmem:[%s8 + $0x70] sm:$0xff]
  %v1229 = vld [vmem:[%s8 + $0x78] sm:$0xff]
  %v1230 = vld [vmem:[%s8 + $0x80] sm:$0xff]
  %v1231 = vld [vmem:[%s8 + $0x88] sm:$0xff]
  %v1232 = vld [vmem:[%s8 + $0x90] sm:$0xff]
  %v1233 = vld [vmem:[%s8 + $0x98] sm:$0xff]
  %v1234 = vld [vmem:[%s8 + $0xa0] sm:$0xff]
  %v1235 = vld [vmem:[%s8 + $0xa8] sm:$0xff]
  %v1236 = vld [vmem:[%s8 + $0xb0] sm:$0xff]
  %v1237 = vld [vmem:[%s8 + $0xb8] sm:$0xff]
  %v1238 = vld [vmem:[%s8 + $0xc0] sm:$0xff]
  %v1239 = vld [vmem:[%s8 + $0xc8] sm:$0xff]
  %v1240 = vld [vmem:[%s8 + $0xd0] sm:$0xff]
  %v1241 = vld [vmem:[%s8 + $0xd8] sm:$0xff]
  %v1242 = vld [vmem:[%s8 + $0xe0] sm:$0xff]
  %v1243 = vld [vmem:[%s8 + $0xe8] sm:$0xff]
  %v1244 = vld [vmem:[%s8 + $0xf0] sm:$0xff]
  %v1245 = vld [vmem:[%s8 + $0xf8] sm:$0xff]
  %v1246 = vld [vmem:[%s8 + $0x100] sm:$0xff]
  %v1247 = vld [vmem:[%s8 + $0x108] sm:$0xff]
  %v1248 = vld [vmem:[%s8 + $0x110] sm:$0xff]
  %v1249 = vld [vmem:[%s8 + $0x118] sm:$0xff]
  %v1250 = vld [vmem:[%s8 + $0x120] sm:$0xff]
  %v1251 = vld [vmem:[%s8 + $0x128] sm:$0xff]
  %v1252 = vld [vmem:[%s8 + $0x130] sm:$0xff]
  %v1253 = vld [vmem:[%s8 + $0x138] sm:$0xff]
  %v1254 = vld [vmem:[%s8 + $0x140] sm:$0xff]
  %v1255 = vld [vmem:[%s8 + $0x148] sm:$0xff]
  %v1256 = vld [vmem:[%s8 + $0x150] sm:$0xff]
  %v1257 = vld [vmem:[%s8 + $0x158] sm:$0xff]
  %v1258 = vld [vmem:[%s8 + $0x160] sm:$0xff]
  %v1259 = vld [vmem:[%s8 + $0x168] sm:$0xff]
  %v1260 = vld [vmem:[%s8 + $0x170] sm:$0xff]
  %v1261 = vld [vmem:[%s8 + $0x178] sm:$0xff]
  %v1262 = vld [vmem:[%s8 + $0x180] sm:$0xff]
  %v1263 = vld [vmem:[%s8 + $0x188] sm:$0xff]
  %v1264 = vld [vmem:[%s8 + $0x190] sm:$0xff]
  %v1265 = vld [vmem:[%s8 + $0x198] sm:$0xff]
  %v1266 = vld [vmem:[%s8 + $0x1a0] sm:$0xff]
  %v1267 = vld [vmem:[%s8 + $0x1a8] sm:$0xff]
  %v1268 = vld [vmem:[%s8 + $0x1b0] sm:$0xff]
  %v1269 = vld [vmem:[%s8 + $0x1b8] sm:$0xff]
  %v1270 = vld [vmem:[%s8 + $0x1c0] sm:$0xff]
  %v1271 = vld [vmem:[%s8 + $0x1c8] sm:$0xff]
  %v1272 = vld [vmem:[%s8 + $0x1d0] sm:$0xff]
  %v1273 = vld [vmem:[%s8 + $0x1d8] sm:$0xff]
  %v1274 = vld [vmem:[%s8 + $0x1e0] sm:$0xff]
  %v1275 = vld [vmem:[%s8 + $0x1e8] sm:$0xff]
  %v1276 = vld [vmem:[%s8 + $0x1f0] sm:$0xff]
  %v1277 = vld [vmem:[%s8 + $0x1f8] sm:$0xff]
  %v1278 = vld [vmem:[%s8 + $0x200] sm:$0xff]
  %v1279 = vld [vmem:[%s8 + $0x208] sm:$0xff]
  %v1280 = vld [vmem:[%s8 + $0x210] sm:$0xff]
  %v1281 = vld [vmem:[%s8 + $0x218] sm:$0xff]
  %v1282 = vld [vmem:[%s8 + $0x220] sm:$0xff]
  %v1283 = vld [vmem:[%s8 + $0x228] sm:$0xff]
  %v1284 = vld [vmem:[%s8 + $0x230] sm:$0xff]
  %v1285 = vld [vmem:[%s8 + $0x238] sm:$0xff]
  %v1286 = vld [vmem:[%s8 + $0x240] sm:$0xff]
  %v1287 = vld [vmem:[%s8 + $0x248] sm:$0xff]
  %v1288 = vld [vmem:[%s8 + $0x250] sm:$0xff]
  %v1289 = vld [vmem:[%s8 + $0x258] sm:$0xff]
  %v1290 = vld [vmem:[%s8 + $0x260] sm:$0xff]
  %v1291 = vld [vmem:[%s8 + $0x268] sm:$0xff]
  %v1292 = vld [vmem:[%s8 + $0x270] sm:$0xff]
  %v1293 = vld [vmem:[%s8 + $0x278] sm:$0xff]
  %v1294 = vld [vmem:[%s8 + $0x280] sm:$0xff]
  %v1295 = vld [vmem:[%s8 + $0x288] sm:$0xff]
  %v1296 = vld [vmem:[%s8 + $0x290] sm:$0xff]
  %v1297 = vld [vmem:[%s8 + $0x298] sm:$0xff]
  %v1298 = vld [vmem:[%s8 + $0x2a0] sm:$0xff]
  %v1299 = vld [vmem:[%s8 + $0x2a8] sm:$0xff]
  %v1300 = vld [vmem:[%s8 + $0x2b0] sm:$0xff]
  %v1301 = vld [vmem:[%s8 + $0x2b8] sm:$0xff]
  %v1302 = vld [vmem:[%s8 + $0x2c0] sm:$0xff]
  %v1303 = vld [vmem:[%s8 + $0x2c8] sm:$0xff]
  %v1304 = vld [vmem:[%s8 + $0x2d0] sm:$0xff]
  %v1305 = vld [vmem:[%s8 + $0x2d8] sm:$0xff]
  %v1306 = vld [vmem:[%s8 + $0x2e0] sm:$0xff]
  %v1307 = vld [vmem:[%s8 + $0x2e8] sm:$0xff]
  %v1308 = vld [vmem:[%s8 + $0x2f0] sm:$0xff]
  %v1309 = vld [vmem:[%s8 + $0x2f8] sm:$0xff]
  %v1310 = vld [vmem:[%s8 + $0x300] sm:$0xff]
  %v1311 = vld [vmem:[%s8 + $0x308] sm:$0xff]
  %v1312 = vld [vmem:[%s8 + $0x310] sm:$0xff]
  %v1313 = vld [vmem:[%s8 + $0x318] sm:$0xff]
  %v1314 = vld [vmem:[%s8 + $0x320] sm:$0xff]
  %v1315 = vld [vmem:[%s8 + $0x328] sm:$0xff]
  %v1316 = vld [vmem:[%s8 + $0x330] sm:$0xff]
  %v1317 = vld [vmem:[%s8 + $0x338] sm:$0xff]
  %v1318 = vld [vmem:[%s8 + $0x340] sm:$0xff]
  %v1319 = vld [vmem:[%s8 + $0x348] sm:$0xff]
  %v1320 = vld [vmem:[%s8 + $0x350] sm:$0xff]
  %v1321 = vld [vmem:[%s8 + $0x358] sm:$0xff]
  %v1322 = vld [vmem:[%s8 + $0x360] sm:$0xff]
  %v1323 = vld [vmem:[%s8 + $0x368] sm:$0xff]
  %v1324 = vld [vmem:[%s8 + $0x370] sm:$0xff]
  %v1325 = vld [vmem:[%s8 + $0x378] sm:$0xff]
  %v1326 = vld [vmem:[%s8 + $0x380] sm:$0xff]
  %v1327 = vld [vmem:[%s8 + $0x388] sm:$0xff]
  %v1328 = vld [vmem:[%s8 + $0x390] sm:$0xff]
  %v1329 = vld [vmem:[%s8 + $0x398] sm:$0xff]
  %v1330 = vld [vmem:[%s8 + $0x3a0] sm:$0xff]
  %v1331 = vld [vmem:[%s8 + $0x3a8] sm:$0xff]
  %v1332 = vld [vmem:[%s8 + $0x3b0] sm:$0xff]
  %v1333 = vld [vmem:[%s8 + $0x3b8] sm:$0xff]
  %v1334 = vld [vmem:[%s8 + $0x3c0] sm:$0xff]
  %v1335 = vld [vmem:[%s8 + $0x3c8] sm:$0xff]
  %v1336 = vld [vmem:[%s8 + $0x3d0] sm:$0xff]
  %v1337 = vld [vmem:[%s8 + $0x3d8] sm:$0xff]
  %v1338 = vld [vmem:[%s8 + $0x3e0] sm:$0xff]
  %v1339 = vld [vmem:[%s8 + $0x3e8] sm:$0xff]
  %v1340 = vld [vmem:[%s8 + $0x3f0] sm:$0xff]
  %v1341 = vld [vmem:[%s8 + $0x3f8] sm:$0xff]
  %1342 = vmatprep.subr.mxu0 %v1275
  %1343 = vmatpush1.msra.mxu0 %v1274
  %1344 = vmatprep.subr.mxu0 %v1271
  %1345 = vmatpush1.msra.mxu0 %v1270
  %1346 = vmatprep.subr.mxu0 %v1267
  %1347 = vmatpush1.msra.mxu0 %v1266
  %1348 = vmatprep.subr.mxu0 %v1263
  %1349 = vmatpush1.msra.mxu0 %v1262
  %1350 = vmatprep.subr.mxu0 %v1259
  %1351 = vmatpush1.msra.mxu0 %v1258
  %1352 = vmatprep.subr.mxu0 %v1255
  %1353 = vmatpush1.msra.mxu0 %v1254
  %1354 = vmatprep.subr.mxu0 %v1251
  %1355 = vmatpush1.msra.mxu0 %v1250
  %1356 = vmatprep.subr.mxu0 %v1247
  %1357 = vmatpush1.msra.mxu0 %v1246
  %1358 = vmatprep.subr.mxu0 %v1243
  %1359 = vmatpush1.msra.mxu0 %v1242
  %1360 = vmatprep.subr.mxu0 %v1239
  %1361 = vmatpush1.msra.mxu0 %v1238
  %1362 = vmatprep.subr.mxu0 %v1235
  %1363 = vmatpush1.msra.mxu0 %v1234
  %1364 = vmatprep.subr.mxu0 %v1231
  %1365 = vmatpush1.msra.mxu0 %v1230
  %1366 = vmatprep.subr.mxu0 %v1227
  %1367 = vmatpush1.msra.mxu0 %v1226
  %1368 = vmatprep.subr.mxu0 %v1223
  %1369 = vmatpush1.msra.mxu0 %v1222
  %1370 = vmatprep.subr.mxu0 %v1219
  %1371 = vmatpush1.msra.mxu0 %v1218
  %1372 = vmatprep.subr.mxu0 %v1215
  %1373 = vmatpush1.msra.mxu0 %v1214
  %1374 = vmatprep.subr.mxu0 %v1339
  %1375 = vmatpush2.msra.mxu0 %v1338
  %1376 = vmatprep.subr.mxu0 %v1335
  %1377 = vmatpush2.msra.mxu0 %v1334
  %1378 = vmatprep.subr.mxu0 %v1331
  %1379 = vmatpush2.msra.mxu0 %v1330
  %1380 = vmatprep.subr.mxu0 %v1327
  %1381 = vmatpush2.msra.mxu0 %v1326
  %1382 = vmatprep.subr.mxu0 %v1323
  %1383 = vmatpush2.msra.mxu0 %v1322
  %1384 = vmatprep.subr.mxu0 %v1319
  %1385 = vmatpush2.msra.mxu0 %v1318
  %1386 = vmatprep.subr.mxu0 %v1315
  %1387 = vmatpush2.msra.mxu0 %v1314
  %1388 = vmatprep.subr.mxu0 %v1311
  %1389 = vmatpush2.msra.mxu0 %v1310
  %1390 = vmatprep.subr.mxu0 %v1307
  %1391 = vmatpush2.msra.mxu0 %v1306
  %1392 = vmatprep.subr.mxu0 %v1303
  %1393 = vmatpush2.msra.mxu0 %v1302
  %1394 = vmatprep.subr.mxu0 %v1299
  %1395 = vmatpush2.msra.mxu0 %v1298
  %1396 = vmatprep.subr.mxu0 %v1295
  %1397 = vmatpush2.msra.mxu0 %v1294
  %1398 = vmatprep.subr.mxu0 %v1291
  %1399 = vmatpush2.msra.mxu0 %v1290
  %1400 = vmatprep.subr.mxu0 %v1287
  %1401 = vmatpush2.msra.mxu0 %v1286
  %1402 = vmatprep.subr.mxu0 %v1283
  %1403 = vmatpush2.msra.mxu0 %v1282
  %1404 = vmatprep.subr.mxu0 %v1279
  %1405 = vmatpush2.msra.mxu0 %v1278
  %1406 = vmatprep.mubr.f32.mxu0 %v622
  %1407 = vmatmul.mubr.f32.gmra.mxu0 %v1143
  %v1408 = vpop.f32.mrf.mxu0
  %v1409 = vadd.f32 0.0, %v1408
  %v1410 = vpop.f32.mrf.mxu0
  %v1411 = vadd.f32 0.0, %v1410
  %1412 = vdwg.mxu0
  %1413 = vmatprep.subr.mxu0 %v1277
  %1414 = vmatpush1.msra.mxu0 %v1276
  %1415 = vmatprep.subr.mxu0 %v1273
  %1416 = vmatpush1.msra.mxu0 %v1272
  %1417 = vmatprep.subr.mxu0 %v1269
  %1418 = vmatpush1.msra.mxu0 %v1268
  %1419 = vmatprep.subr.mxu0 %v1265
  %1420 = vmatpush1.msra.mxu0 %v1264
  %1421 = vmatprep.subr.mxu0 %v1261
  %1422 = vmatpush1.msra.mxu0 %v1260
  %1423 = vmatprep.subr.mxu0 %v1257
  %1424 = vmatpush1.msra.mxu0 %v1256
  %1425 = vmatprep.subr.mxu0 %v1253
  %1426 = vmatpush1.msra.mxu0 %v1252
  %1427 = vmatprep.subr.mxu0 %v1249
  %1428 = vmatpush1.msra.mxu0 %v1248
  %1429 = vmatprep.subr.mxu0 %v1245
  %1430 = vmatpush1.msra.mxu0 %v1244
  %1431 = vmatprep.subr.mxu0 %v1241
  %1432 = vmatpush1.msra.mxu0 %v1240
  %1433 = vmatprep.subr.mxu0 %v1237
  %1434 = vmatpush1.msra.mxu0 %v1236
  %1435 = vmatprep.subr.mxu0 %v1233
  %1436 = vmatpush1.msra.mxu0 %v1232
  %1437 = vmatprep.subr.mxu0 %v1229
  %1438 = vmatpush1.msra.mxu0 %v1228
  %1439 = vmatprep.subr.mxu0 %v1225
  %1440 = vmatpush1.msra.mxu0 %v1224
  %1441 = vmatprep.subr.mxu0 %v1221
  %1442 = vmatpush1.msra.mxu0 %v1220
  %1443 = vmatprep.subr.mxu0 %v1217
  %1444 = vmatpush1.msra.mxu0 %v1216
  %1445 = vmatprep.subr.mxu0 %v1341
  %1446 = vmatpush2.msra.mxu0 %v1340
  %1447 = vmatprep.subr.mxu0 %v1337
  %1448 = vmatpush2.msra.mxu0 %v1336
  %1449 = vmatprep.subr.mxu0 %v1333
  %1450 = vmatpush2.msra.mxu0 %v1332
  %1451 = vmatprep.subr.mxu0 %v1329
  %1452 = vmatpush2.msra.mxu0 %v1328
  %1453 = vmatprep.subr.mxu0 %v1325
  %1454 = vmatpush2.msra.mxu0 %v1324
  %1455 = vmatprep.subr.mxu0 %v1321
  %1456 = vmatpush2.msra.mxu0 %v1320
  %1457 = vmatprep.subr.mxu0 %v1317
  %1458 = vmatpush2.msra.mxu0 %v1316
  %1459 = vmatprep.subr.mxu0 %v1313
  %1460 = vmatpush2.msra.mxu0 %v1312
  %1461 = vmatprep.subr.mxu0 %v1309
  %1462 = vmatpush2.msra.mxu0 %v1308
  %1463 = vmatprep.subr.mxu0 %v1305
  %1464 = vmatpush2.msra.mxu0 %v1304
  %1465 = vmatprep.subr.mxu0 %v1301
  %1466 = vmatpush2.msra.mxu0 %v1300
  %1467 = vmatprep.subr.mxu0 %v1297
  %1468 = vmatpush2.msra.mxu0 %v1296
  %1469 = vmatprep.subr.mxu0 %v1293
  %1470 = vmatpush2.msra.mxu0 %v1292
  %1471 = vmatprep.subr.mxu0 %v1289
  %1472 = vmatpush2.msra.mxu0 %v1288
  %1473 = vmatprep.subr.mxu0 %v1285
  %1474 = vmatpush2.msra.mxu0 %v1284
  %1475 = vmatprep.subr.mxu0 %v1281
  %1476 = vmatpush2.msra.mxu0 %v1280
  %1477 = vmatprep.mubr.f32.mxu0 %v622
  %1478 = vmatmul.mubr.f32.gmra.mxu0 %v1143
  %v1479 = vpop.f32.mrf.mxu0
  %v1480 = vadd.f32 0.0, %v1479
  %v1481 = vpop.f32.mrf.mxu0
  %v1482 = vadd.f32 0.0, %v1481
  %1483 = vdwg.mxu0
  %v1484 = vadd.f32 %v1210, %v1409
  %v1485 = vadd.f32 %v1211, %v1411
  %v1486 = vadd.f32 %v1212, %v1480
  %v1487 = vadd.f32 %v1213, %v1482
  %v1488 = vxor.u32 %v1484, 2147483648
  %v1489 = vmul.f32 %v1488, 1.442695
  %v1490 = vpow.pop %v1489
  %v1491 = vadd.f32 %v1490, 1.0
  %v1492 = vrcp.pop %v1491
  %v1493 = vmul.f32 1.0, %v1492
  %v1494 = vxor.u32 %v1485, 2147483648
  %v1495 = vmul.f32 %v1494, 1.442695
  %v1496 = vpow.pop %v1495
  %v1497 = vadd.f32 %v1496, 1.0
  %v1498 = vrcp.pop %v1497
  %v1499 = vmul.f32 1.0, %v1498
  %v1500 = vtanh.pop %v1486
  %v1501 = vxor.u32 %v1487, 2147483648
  %v1502 = vmul.f32 %v1501, 1.442695
  %v1503 = vpow.pop %v1502
  %v1504 = vadd.f32 %v1503, 1.0
  %v1505 = vrcp.pop %v1504
  %v1506 = vmul.f32 1.0, %v1505
  %v1507 = vmul.f32 %v1499, %v620
  %v1508 = vmul.f32 %v1493, %v1500
  %v1509 = vadd.f32 %v1507, %v1508
  %v1510 = vtanh.pop %v1509
  %v1511 = vmul.f32 %v1506, %v1510
  %v1513 = vcombine.high %v1511, %v1511
  %v1515 = vunpack.c.l.s4 1966171168
  %v1516 = vunpack.c.0.s8 %v1515
  %v1517 = vlaneseq
  %v1518 = vshrl.u32 %v1517, 7
  %v1519 = vsub.s32 %v1516, %v1518
  %v1520 = vrot.slane %v1511, %v1519
  %v1522 = vunpack.c.l.s4 1966171168
  %v1523 = vunpack.c.0.s8 %v1522
  %v1524 = vlaneseq
  %v1525 = vshrl.u32 %v1524, 7
  %v1526 = vsub.s32 %v1523, %v1525
  %v1527 = vrot.slane %v1513, %v1526
  %v1528 = vcombine.high %v1520, %v1520
  %v1529 = vcombine.high %v1527, %v1527
  %v1531 = vunpack.c.l.s4 1966171168
  %v1532 = vunpack.c.0.s8 %v1531
  %v1533 = vlaneseq
  %v1534 = vshrl.u32 %v1533, 7
  %v1535 = vsub.s32 %v1532, %v1534
  %v1536 = vrot.slane %v1520, %v1535
  %v1538 = vunpack.c.l.s4 1966171168
  %v1539 = vunpack.c.0.s8 %v1538
  %v1540 = vlaneseq
  %v1541 = vshrl.u32 %v1540, 7
  %v1542 = vsub.s32 %v1539, %v1541
  %v1543 = vrot.slane %v1527, %v1542
  %v1545 = vunpack.c.l.s4 1966171168
  %v1546 = vunpack.c.0.s8 %v1545
  %v1547 = vlaneseq
  %v1548 = vshrl.u32 %v1547, 7
  %v1549 = vsub.s32 %v1546, %v1548
  %v1550 = vrot.slane %v1528, %v1549
  %v1552 = vunpack.c.l.s4 1966171168
  %v1553 = vunpack.c.0.s8 %v1552
  %v1554 = vlaneseq
  %v1555 = vshrl.u32 %v1554, 7
  %v1556 = vsub.s32 %v1553, %v1555
  %v1557 = vrot.slane %v1529, %v1556
  %v1558 = vcombine.high %v1536, %v1536
  %v1559 = vcombine.high %v1543, %v1543
  %v1560 = vcombine.high %v1550, %v1550
  %v1561 = vcombine.high %v1557, %v1557
  %v1562 = vld [vmem:[%s4] sm:$0xff]
  %v1563 = vld [vmem:[%s4 + $0x8] sm:$0xff]
  %v1564 = vld [vmem:[%s4 + $0x10] sm:$0xff]
  %v1565 = vld [vmem:[%s4 + $0x18] sm:$0xff]
  %v1566 = vld [vmem:[%s4 + $0x20] sm:$0xff]
  %v1567 = vld [vmem:[%s4 + $0x28] sm:$0xff]
  %v1568 = vld [vmem:[%s4 + $0x30] sm:$0xff]
  %v1569 = vld [vmem:[%s4 + $0x38] sm:$0xff]
  %v1570 = vlaneseq
  %v1571 = vshrl.u32 %v1570, 7
  %v1572 = vsub.s32 0, %v1571
  %v1573 = vrot.slane %v1536, %v1572
  %v1574 = vlaneseq
  %v1575 = vshrl.u32 %v1574, 7
  %v1576 = vsub.s32 0, %v1575
  %v1577 = vrot.slane %v1550, %v1576
  %v1578 = vlaneseq
  %v1579 = vshrl.u32 %v1578, 7
  %v1580 = vsub.s32 0, %v1579
  %v1581 = vrot.slane %v1558, %v1580
  %v1582 = vlaneseq
  %v1583 = vshrl.u32 %v1582, 7
  %v1584 = vsub.s32 0, %v1583
  %v1585 = vrot.slane %v1560, %v1584
  %v1586 = vlaneseq
  %v1587 = vshrl.u32 %v1586, 7
  %v1588 = vsub.s32 0, %v1587
  %v1589 = vrot.slane %v1543, %v1588
  %v1590 = vlaneseq
  %v1591 = vshrl.u32 %v1590, 7
  %v1592 = vsub.s32 0, %v1591
  %v1593 = vrot.slane %v1557, %v1592
  %v1594 = vlaneseq
  %v1595 = vshrl.u32 %v1594, 7
  %v1596 = vsub.s32 0, %v1595
  %v1597 = vrot.slane %v1559, %v1596
  %v1598 = vlaneseq
  %v1599 = vshrl.u32 %v1598, 7
  %v1600 = vsub.s32 0, %v1599
  %v1601 = vrot.slane %v1561, %v1600
  %v1610 = vmul.f32 %v1573, %v1562
  %v1611 = vmul.f32 %v1577, %v1563
  %v1612 = vmul.f32 %v1581, %v1564
  %v1613 = vmul.f32 %v1585, %v1565
  %v1614 = vmul.f32 %v1589, %v1566
  %v1615 = vmul.f32 %v1593, %v1567
  %v1616 = vmul.f32 %v1597, %v1568
  %v1617 = vmul.f32 %v1601, %v1569
  %1618 = vadd.xlane.f32.xlu0 %v1610
  %v1619 = vpop.xlane.xlu0 %1618
  %1620 = vadd.xlane.f32.xlu0 %v1611
  %v1621 = vpop.xlane.xlu0 %1620
  %1622 = vadd.xlane.f32.xlu0 %v1612
  %v1623 = vpop.xlane.xlu0 %1622
  %1624 = vadd.xlane.f32.xlu0 %v1613
  %v1625 = vpop.xlane.xlu0 %1624
  %1626 = vadd.xlane.f32.xlu0 %v1614
  %v1627 = vpop.xlane.xlu0 %1626
  %1628 = vadd.xlane.f32.xlu0 %v1615
  %v1629 = vpop.xlane.xlu0 %1628
  %1630 = vadd.xlane.f32.xlu0 %v1616
  %v1631 = vpop.xlane.xlu0 %1630
  %1632 = vadd.xlane.f32.xlu0 %v1617
  %v1633 = vpop.xlane.xlu0 %1632
  %v1634 = vld [vmem:[%s5] sm:$0xff]
  %v1635 = vld [vmem:[%s5 + $0x8] sm:$0xff]
  %v1636 = vld [vmem:[%s5 + $0x10] sm:$0xff]
  %v1637 = vld [vmem:[%s5 + $0x18] sm:$0xff]
  %v1638 = vld [vmem:[%s5 + $0x20] sm:$0xff]
  %v1639 = vld [vmem:[%s5 + $0x28] sm:$0xff]
  %v1640 = vld [vmem:[%s5 + $0x30] sm:$0xff]
  %v1641 = vld [vmem:[%s5 + $0x38] sm:$0xff]
  %v1642 = vadd.f32 %v1619, %v1634
  %v1643 = vadd.f32 %v1621, %v1635
  %v1644 = vadd.f32 %v1623, %v1636
  %v1645 = vadd.f32 %v1625, %v1637
  %v1646 = vadd.f32 %v1627, %v1638
  %v1647 = vadd.f32 %v1629, %v1639
  %v1648 = vadd.f32 %v1631, %v1640
  %v1649 = vadd.f32 %v1633, %v1641
  %v1650 = vsel %vm761, %v1642, -inf
  %v1651 = vrot.slane %v1650, 4
  %v1652 = vmax.f32 %v1650, %v1651
  %v1653 = vrot.slane %v1652, 2
  %v1654 = vmax.f32 %v1652, %v1653
  %v1655 = vrot.slane %v1654, 1
  %v1656 = vmax.f32 %v1654, %v1655
  %v1657 = vsel %vm761, %v1643, -inf
  %v1658 = vrot.slane %v1657, 4
  %v1659 = vmax.f32 %v1657, %v1658
  %v1660 = vrot.slane %v1659, 2
  %v1661 = vmax.f32 %v1659, %v1660
  %v1662 = vrot.slane %v1661, 1
  %v1663 = vmax.f32 %v1661, %v1662
  %v1664 = vsel %vm761, %v1644, -inf
  %v1665 = vrot.slane %v1664, 4
  %v1666 = vmax.f32 %v1664, %v1665
  %v1667 = vrot.slane %v1666, 2
  %v1668 = vmax.f32 %v1666, %v1667
  %v1669 = vrot.slane %v1668, 1
  %v1670 = vmax.f32 %v1668, %v1669
  %v1671 = vsel %vm761, %v1645, -inf
  %v1672 = vrot.slane %v1671, 4
  %v1673 = vmax.f32 %v1671, %v1672
  %v1674 = vrot.slane %v1673, 2
  %v1675 = vmax.f32 %v1673, %v1674
  %v1676 = vrot.slane %v1675, 1
  %v1677 = vmax.f32 %v1675, %v1676
  %v1678 = vsel %vm761, %v1646, -inf
  %v1679 = vrot.slane %v1678, 4
  %v1680 = vmax.f32 %v1678, %v1679
  %v1681 = vrot.slane %v1680, 2
  %v1682 = vmax.f32 %v1680, %v1681
  %v1683 = vrot.slane %v1682, 1
  %v1684 = vmax.f32 %v1682, %v1683
  %v1685 = vsel %vm761, %v1647, -inf
  %v1686 = vrot.slane %v1685, 4
  %v1687 = vmax.f32 %v1685, %v1686
  %v1688 = vrot.slane %v1687, 2
  %v1689 = vmax.f32 %v1687, %v1688
  %v1690 = vrot.slane %v1689, 1
  %v1691 = vmax.f32 %v1689, %v1690
  %v1692 = vsel %vm761, %v1648, -inf
  %v1693 = vrot.slane %v1692, 4
  %v1694 = vmax.f32 %v1692, %v1693
  %v1695 = vrot.slane %v1694, 2
  %v1696 = vmax.f32 %v1694, %v1695
  %v1697 = vrot.slane %v1696, 1
  %v1698 = vmax.f32 %v1696, %v1697
  %v1699 = vsel %vm761, %v1649, -inf
  %v1700 = vrot.slane %v1699, 4
  %v1701 = vmax.f32 %v1699, %v1700
  %v1702 = vrot.slane %v1701, 2
  %v1703 = vmax.f32 %v1701, %v1702
  %v1704 = vrot.slane %v1703, 1
  %v1705 = vmax.f32 %v1703, %v1704
  %v1706 = vsub.f32 %v1642, %v1656
  %v1707 = vsub.f32 %v1643, %v1663
  %v1708 = vsub.f32 %v1644, %v1670
  %v1709 = vsub.f32 %v1645, %v1677
  %v1710 = vsub.f32 %v1646, %v1684
  %v1711 = vsub.f32 %v1647, %v1691
  %v1712 = vsub.f32 %v1648, %v1698
  %v1713 = vsub.f32 %v1649, %v1705
  %v1714 = vmul.f32 %v1706, 1.442695
  %v1715 = vpow.pop %v1714
  %v1716 = vmul.f32 %v1707, 1.442695
  %v1717 = vpow.pop %v1716
  %v1718 = vmul.f32 %v1708, 1.442695
  %v1719 = vpow.pop %v1718
  %v1720 = vmul.f32 %v1709, 1.442695
  %v1721 = vpow.pop %v1720
  %v1722 = vmul.f32 %v1710, 1.442695
  %v1723 = vpow.pop %v1722
  %v1724 = vmul.f32 %v1711, 1.442695
  %v1725 = vpow.pop %v1724
  %v1726 = vmul.f32 %v1712, 1.442695
  %v1727 = vpow.pop %v1726
  %v1728 = vmul.f32 %v1713, 1.442695
  %v1729 = vpow.pop %v1728
  %v1730 = vsel %vm761, %v1715, 0.0
  %v1731 = vrot.slane %v1730, 4
  %v1732 = vadd.f32 %v1730, %v1731
  %v1733 = vrot.slane %v1732, 2
  %v1734 = vadd.f32 %v1732, %v1733
  %v1735 = vrot.slane %v1734, 1
  %v1736 = vadd.f32 %v1734, %v1735
  %v1737 = vsel %vm761, %v1717, 0.0
  %v1738 = vrot.slane %v1737, 4
  %v1739 = vadd.f32 %v1737, %v1738
  %v1740 = vrot.slane %v1739, 2
  %v1741 = vadd.f32 %v1739, %v1740
  %v1742 = vrot.slane %v1741, 1
  %v1743 = vadd.f32 %v1741, %v1742
  %v1744 = vsel %vm761, %v1719, 0.0
  %v1745 = vrot.slane %v1744, 4
  %v1746 = vadd.f32 %v1744, %v1745
  %v1747 = vrot.slane %v1746, 2
  %v1748 = vadd.f32 %v1746, %v1747
  %v1749 = vrot.slane %v1748, 1
  %v1750 = vadd.f32 %v1748, %v1749
  %v1751 = vsel %vm761, %v1721, 0.0
  %v1752 = vrot.slane %v1751, 4
  %v1753 = vadd.f32 %v1751, %v1752
  %v1754 = vrot.slane %v1753, 2
  %v1755 = vadd.f32 %v1753, %v1754
  %v1756 = vrot.slane %v1755, 1
  %v1757 = vadd.f32 %v1755, %v1756
  %v1758 = vsel %vm761, %v1723, 0.0
  %v1759 = vrot.slane %v1758, 4
  %v1760 = vadd.f32 %v1758, %v1759
  %v1761 = vrot.slane %v1760, 2
  %v1762 = vadd.f32 %v1760, %v1761
  %v1763 = vrot.slane %v1762, 1
  %v1764 = vadd.f32 %v1762, %v1763
  %v1765 = vsel %vm761, %v1725, 0.0
  %v1766 = vrot.slane %v1765, 4
  %v1767 = vadd.f32 %v1765, %v1766
  %v1768 = vrot.slane %v1767, 2
  %v1769 = vadd.f32 %v1767, %v1768
  %v1770 = vrot.slane %v1769, 1
  %v1771 = vadd.f32 %v1769, %v1770
  %v1772 = vsel %vm761, %v1727, 0.0
  %v1773 = vrot.slane %v1772, 4
  %v1774 = vadd.f32 %v1772, %v1773
  %v1775 = vrot.slane %v1774, 2
  %v1776 = vadd.f32 %v1774, %v1775
  %v1777 = vrot.slane %v1776, 1
  %v1778 = vadd.f32 %v1776, %v1777
  %v1779 = vsel %vm761, %v1729, 0.0
  %v1780 = vrot.slane %v1779, 4
  %v1781 = vadd.f32 %v1779, %v1780
  %v1782 = vrot.slane %v1781, 2
  %v1783 = vadd.f32 %v1781, %v1782
  %v1784 = vrot.slane %v1783, 1
  %v1785 = vadd.f32 %v1783, %v1784
  %v1786 = vrcp.pop %v1736
  %v1787 = vmul.f32 %v1715, %v1786
  %v1788 = vrcp.pop %v1743
  %v1789 = vmul.f32 %v1717, %v1788
  %v1790 = vrcp.pop %v1750
  %v1791 = vmul.f32 %v1719, %v1790
  %v1792 = vrcp.pop %v1757
  %v1793 = vmul.f32 %v1721, %v1792
  %v1794 = vrcp.pop %v1764
  %v1795 = vmul.f32 %v1723, %v1794
  %v1796 = vrcp.pop %v1771
  %v1797 = vmul.f32 %v1725, %v1796
  %v1798 = vrcp.pop %v1778
  %v1799 = vmul.f32 %v1727, %v1798
  %v1800 = vrcp.pop %v1785
  %v1801 = vmul.f32 %v1729, %v1800
  %v1802 = vld [vmem:[%s3] sm:$0xff]
  %v1803 = vld [vmem:[%s3 + $0x8] sm:$0xff]
  %v1804 = vld [vmem:[%s3 + $0x10] sm:$0xff]
  %v1805 = vld [vmem:[%s3 + $0x18] sm:$0xff]
  %v1806 = vld [vmem:[%s3 + $0x20] sm:$0xff]
  %v1807 = vld [vmem:[%s3 + $0x28] sm:$0xff]
  %v1808 = vld [vmem:[%s3 + $0x30] sm:$0xff]
  %v1809 = vld [vmem:[%s3 + $0x38] sm:$0xff]
  %1811 = vset.pattern.permute.xlu0 0
  %1812 = vperm.xlu0 %1811, %v1787
  %v1813 = vpop.permute.xlu0 %1812
  %1816 = vset.pattern.permute.xlu0 0
  %1817 = vperm.xlu0 %1816, %v1789
  %v1818 = vpop.permute.xlu0 %1817
  %1821 = vset.pattern.permute.xlu0 0
  %1822 = vperm.xlu0 %1821, %v1791
  %v1823 = vpop.permute.xlu0 %1822
  %1826 = vset.pattern.permute.xlu0 0
  %1827 = vperm.xlu0 %1826, %v1793
  %v1828 = vpop.permute.xlu0 %1827
  %1831 = vset.pattern.permute.xlu0 0
  %1832 = vperm.xlu0 %1831, %v1795
  %v1833 = vpop.permute.xlu0 %1832
  %1836 = vset.pattern.permute.xlu0 0
  %1837 = vperm.xlu0 %1836, %v1797
  %v1838 = vpop.permute.xlu0 %1837
  %1841 = vset.pattern.permute.xlu0 0
  %1842 = vperm.xlu0 %1841, %v1799
  %v1843 = vpop.permute.xlu0 %1842
  %1846 = vset.pattern.permute.xlu0 0
  %1847 = vperm.xlu0 %1846, %v1801
  %v1848 = vpop.permute.xlu0 %1847
  %v1850 = vmul.f32 %v1813, %v1802
  %v1851 = vmul.f32 %v1818, %v1803
  %v1852 = vmul.f32 %v1823, %v1804
  %v1853 = vmul.f32 %v1828, %v1805
  %v1854 = vmul.f32 %v1833, %v1806
  %v1855 = vmul.f32 %v1838, %v1807
  %v1856 = vmul.f32 %v1843, %v1808
  %v1857 = vmul.f32 %v1848, %v1809
  %v1858 = vrot.slane %v1850, 4
  %v1859 = vadd.f32 %v1850, %v1858
  %v1860 = vrot.slane %v1859, 2
  %v1861 = vadd.f32 %v1859, %v1860
  %v1862 = vrot.slane %v1861, 1
  %v1863 = vadd.f32 %v1861, %v1862
  %v1864 = vrot.slane %v1851, 4
  %v1865 = vadd.f32 %v1851, %v1864
  %v1866 = vrot.slane %v1865, 2
  %v1867 = vadd.f32 %v1865, %v1866
  %v1868 = vrot.slane %v1867, 1
  %v1869 = vadd.f32 %v1867, %v1868
  %v1870 = vrot.slane %v1852, 4
  %v1871 = vadd.f32 %v1852, %v1870
  %v1872 = vrot.slane %v1871, 2
  %v1873 = vadd.f32 %v1871, %v1872
  %v1874 = vrot.slane %v1873, 1
  %v1875 = vadd.f32 %v1873, %v1874
  %v1876 = vrot.slane %v1853, 4
  %v1877 = vadd.f32 %v1853, %v1876
  %v1878 = vrot.slane %v1877, 2
  %v1879 = vadd.f32 %v1877, %v1878
  %v1880 = vrot.slane %v1879, 1
  %v1881 = vadd.f32 %v1879, %v1880
  %v1882 = vrot.slane %v1854, 4
  %v1883 = vadd.f32 %v1854, %v1882
  %v1884 = vrot.slane %v1883, 2
  %v1885 = vadd.f32 %v1883, %v1884
  %v1886 = vrot.slane %v1885, 1
  %v1887 = vadd.f32 %v1885, %v1886
  %v1888 = vrot.slane %v1855, 4
  %v1889 = vadd.f32 %v1855, %v1888
  %v1890 = vrot.slane %v1889, 2
  %v1891 = vadd.f32 %v1889, %v1890
  %v1892 = vrot.slane %v1891, 1
  %v1893 = vadd.f32 %v1891, %v1892
  %v1894 = vrot.slane %v1856, 4
  %v1895 = vadd.f32 %v1856, %v1894
  %v1896 = vrot.slane %v1895, 2
  %v1897 = vadd.f32 %v1895, %v1896
  %v1898 = vrot.slane %v1897, 1
  %v1899 = vadd.f32 %v1897, %v1898
  %v1900 = vrot.slane %v1857, 4
  %v1901 = vadd.f32 %v1857, %v1900
  %v1902 = vrot.slane %v1901, 2
  %v1903 = vadd.f32 %v1901, %v1902
  %v1904 = vrot.slane %v1903, 1
  %v1905 = vadd.f32 %v1903, %v1904
  %v1914 = vsel %vm1026, %v1869, %v1863
  %v1915 = vsel %vm1028, %v1875, %v1914
  %v1916 = vsel %vm1030, %v1881, %v1915
  %v1917 = vsel %vm1032, %v1887, %v1916
  %v1918 = vsel %vm1034, %v1893, %v1917
  %v1919 = vsel %vm1036, %v1899, %v1918
  %v1920 = vsel %vm1038, %v1905, %v1919
  %v1922 = vld [vmem:[%s9] sm:$0xff]
  %v1923 = vld [vmem:[%s9 + $0x8] sm:$0xff]
  %v1924 = vld [vmem:[%s9 + $0x10] sm:$0xff]
  %v1925 = vld [vmem:[%s9 + $0x18] sm:$0xff]
  %v1926 = vld [vmem:[%s9 + $0x20] sm:$0xff]
  %v1927 = vld [vmem:[%s9 + $0x28] sm:$0xff]
  %v1928 = vld [vmem:[%s9 + $0x30] sm:$0xff]
  %v1929 = vld [vmem:[%s9 + $0x38] sm:$0xff]
  %v1930 = vld [vmem:[%s9 + $0x40] sm:$0xff]
  %v1931 = vld [vmem:[%s9 + $0x48] sm:$0xff]
  %v1932 = vld [vmem:[%s9 + $0x50] sm:$0xff]
  %v1933 = vld [vmem:[%s9 + $0x58] sm:$0xff]
  %v1934 = vld [vmem:[%s9 + $0x60] sm:$0xff]
  %v1935 = vld [vmem:[%s9 + $0x68] sm:$0xff]
  %v1936 = vld [vmem:[%s9 + $0x70] sm:$0xff]
  %v1937 = vld [vmem:[%s9 + $0x78] sm:$0xff]
  %v1938 = vld [vmem:[%s9 + $0x80] sm:$0xff]
  %v1939 = vld [vmem:[%s9 + $0x88] sm:$0xff]
  %v1940 = vld [vmem:[%s9 + $0x90] sm:$0xff]
  %v1941 = vld [vmem:[%s9 + $0x98] sm:$0xff]
  %v1942 = vld [vmem:[%s9 + $0xa0] sm:$0xff]
  %v1943 = vld [vmem:[%s9 + $0xa8] sm:$0xff]
  %v1944 = vld [vmem:[%s9 + $0xb0] sm:$0xff]
  %v1945 = vld [vmem:[%s9 + $0xb8] sm:$0xff]
  %v1946 = vld [vmem:[%s9 + $0xc0] sm:$0xff]
  %v1947 = vld [vmem:[%s9 + $0xc8] sm:$0xff]
  %v1948 = vld [vmem:[%s9 + $0xd0] sm:$0xff]
  %v1949 = vld [vmem:[%s9 + $0xd8] sm:$0xff]
  %v1950 = vld [vmem:[%s9 + $0xe0] sm:$0xff]
  %v1951 = vld [vmem:[%s9 + $0xe8] sm:$0xff]
  %v1952 = vld [vmem:[%s9 + $0xf0] sm:$0xff]
  %v1953 = vld [vmem:[%s9 + $0xf8] sm:$0xff]
  %1954 = vmatprep.subr.mxu0 0.0
  %1955 = vmatpush1.msra.mxu0 %v1937
  %1956 = vmatprep.subr.mxu0 0.0
  %1957 = vmatpush1.msra.mxu0 %v1936
  %1958 = vmatprep.subr.mxu0 0.0
  %1959 = vmatpush1.msra.mxu0 %v1935
  %1960 = vmatprep.subr.mxu0 0.0
  %1961 = vmatpush1.msra.mxu0 %v1934
  %1962 = vmatprep.subr.mxu0 0.0
  %1963 = vmatpush1.msra.mxu0 %v1933
  %1964 = vmatprep.subr.mxu0 0.0
  %1965 = vmatpush1.msra.mxu0 %v1932
  %1966 = vmatprep.subr.mxu0 0.0
  %1967 = vmatpush1.msra.mxu0 %v1931
  %1968 = vmatprep.subr.mxu0 0.0
  %1969 = vmatpush1.msra.mxu0 %v1930
  %1970 = vmatprep.subr.mxu0 0.0
  %1971 = vmatpush1.msra.mxu0 %v1929
  %1972 = vmatprep.subr.mxu0 0.0
  %1973 = vmatpush1.msra.mxu0 %v1928
  %1974 = vmatprep.subr.mxu0 0.0
  %1975 = vmatpush1.msra.mxu0 %v1927
  %1976 = vmatprep.subr.mxu0 0.0
  %1977 = vmatpush1.msra.mxu0 %v1926
  %1978 = vmatprep.subr.mxu0 0.0
  %1979 = vmatpush1.msra.mxu0 %v1925
  %1980 = vmatprep.subr.mxu0 0.0
  %1981 = vmatpush1.msra.mxu0 %v1924
  %1982 = vmatprep.subr.mxu0 0.0
  %1983 = vmatpush1.msra.mxu0 %v1923
  %1984 = vmatprep.subr.mxu0 0.0
  %1985 = vmatpush1.msra.mxu0 %v1922
  %1986 = vmatprep.subr.mxu0 0.0
  %1987 = vmatpush2.msra.mxu0 %v1953
  %1988 = vmatprep.subr.mxu0 0.0
  %1989 = vmatpush2.msra.mxu0 %v1952
  %1990 = vmatprep.subr.mxu0 0.0
  %1991 = vmatpush2.msra.mxu0 %v1951
  %1992 = vmatprep.subr.mxu0 0.0
  %1993 = vmatpush2.msra.mxu0 %v1950
  %1994 = vmatprep.subr.mxu0 0.0
  %1995 = vmatpush2.msra.mxu0 %v1949
  %1996 = vmatprep.subr.mxu0 0.0
  %1997 = vmatpush2.msra.mxu0 %v1948
  %1998 = vmatprep.subr.mxu0 0.0
  %1999 = vmatpush2.msra.mxu0 %v1947
  %2000 = vmatprep.subr.mxu0 0.0
  %2001 = vmatpush2.msra.mxu0 %v1946
  %2002 = vmatprep.subr.mxu0 0.0
  %2003 = vmatpush2.msra.mxu0 %v1945
  %2004 = vmatprep.subr.mxu0 0.0
  %2005 = vmatpush2.msra.mxu0 %v1944
  %2006 = vmatprep.subr.mxu0 0.0
  %2007 = vmatpush2.msra.mxu0 %v1943
  %2008 = vmatprep.subr.mxu0 0.0
  %2009 = vmatpush2.msra.mxu0 %v1942
  %2010 = vmatprep.subr.mxu0 0.0
  %2011 = vmatpush2.msra.mxu0 %v1941
  %2012 = vmatprep.subr.mxu0 0.0
  %2013 = vmatpush2.msra.mxu0 %v1940
  %2014 = vmatprep.subr.mxu0 0.0
  %2015 = vmatpush2.msra.mxu0 %v1939
  %2016 = vmatprep.subr.mxu0 0.0
  %2017 = vmatpush2.msra.mxu0 %v1938
  %2018 = vmatprep.mubr.f32.mxu0 %v1511
  %2019 = vmatmul.mubr.f32.gmra.mxu0 %v1920
  %v2020 = vpop.f32.mrf.mxu0
  %v2021 = vadd.f32 0.0, %v2020
  %v2022 = vpop.f32.mrf.mxu0
  %2023 = vdwg.mxu0
  %v2024 = vtanh.pop %v2021
  %v2026 = vcombine.high %v2024, %v2024
  %v2028 = vunpack.c.l.s4 1966171168
  %v2029 = vunpack.c.0.s8 %v2028
  %v2030 = vlaneseq
  %v2031 = vshrl.u32 %v2030, 7
  %v2032 = vsub.s32 %v2029, %v2031
  %v2033 = vrot.slane %v2024, %v2032
  %v2035 = vunpack.c.l.s4 1966171168
  %v2036 = vunpack.c.0.s8 %v2035
  %v2037 = vlaneseq
  %v2038 = vshrl.u32 %v2037, 7
  %v2039 = vsub.s32 %v2036, %v2038
  %v2040 = vrot.slane %v2026, %v2039
  %v2041 = vcombine.high %v2033, %v2033
  %v2042 = vcombine.high %v2040, %v2040
  %v2044 = vunpack.c.l.s4 1966171168
  %v2045 = vunpack.c.0.s8 %v2044
  %v2046 = vlaneseq
  %v2047 = vshrl.u32 %v2046, 7
  %v2048 = vsub.s32 %v2045, %v2047
  %v2049 = vrot.slane %v2033, %v2048
  %v2051 = vunpack.c.l.s4 1966171168
  %v2052 = vunpack.c.0.s8 %v2051
  %v2053 = vlaneseq
  %v2054 = vshrl.u32 %v2053, 7
  %v2055 = vsub.s32 %v2052, %v2054
  %v2056 = vrot.slane %v2040, %v2055
  %v2058 = vunpack.c.l.s4 1966171168
  %v2059 = vunpack.c.0.s8 %v2058
  %v2060 = vlaneseq
  %v2061 = vshrl.u32 %v2060, 7
  %v2062 = vsub.s32 %v2059, %v2061
  %v2063 = vrot.slane %v2041, %v2062
  %v2065 = vunpack.c.l.s4 1966171168
  %v2066 = vunpack.c.0.s8 %v2065
  %v2067 = vlaneseq
  %v2068 = vshrl.u32 %v2067, 7
  %v2069 = vsub.s32 %v2066, %v2068
  %v2070 = vrot.slane %v2042, %v2069
  %v2071 = vcombine.high %v2049, %v2049
  %v2072 = vcombine.high %v2056, %v2056
  %v2073 = vcombine.high %v2063, %v2063
  %v2074 = vcombine.high %v2070, %v2070
  %2083 = vst [vmem:[%s10 + $0x1] sm:$0x1] %v2049
  %2084 = vst [vmem:[%s10 + $0x9] sm:$0x1] %v2063
  %2085 = vst [vmem:[%s10 + $0x11] sm:$0x1] %v2071
  %2086 = vst [vmem:[%s10 + $0x19] sm:$0x1] %v2073
  %2087 = vst [vmem:[%s10 + $0x21] sm:$0x1] %v2056
  %2088 = vst [vmem:[%s10 + $0x29] sm:$0x1] %v2070
  %2089 = vst [vmem:[%s10 + $0x31] sm:$0x1] %v2072
  %2090 = vst [vmem:[%s10 + $0x39] sm:$0x1] %v2074
  %v2091 = vld [vmem:[#allocation2 + $0x40] sm:$0xff]
  %v2092 = vld [vmem:[#allocation2 + $0x48] sm:$0xff]
  %v2093 = vld [vmem:[#allocation2 + $0x50] sm:$0xff]
  %v2094 = vld [vmem:[#allocation2 + $0x58] sm:$0xff]
  %v2095 = vld [vmem:[%s8] sm:$0xff]
  %v2096 = vld [vmem:[%s8 + $0x8] sm:$0xff]
  %v2097 = vld [vmem:[%s8 + $0x10] sm:$0xff]
  %v2098 = vld [vmem:[%s8 + $0x18] sm:$0xff]
  %v2099 = vld [vmem:[%s8 + $0x20] sm:$0xff]
  %v2100 = vld [vmem:[%s8 + $0x28] sm:$0xff]
  %v2101 = vld [vmem:[%s8 + $0x30] sm:$0xff]
  %v2102 = vld [vmem:[%s8 + $0x38] sm:$0xff]
  %v2103 = vld [vmem:[%s8 + $0x40] sm:$0xff]
  %v2104 = vld [vmem:[%s8 + $0x48] sm:$0xff]
  %v2105 = vld [vmem:[%s8 + $0x50] sm:$0xff]
  %v2106 = vld [vmem:[%s8 + $0x58] sm:$0xff]
  %v2107 = vld [vmem:[%s8 + $0x60] sm:$0xff]
  %v2108 = vld [vmem:[%s8 + $0x68] sm:$0xff]
  %v2109 = vld [vmem:[%s8 + $0x70] sm:$0xff]
  %v2110 = vld [vmem:[%s8 + $0x78] sm:$0xff]
  %v2111 = vld [vmem:[%s8 + $0x80] sm:$0xff]
  %v2112 = vld [vmem:[%s8 + $0x88] sm:$0xff]
  %v2113 = vld [vmem:[%s8 + $0x90] sm:$0xff]
  %v2114 = vld [vmem:[%s8 + $0x98] sm:$0xff]
  %v2115 = vld [vmem:[%s8 + $0xa0] sm:$0xff]
  %v2116 = vld [vmem:[%s8 + $0xa8] sm:$0xff]
  %v2117 = vld [vmem:[%s8 + $0xb0] sm:$0xff]
  %v2118 = vld [vmem:[%s8 + $0xb8] sm:$0xff]
  %v2119 = vld [vmem:[%s8 + $0xc0] sm:$0xff]
  %v2120 = vld [vmem:[%s8 + $0xc8] sm:$0xff]
  %v2121 = vld [vmem:[%s8 + $0xd0] sm:$0xff]
  %v2122 = vld [vmem:[%s8 + $0xd8] sm:$0xff]
  %v2123 = vld [vmem:[%s8 + $0xe0] sm:$0xff]
  %v2124 = vld [vmem:[%s8 + $0xe8] sm:$0xff]
  %v2125 = vld [vmem:[%s8 + $0xf0] sm:$0xff]
  %v2126 = vld [vmem:[%s8 + $0xf8] sm:$0xff]
  %v2127 = vld [vmem:[%s8 + $0x100] sm:$0xff]
  %v2128 = vld [vmem:[%s8 + $0x108] sm:$0xff]
  %v2129 = vld [vmem:[%s8 + $0x110] sm:$0xff]
  %v2130 = vld [vmem:[%s8 + $0x118] sm:$0xff]
  %v2131 = vld [vmem:[%s8 + $0x120] sm:$0xff]
  %v2132 = vld [vmem:[%s8 + $0x128] sm:$0xff]
  %v2133 = vld [vmem:[%s8 + $0x130] sm:$0xff]
  %v2134 = vld [vmem:[%s8 + $0x138] sm:$0xff]
  %v2135 = vld [vmem:[%s8 + $0x140] sm:$0xff]
  %v2136 = vld [vmem:[%s8 + $0x148] sm:$0xff]
  %v2137 = vld [vmem:[%s8 + $0x150] sm:$0xff]
  %v2138 = vld [vmem:[%s8 + $0x158] sm:$0xff]
  %v2139 = vld [vmem:[%s8 + $0x160] sm:$0xff]
  %v2140 = vld [vmem:[%s8 + $0x168] sm:$0xff]
  %v2141 = vld [vmem:[%s8 + $0x170] sm:$0xff]
  %v2142 = vld [vmem:[%s8 + $0x178] sm:$0xff]
  %v2143 = vld [vmem:[%s8 + $0x180] sm:$0xff]
  %v2144 = vld [vmem:[%s8 + $0x188] sm:$0xff]
  %v2145 = vld [vmem:[%s8 + $0x190] sm:$0xff]
  %v2146 = vld [vmem:[%s8 + $0x198] sm:$0xff]
  %v2147 = vld [vmem:[%s8 + $0x1a0] sm:$0xff]
  %v2148 = vld [vmem:[%s8 + $0x1a8] sm:$0xff]
  %v2149 = vld [vmem:[%s8 + $0x1b0] sm:$0xff]
  %v2150 = vld [vmem:[%s8 + $0x1b8] sm:$0xff]
  %v2151 = vld [vmem:[%s8 + $0x1c0] sm:$0xff]
  %v2152 = vld [vmem:[%s8 + $0x1c8] sm:$0xff]
  %v2153 = vld [vmem:[%s8 + $0x1d0] sm:$0xff]
  %v2154 = vld [vmem:[%s8 + $0x1d8] sm:$0xff]
  %v2155 = vld [vmem:[%s8 + $0x1e0] sm:$0xff]
  %v2156 = vld [vmem:[%s8 + $0x1e8] sm:$0xff]
  %v2157 = vld [vmem:[%s8 + $0x1f0] sm:$0xff]
  %v2158 = vld [vmem:[%s8 + $0x1f8] sm:$0xff]
  %v2159 = vld [vmem:[%s8 + $0x200] sm:$0xff]
  %v2160 = vld [vmem:[%s8 + $0x208] sm:$0xff]
  %v2161 = vld [vmem:[%s8 + $0x210] sm:$0xff]
  %v2162 = vld [vmem:[%s8 + $0x218] sm:$0xff]
  %v2163 = vld [vmem:[%s8 + $0x220] sm:$0xff]
  %v2164 = vld [vmem:[%s8 + $0x228] sm:$0xff]
  %v2165 = vld [vmem:[%s8 + $0x230] sm:$0xff]
  %v2166 = vld [vmem:[%s8 + $0x238] sm:$0xff]
  %v2167 = vld [vmem:[%s8 + $0x240] sm:$0xff]
  %v2168 = vld [vmem:[%s8 + $0x248] sm:$0xff]
  %v2169 = vld [vmem:[%s8 + $0x250] sm:$0xff]
  %v2170 = vld [vmem:[%s8 + $0x258] sm:$0xff]
  %v2171 = vld [vmem:[%s8 + $0x260] sm:$0xff]
  %v2172 = vld [vmem:[%s8 + $0x268] sm:$0xff]
  %v2173 = vld [vmem:[%s8 + $0x270] sm:$0xff]
  %v2174 = vld [vmem:[%s8 + $0x278] sm:$0xff]
  %v2175 = vld [vmem:[%s8 + $0x280] sm:$0xff]
  %v2176 = vld [vmem:[%s8 + $0x288] sm:$0xff]
  %v2177 = vld [vmem:[%s8 + $0x290] sm:$0xff]
  %v2178 = vld [vmem:[%s8 + $0x298] sm:$0xff]
  %v2179 = vld [vmem:[%s8 + $0x2a0] sm:$0xff]
  %v2180 = vld [vmem:[%s8 + $0x2a8] sm:$0xff]
  %v2181 = vld [vmem:[%s8 + $0x2b0] sm:$0xff]
  %v2182 = vld [vmem:[%s8 + $0x2b8] sm:$0xff]
  %v2183 = vld [vmem:[%s8 + $0x2c0] sm:$0xff]
  %v2184 = vld [vmem:[%s8 + $0x2c8] sm:$0xff]
  %v2185 = vld [vmem:[%s8 + $0x2d0] sm:$0xff]
  %v2186 = vld [vmem:[%s8 + $0x2d8] sm:$0xff]
  %v2187 = vld [vmem:[%s8 + $0x2e0] sm:$0xff]
  %v2188 = vld [vmem:[%s8 + $0x2e8] sm:$0xff]
  %v2189 = vld [vmem:[%s8 + $0x2f0] sm:$0xff]
  %v2190 = vld [vmem:[%s8 + $0x2f8] sm:$0xff]
  %v2191 = vld [vmem:[%s8 + $0x300] sm:$0xff]
  %v2192 = vld [vmem:[%s8 + $0x308] sm:$0xff]
  %v2193 = vld [vmem:[%s8 + $0x310] sm:$0xff]
  %v2194 = vld [vmem:[%s8 + $0x318] sm:$0xff]
  %v2195 = vld [vmem:[%s8 + $0x320] sm:$0xff]
  %v2196 = vld [vmem:[%s8 + $0x328] sm:$0xff]
  %v2197 = vld [vmem:[%s8 + $0x330] sm:$0xff]
  %v2198 = vld [vmem:[%s8 + $0x338] sm:$0xff]
  %v2199 = vld [vmem:[%s8 + $0x340] sm:$0xff]
  %v2200 = vld [vmem:[%s8 + $0x348] sm:$0xff]
  %v2201 = vld [vmem:[%s8 + $0x350] sm:$0xff]
  %v2202 = vld [vmem:[%s8 + $0x358] sm:$0xff]
  %v2203 = vld [vmem:[%s8 + $0x360] sm:$0xff]
  %v2204 = vld [vmem:[%s8 + $0x368] sm:$0xff]
  %v2205 = vld [vmem:[%s8 + $0x370] sm:$0xff]
  %v2206 = vld [vmem:[%s8 + $0x378] sm:$0xff]
  %v2207 = vld [vmem:[%s8 + $0x380] sm:$0xff]
  %v2208 = vld [vmem:[%s8 + $0x388] sm:$0xff]
  %v2209 = vld [vmem:[%s8 + $0x390] sm:$0xff]
  %v2210 = vld [vmem:[%s8 + $0x398] sm:$0xff]
  %v2211 = vld [vmem:[%s8 + $0x3a0] sm:$0xff]
  %v2212 = vld [vmem:[%s8 + $0x3a8] sm:$0xff]
  %v2213 = vld [vmem:[%s8 + $0x3b0] sm:$0xff]
  %v2214 = vld [vmem:[%s8 + $0x3b8] sm:$0xff]
  %v2215 = vld [vmem:[%s8 + $0x3c0] sm:$0xff]
  %v2216 = vld [vmem:[%s8 + $0x3c8] sm:$0xff]
  %v2217 = vld [vmem:[%s8 + $0x3d0] sm:$0xff]
  %v2218 = vld [vmem:[%s8 + $0x3d8] sm:$0xff]
  %v2219 = vld [vmem:[%s8 + $0x3e0] sm:$0xff]
  %v2220 = vld [vmem:[%s8 + $0x3e8] sm:$0xff]
  %v2221 = vld [vmem:[%s8 + $0x3f0] sm:$0xff]
  %v2222 = vld [vmem:[%s8 + $0x3f8] sm:$0xff]
  %2223 = vmatprep.subr.mxu0 %v2156
  %2224 = vmatpush1.msra.mxu0 %v2155
  %2225 = vmatprep.subr.mxu0 %v2152
  %2226 = vmatpush1.msra.mxu0 %v2151
  %2227 = vmatprep.subr.mxu0 %v2148
  %2228 = vmatpush1.msra.mxu0 %v2147
  %2229 = vmatprep.subr.mxu0 %v2144
  %2230 = vmatpush1.msra.mxu0 %v2143
  %2231 = vmatprep.subr.mxu0 %v2140
  %2232 = vmatpush1.msra.mxu0 %v2139
  %2233 = vmatprep.subr.mxu0 %v2136
  %2234 = vmatpush1.msra.mxu0 %v2135
  %2235 = vmatprep.subr.mxu0 %v2132
  %2236 = vmatpush1.msra.mxu0 %v2131
  %2237 = vmatprep.subr.mxu0 %v2128
  %2238 = vmatpush1.msra.mxu0 %v2127
  %2239 = vmatprep.subr.mxu0 %v2124
  %2240 = vmatpush1.msra.mxu0 %v2123
  %2241 = vmatprep.subr.mxu0 %v2120
  %2242 = vmatpush1.msra.mxu0 %v2119
  %2243 = vmatprep.subr.mxu0 %v2116
  %2244 = vmatpush1.msra.mxu0 %v2115
  %2245 = vmatprep.subr.mxu0 %v2112
  %2246 = vmatpush1.msra.mxu0 %v2111
  %2247 = vmatprep.subr.mxu0 %v2108
  %2248 = vmatpush1.msra.mxu0 %v2107
  %2249 = vmatprep.subr.mxu0 %v2104
  %2250 = vmatpush1.msra.mxu0 %v2103
  %2251 = vmatprep.subr.mxu0 %v2100
  %2252 = vmatpush1.msra.mxu0 %v2099
  %2253 = vmatprep.subr.mxu0 %v2096
  %2254 = vmatpush1.msra.mxu0 %v2095
  %2255 = vmatprep.subr.mxu0 %v2220
  %2256 = vmatpush2.msra.mxu0 %v2219
  %2257 = vmatprep.subr.mxu0 %v2216
  %2258 = vmatpush2.msra.mxu0 %v2215
  %2259 = vmatprep.subr.mxu0 %v2212
  %2260 = vmatpush2.msra.mxu0 %v2211
  %2261 = vmatprep.subr.mxu0 %v2208
  %2262 = vmatpush2.msra.mxu0 %v2207
  %2263 = vmatprep.subr.mxu0 %v2204
  %2264 = vmatpush2.msra.mxu0 %v2203
  %2265 = vmatprep.subr.mxu0 %v2200
  %2266 = vmatpush2.msra.mxu0 %v2199
  %2267 = vmatprep.subr.mxu0 %v2196
  %2268 = vmatpush2.msra.mxu0 %v2195
  %2269 = vmatprep.subr.mxu0 %v2192
  %2270 = vmatpush2.msra.mxu0 %v2191
  %2271 = vmatprep.subr.mxu0 %v2188
  %2272 = vmatpush2.msra.mxu0 %v2187
  %2273 = vmatprep.subr.mxu0 %v2184
  %2274 = vmatpush2.msra.mxu0 %v2183
  %2275 = vmatprep.subr.mxu0 %v2180
  %2276 = vmatpush2.msra.mxu0 %v2179
  %2277 = vmatprep.subr.mxu0 %v2176
  %2278 = vmatpush2.msra.mxu0 %v2175
  %2279 = vmatprep.subr.mxu0 %v2172
  %2280 = vmatpush2.msra.mxu0 %v2171
  %2281 = vmatprep.subr.mxu0 %v2168
  %2282 = vmatpush2.msra.mxu0 %v2167
  %2283 = vmatprep.subr.mxu0 %v2164
  %2284 = vmatpush2.msra.mxu0 %v2163
  %2285 = vmatprep.subr.mxu0 %v2160
  %2286 = vmatpush2.msra.mxu0 %v2159
  %2287 = vmatprep.mubr.f32.mxu0 %v1511
  %2288 = vmatmul.mubr.f32.gmra.mxu0 %v2024
  %v2289 = vpop.f32.mrf.mxu0
  %v2290 = vadd.f32 0.0, %v2289
  %v2291 = vpop.f32.mrf.mxu0
  %v2292 = vadd.f32 0.0, %v2291
  %2293 = vdwg.mxu0
  %2294 = vmatprep.subr.mxu0 %v2158
  %2295 = vmatpush1.msra.mxu0 %v2157
  %2296 = vmatprep.subr.mxu0 %v2154
  %2297 = vmatpush1.msra.mxu0 %v2153
  %2298 = vmatprep.subr.mxu0 %v2150
  %2299 = vmatpush1.msra.mxu0 %v2149
  %2300 = vmatprep.subr.mxu0 %v2146
  %2301 = vmatpush1.msra.mxu0 %v2145
  %2302 = vmatprep.subr.mxu0 %v2142
  %2303 = vmatpush1.msra.mxu0 %v2141
  %2304 = vmatprep.subr.mxu0 %v2138
  %2305 = vmatpush1.msra.mxu0 %v2137
  %2306 = vmatprep.subr.mxu0 %v2134
  %2307 = vmatpush1.msra.mxu0 %v2133
  %2308 = vmatprep.subr.mxu0 %v2130
  %2309 = vmatpush1.msra.mxu0 %v2129
  %2310 = vmatprep.subr.mxu0 %v2126
  %2311 = vmatpush1.msra.mxu0 %v2125
  %2312 = vmatprep.subr.mxu0 %v2122
  %2313 = vmatpush1.msra.mxu0 %v2121
  %2314 = vmatprep.subr.mxu0 %v2118
  %2315 = vmatpush1.msra.mxu0 %v2117
  %2316 = vmatprep.subr.mxu0 %v2114
  %2317 = vmatpush1.msra.mxu0 %v2113
  %2318 = vmatprep.subr.mxu0 %v2110
  %2319 = vmatpush1.msra.mxu0 %v2109
  %2320 = vmatprep.subr.mxu0 %v2106
  %2321 = vmatpush1.msra.mxu0 %v2105
  %2322 = vmatprep.subr.mxu0 %v2102
  %2323 = vmatpush1.msra.mxu0 %v2101
  %2324 = vmatprep.subr.mxu0 %v2098
  %2325 = vmatpush1.msra.mxu0 %v2097
  %2326 = vmatprep.subr.mxu0 %v2222
  %2327 = vmatpush2.msra.mxu0 %v2221
  %2328 = vmatprep.subr.mxu0 %v2218
  %2329 = vmatpush2.msra.mxu0 %v2217
  %2330 = vmatprep.subr.mxu0 %v2214
  %2331 = vmatpush2.msra.mxu0 %v2213
  %2332 = vmatprep.subr.mxu0 %v2210
  %2333 = vmatpush2.msra.mxu0 %v2209
  %2334 = vmatprep.subr.mxu0 %v2206
  %2335 = vmatpush2.msra.mxu0 %v2205
  %2336 = vmatprep.subr.mxu0 %v2202
  %2337 = vmatpush2.msra.mxu0 %v2201
  %2338 = vmatprep.subr.mxu0 %v2198
  %2339 = vmatpush2.msra.mxu0 %v2197
  %2340 = vmatprep.subr.mxu0 %v2194
  %2341 = vmatpush2.msra.mxu0 %v2193
  %2342 = vmatprep.subr.mxu0 %v2190
  %2343 = vmatpush2.msra.mxu0 %v2189
  %2344 = vmatprep.subr.mxu0 %v2186
  %2345 = vmatpush2.msra.mxu0 %v2185
  %2346 = vmatprep.subr.mxu0 %v2182
  %2347 = vmatpush2.msra.mxu0 %v2181
  %2348 = vmatprep.subr.mxu0 %v2178
  %2349 = vmatpush2.msra.mxu0 %v2177
  %2350 = vmatprep.subr.mxu0 %v2174
  %2351 = vmatpush2.msra.mxu0 %v2173
  %2352 = vmatprep.subr.mxu0 %v2170
  %2353 = vmatpush2.msra.mxu0 %v2169
  %2354 = vmatprep.subr.mxu0 %v2166
  %2355 = vmatpush2.msra.mxu0 %v2165
  %2356 = vmatprep.subr.mxu0 %v2162
  %2357 = vmatpush2.msra.mxu0 %v2161
  %2358 = vmatprep.mubr.f32.mxu0 %v1511
  %2359 = vmatmul.mubr.f32.gmra.mxu0 %v2024
  %v2360 = vpop.f32.mrf.mxu0
  %v2361 = vadd.f32 0.0, %v2360
  %v2362 = vpop.f32.mrf.mxu0
  %v2363 = vadd.f32 0.0, %v2362
  %2364 = vdwg.mxu0
  %v2365 = vadd.f32 %v2091, %v2290
  %v2366 = vadd.f32 %v2092, %v2292
  %v2367 = vadd.f32 %v2093, %v2361
  %v2368 = vadd.f32 %v2094, %v2363
  %v2369 = vxor.u32 %v2365, 2147483648
  %v2370 = vmul.f32 %v2369, 1.442695
  %v2371 = vpow.pop %v2370
  %v2372 = vadd.f32 %v2371, 1.0
  %v2373 = vrcp.pop %v2372
  %v2374 = vmul.f32 1.0, %v2373
  %v2375 = vxor.u32 %v2366, 2147483648
  %v2376 = vmul.f32 %v2375, 1.442695
  %v2377 = vpow.pop %v2376
  %v2378 = vadd.f32 %v2377, 1.0
  %v2379 = vrcp.pop %v2378
  %v2380 = vmul.f32 1.0, %v2379
  %v2381 = vtanh.pop %v2367
  %v2382 = vxor.u32 %v2368, 2147483648
  %v2383 = vmul.f32 %v2382, 1.442695
  %v2384 = vpow.pop %v2383
  %v2385 = vadd.f32 %v2384, 1.0
  %v2386 = vrcp.pop %v2385
  %v2387 = vmul.f32 1.0, %v2386
  %v2388 = vmul.f32 %v2380, %v1509
  %v2389 = vmul.f32 %v2374, %v2381
  %v2390 = vadd.f32 %v2388, %v2389
  %v2391 = vtanh.pop %v2390
  %v2392 = vmul.f32 %v2387, %v2391
  %v2394 = vcombine.high %v2392, %v2392
  %v2396 = vunpack.c.l.s4 1966171168
  %v2397 = vunpack.c.0.s8 %v2396
  %v2398 = vlaneseq
  %v2399 = vshrl.u32 %v2398, 7
  %v2400 = vsub.s32 %v2397, %v2399
  %v2401 = vrot.slane %v2392, %v2400
  %v2403 = vunpack.c.l.s4 1966171168
  %v2404 = vunpack.c.0.s8 %v2403
  %v2405 = vlaneseq
  %v2406 = vshrl.u32 %v2405, 7
  %v2407 = vsub.s32 %v2404, %v2406
  %v2408 = vrot.slane %v2394, %v2407
  %v2409 = vcombine.high %v2401, %v2401
  %v2410 = vcombine.high %v2408, %v2408
  %v2412 = vunpack.c.l.s4 1966171168
  %v2413 = vunpack.c.0.s8 %v2412
  %v2414 = vlaneseq
  %v2415 = vshrl.u32 %v2414, 7
  %v2416 = vsub.s32 %v2413, %v2415
  %v2417 = vrot.slane %v2401, %v2416
  %v2419 = vunpack.c.l.s4 1966171168
  %v2420 = vunpack.c.0.s8 %v2419
  %v2421 = vlaneseq
  %v2422 = vshrl.u32 %v2421, 7
  %v2423 = vsub.s32 %v2420, %v2422
  %v2424 = vrot.slane %v2408, %v2423
  %v2426 = vunpack.c.l.s4 1966171168
  %v2427 = vunpack.c.0.s8 %v2426
  %v2428 = vlaneseq
  %v2429 = vshrl.u32 %v2428, 7
  %v2430 = vsub.s32 %v2427, %v2429
  %v2431 = vrot.slane %v2409, %v2430
  %v2433 = vunpack.c.l.s4 1966171168
  %v2434 = vunpack.c.0.s8 %v2433
  %v2435 = vlaneseq
  %v2436 = vshrl.u32 %v2435, 7
  %v2437 = vsub.s32 %v2434, %v2436
  %v2438 = vrot.slane %v2410, %v2437
  %v2439 = vcombine.high %v2417, %v2417
  %v2440 = vcombine.high %v2424, %v2424
  %v2441 = vcombine.high %v2431, %v2431
  %v2442 = vcombine.high %v2438, %v2438
  %v2443 = vld [vmem:[%s4] sm:$0xff]
  %v2444 = vld [vmem:[%s4 + $0x8] sm:$0xff]
  %v2445 = vld [vmem:[%s4 + $0x10] sm:$0xff]
  %v2446 = vld [vmem:[%s4 + $0x18] sm:$0xff]
  %v2447 = vld [vmem:[%s4 + $0x20] sm:$0xff]
  %v2448 = vld [vmem:[%s4 + $0x28] sm:$0xff]
  %v2449 = vld [vmem:[%s4 + $0x30] sm:$0xff]
  %v2450 = vld [vmem:[%s4 + $0x38] sm:$0xff]
  %v2451 = vlaneseq
  %v2452 = vshrl.u32 %v2451, 7
  %v2453 = vsub.s32 0, %v2452
  %v2454 = vrot.slane %v2417, %v2453
  %v2455 = vlaneseq
  %v2456 = vshrl.u32 %v2455, 7
  %v2457 = vsub.s32 0, %v2456
  %v2458 = vrot.slane %v2431, %v2457
  %v2459 = vlaneseq
  %v2460 = vshrl.u32 %v2459, 7
  %v2461 = vsub.s32 0, %v2460
  %v2462 = vrot.slane %v2439, %v2461
  %v2463 = vlaneseq
  %v2464 = vshrl.u32 %v2463, 7
  %v2465 = vsub.s32 0, %v2464
  %v2466 = vrot.slane %v2441, %v2465
  %v2467 = vlaneseq
  %v2468 = vshrl.u32 %v2467, 7
  %v2469 = vsub.s32 0, %v2468
  %v2470 = vrot.slane %v2424, %v2469
  %v2471 = vlaneseq
  %v2472 = vshrl.u32 %v2471, 7
  %v2473 = vsub.s32 0, %v2472
  %v2474 = vrot.slane %v2438, %v2473
  %v2475 = vlaneseq
  %v2476 = vshrl.u32 %v2475, 7
  %v2477 = vsub.s32 0, %v2476
  %v2478 = vrot.slane %v2440, %v2477
  %v2479 = vlaneseq
  %v2480 = vshrl.u32 %v2479, 7
  %v2481 = vsub.s32 0, %v2480
  %v2482 = vrot.slane %v2442, %v2481
  %v2491 = vmul.f32 %v2454, %v2443
  %v2492 = vmul.f32 %v2458, %v2444
  %v2493 = vmul.f32 %v2462, %v2445
  %v2494 = vmul.f32 %v2466, %v2446
  %v2495 = vmul.f32 %v2470, %v2447
  %v2496 = vmul.f32 %v2474, %v2448
  %v2497 = vmul.f32 %v2478, %v2449
  %v2498 = vmul.f32 %v2482, %v2450
  %2499 = vadd.xlane.f32.xlu0 %v2491
  %v2500 = vpop.xlane.xlu0 %2499
  %2501 = vadd.xlane.f32.xlu0 %v2492
  %v2502 = vpop.xlane.xlu0 %2501
  %2503 = vadd.xlane.f32.xlu0 %v2493
  %v2504 = vpop.xlane.xlu0 %2503
  %2505 = vadd.xlane.f32.xlu0 %v2494
  %v2506 = vpop.xlane.xlu0 %2505
  %2507 = vadd.xlane.f32.xlu0 %v2495
  %v2508 = vpop.xlane.xlu0 %2507
  %2509 = vadd.xlane.f32.xlu0 %v2496
  %v2510 = vpop.xlane.xlu0 %2509
  %2511 = vadd.xlane.f32.xlu0 %v2497
  %v2512 = vpop.xlane.xlu0 %2511
  %2513 = vadd.xlane.f32.xlu0 %v2498
  %v2514 = vpop.xlane.xlu0 %2513
  %v2515 = vld [vmem:[%s5] sm:$0xff]
  %v2516 = vld [vmem:[%s5 + $0x8] sm:$0xff]
  %v2517 = vld [vmem:[%s5 + $0x10] sm:$0xff]
  %v2518 = vld [vmem:[%s5 + $0x18] sm:$0xff]
  %v2519 = vld [vmem:[%s5 + $0x20] sm:$0xff]
  %v2520 = vld [vmem:[%s5 + $0x28] sm:$0xff]
  %v2521 = vld [vmem:[%s5 + $0x30] sm:$0xff]
  %v2522 = vld [vmem:[%s5 + $0x38] sm:$0xff]
  %v2523 = vadd.f32 %v2500, %v2515
  %v2524 = vadd.f32 %v2502, %v2516
  %v2525 = vadd.f32 %v2504, %v2517
  %v2526 = vadd.f32 %v2506, %v2518
  %v2527 = vadd.f32 %v2508, %v2519
  %v2528 = vadd.f32 %v2510, %v2520
  %v2529 = vadd.f32 %v2512, %v2521
  %v2530 = vadd.f32 %v2514, %v2522
  %v2531 = vsel %vm761, %v2523, -inf
  %v2532 = vrot.slane %v2531, 4
  %v2533 = vmax.f32 %v2531, %v2532
  %v2534 = vrot.slane %v2533, 2
  %v2535 = vmax.f32 %v2533, %v2534
  %v2536 = vrot.slane %v2535, 1
  %v2537 = vmax.f32 %v2535, %v2536
  %v2538 = vsel %vm761, %v2524, -inf
  %v2539 = vrot.slane %v2538, 4
  %v2540 = vmax.f32 %v2538, %v2539
  %v2541 = vrot.slane %v2540, 2
  %v2542 = vmax.f32 %v2540, %v2541
  %v2543 = vrot.slane %v2542, 1
  %v2544 = vmax.f32 %v2542, %v2543
  %v2545 = vsel %vm761, %v2525, -inf
  %v2546 = vrot.slane %v2545, 4
  %v2547 = vmax.f32 %v2545, %v2546
  %v2548 = vrot.slane %v2547, 2
  %v2549 = vmax.f32 %v2547, %v2548
  %v2550 = vrot.slane %v2549, 1
  %v2551 = vmax.f32 %v2549, %v2550
  %v2552 = vsel %vm761, %v2526, -inf
  %v2553 = vrot.slane %v2552, 4
  %v2554 = vmax.f32 %v2552, %v2553
  %v2555 = vrot.slane %v2554, 2
  %v2556 = vmax.f32 %v2554, %v2555
  %v2557 = vrot.slane %v2556, 1
  %v2558 = vmax.f32 %v2556, %v2557
  %v2559 = vsel %vm761, %v2527, -inf
  %v2560 = vrot.slane %v2559, 4
  %v2561 = vmax.f32 %v2559, %v2560
  %v2562 = vrot.slane %v2561, 2
  %v2563 = vmax.f32 %v2561, %v2562
  %v2564 = vrot.slane %v2563, 1
  %v2565 = vmax.f32 %v2563, %v2564
  %v2566 = vsel %vm761, %v2528, -inf
  %v2567 = vrot.slane %v2566, 4
  %v2568 = vmax.f32 %v2566, %v2567
  %v2569 = vrot.slane %v2568, 2
  %v2570 = vmax.f32 %v2568, %v2569
  %v2571 = vrot.slane %v2570, 1
  %v2572 = vmax.f32 %v2570, %v2571
  %v2573 = vsel %vm761, %v2529, -inf
  %v2574 = vrot.slane %v2573, 4
  %v2575 = vmax.f32 %v2573, %v2574
  %v2576 = vrot.slane %v2575, 2
  %v2577 = vmax.f32 %v2575, %v2576
  %v2578 = vrot.slane %v2577, 1
  %v2579 = vmax.f32 %v2577, %v2578
  %v2580 = vsel %vm761, %v2530, -inf
  %v2581 = vrot.slane %v2580, 4
  %v2582 = vmax.f32 %v2580, %v2581
  %v2583 = vrot.slane %v2582, 2
  %v2584 = vmax.f32 %v2582, %v2583
  %v2585 = vrot.slane %v2584, 1
  %v2586 = vmax.f32 %v2584, %v2585
  %v2587 = vsub.f32 %v2523, %v2537
  %v2588 = vsub.f32 %v2524, %v2544
  %v2589 = vsub.f32 %v2525, %v2551
  %v2590 = vsub.f32 %v2526, %v2558
  %v2591 = vsub.f32 %v2527, %v2565
  %v2592 = vsub.f32 %v2528, %v2572
  %v2593 = vsub.f32 %v2529, %v2579
  %v2594 = vsub.f32 %v2530, %v2586
  %v2595 = vmul.f32 %v2587, 1.442695
  %v2596 = vpow.pop %v2595
  %v2597 = vmul.f32 %v2588, 1.442695
  %v2598 = vpow.pop %v2597
  %v2599 = vmul.f32 %v2589, 1.442695
  %v2600 = vpow.pop %v2599
  %v2601 = vmul.f32 %v2590, 1.442695
  %v2602 = vpow.pop %v2601
  %v2603 = vmul.f32 %v2591, 1.442695
  %v2604 = vpow.pop %v2603
  %v2605 = vmul.f32 %v2592, 1.442695
  %v2606 = vpow.pop %v2605
  %v2607 = vmul.f32 %v2593, 1.442695
  %v2608 = vpow.pop %v2607
  %v2609 = vmul.f32 %v2594, 1.442695
  %v2610 = vpow.pop %v2609
  %v2611 = vsel %vm761, %v2596, 0.0
  %v2612 = vrot.slane %v2611, 4
  %v2613 = vadd.f32 %v2611, %v2612
  %v2614 = vrot.slane %v2613, 2
  %v2615 = vadd.f32 %v2613, %v2614
  %v2616 = vrot.slane %v2615, 1
  %v2617 = vadd.f32 %v2615, %v2616
  %v2618 = vsel %vm761, %v2598, 0.0
  %v2619 = vrot.slane %v2618, 4
  %v2620 = vadd.f32 %v2618, %v2619
  %v2621 = vrot.slane %v2620, 2
  %v2622 = vadd.f32 %v2620, %v2621
  %v2623 = vrot.slane %v2622, 1
  %v2624 = vadd.f32 %v2622, %v2623
  %v2625 = vsel %vm761, %v2600, 0.0
  %v2626 = vrot.slane %v2625, 4
  %v2627 = vadd.f32 %v2625, %v2626
  %v2628 = vrot.slane %v2627, 2
  %v2629 = vadd.f32 %v2627, %v2628
  %v2630 = vrot.slane %v2629, 1
  %v2631 = vadd.f32 %v2629, %v2630
  %v2632 = vsel %vm761, %v2602, 0.0
  %v2633 = vrot.slane %v2632, 4
  %v2634 = vadd.f32 %v2632, %v2633
  %v2635 = vrot.slane %v2634, 2
  %v2636 = vadd.f32 %v2634, %v2635
  %v2637 = vrot.slane %v2636, 1
  %v2638 = vadd.f32 %v2636, %v2637
  %v2639 = vsel %vm761, %v2604, 0.0
  %v2640 = vrot.slane %v2639, 4
  %v2641 = vadd.f32 %v2639, %v2640
  %v2642 = vrot.slane %v2641, 2
  %v2643 = vadd.f32 %v2641, %v2642
  %v2644 = vrot.slane %v2643, 1
  %v2645 = vadd.f32 %v2643, %v2644
  %v2646 = vsel %vm761, %v2606, 0.0
  %v2647 = vrot.slane %v2646, 4
  %v2648 = vadd.f32 %v2646, %v2647
  %v2649 = vrot.slane %v2648, 2
  %v2650 = vadd.f32 %v2648, %v2649
  %v2651 = vrot.slane %v2650, 1
  %v2652 = vadd.f32 %v2650, %v2651
  %v2653 = vsel %vm761, %v2608, 0.0
  %v2654 = vrot.slane %v2653, 4
  %v2655 = vadd.f32 %v2653, %v2654
  %v2656 = vrot.slane %v2655, 2
  %v2657 = vadd.f32 %v2655, %v2656
  %v2658 = vrot.slane %v2657, 1
  %v2659 = vadd.f32 %v2657, %v2658
  %v2660 = vsel %vm761, %v2610, 0.0
  %v2661 = vrot.slane %v2660, 4
  %v2662 = vadd.f32 %v2660, %v2661
  %v2663 = vrot.slane %v2662, 2
  %v2664 = vadd.f32 %v2662, %v2663
  %v2665 = vrot.slane %v2664, 1
  %v2666 = vadd.f32 %v2664, %v2665
  %v2667 = vrcp.pop %v2617
  %v2668 = vmul.f32 %v2596, %v2667
  %v2669 = vrcp.pop %v2624
  %v2670 = vmul.f32 %v2598, %v2669
  %v2671 = vrcp.pop %v2631
  %v2672 = vmul.f32 %v2600, %v2671
  %v2673 = vrcp.pop %v2638
  %v2674 = vmul.f32 %v2602, %v2673
  %v2675 = vrcp.pop %v2645
  %v2676 = vmul.f32 %v2604, %v2675
  %v2677 = vrcp.pop %v2652
  %v2678 = vmul.f32 %v2606, %v2677
  %v2679 = vrcp.pop %v2659
  %v2680 = vmul.f32 %v2608, %v2679
  %v2681 = vrcp.pop %v2666
  %v2682 = vmul.f32 %v2610, %v2681
  %v2683 = vld [vmem:[%s3] sm:$0xff]
  %v2684 = vld [vmem:[%s3 + $0x8] sm:$0xff]
  %v2685 = vld [vmem:[%s3 + $0x10] sm:$0xff]
  %v2686 = vld [vmem:[%s3 + $0x18] sm:$0xff]
  %v2687 = vld [vmem:[%s3 + $0x20] sm:$0xff]
  %v2688 = vld [vmem:[%s3 + $0x28] sm:$0xff]
  %v2689 = vld [vmem:[%s3 + $0x30] sm:$0xff]
  %v2690 = vld [vmem:[%s3 + $0x38] sm:$0xff]
  %2692 = vset.pattern.permute.xlu0 0
  %2693 = vperm.xlu0 %2692, %v2668
  %v2694 = vpop.permute.xlu0 %2693
  %2697 = vset.pattern.permute.xlu0 0
  %2698 = vperm.xlu0 %2697, %v2670
  %v2699 = vpop.permute.xlu0 %2698
  %2702 = vset.pattern.permute.xlu0 0
  %2703 = vperm.xlu0 %2702, %v2672
  %v2704 = vpop.permute.xlu0 %2703
  %2707 = vset.pattern.permute.xlu0 0
  %2708 = vperm.xlu0 %2707, %v2674
  %v2709 = vpop.permute.xlu0 %2708
  %2712 = vset.pattern.permute.xlu0 0
  %2713 = vperm.xlu0 %2712, %v2676
  %v2714 = vpop.permute.xlu0 %2713
  %2717 = vset.pattern.permute.xlu0 0
  %2718 = vperm.xlu0 %2717, %v2678
  %v2719 = vpop.permute.xlu0 %2718
  %2722 = vset.pattern.permute.xlu0 0
  %2723 = vperm.xlu0 %2722, %v2680
  %v2724 = vpop.permute.xlu0 %2723
  %2727 = vset.pattern.permute.xlu0 0
  %2728 = vperm.xlu0 %2727, %v2682
  %v2729 = vpop.permute.xlu0 %2728
  %v2731 = vmul.f32 %v2694, %v2683
  %v2732 = vmul.f32 %v2699, %v2684
  %v2733 = vmul.f32 %v2704, %v2685
  %v2734 = vmul.f32 %v2709, %v2686
  %v2735 = vmul.f32 %v2714, %v2687
  %v2736 = vmul.f32 %v2719, %v2688
  %v2737 = vmul.f32 %v2724, %v2689
  %v2738 = vmul.f32 %v2729, %v2690
  %v2739 = vrot.slane %v2731, 4
  %v2740 = vadd.f32 %v2731, %v2739
  %v2741 = vrot.slane %v2740, 2
  %v2742 = vadd.f32 %v2740, %v2741
  %v2743 = vrot.slane %v2742, 1
  %v2744 = vadd.f32 %v2742, %v2743
  %v2745 = vrot.slane %v2732, 4
  %v2746 = vadd.f32 %v2732, %v2745
  %v2747 = vrot.slane %v2746, 2
  %v2748 = vadd.f32 %v2746, %v2747
  %v2749 = vrot.slane %v2748, 1
  %v2750 = vadd.f32 %v2748, %v2749
  %v2751 = vrot.slane %v2733, 4
  %v2752 = vadd.f32 %v2733, %v2751
  %v2753 = vrot.slane %v2752, 2
  %v2754 = vadd.f32 %v2752, %v2753
  %v2755 = vrot.slane %v2754, 1
  %v2756 = vadd.f32 %v2754, %v2755
  %v2757 = vrot.slane %v2734, 4
  %v2758 = vadd.f32 %v2734, %v2757
  %v2759 = vrot.slane %v2758, 2
  %v2760 = vadd.f32 %v2758, %v2759
  %v2761 = vrot.slane %v2760, 1
  %v2762 = vadd.f32 %v2760, %v2761
  %v2763 = vrot.slane %v2735, 4
  %v2764 = vadd.f32 %v2735, %v2763
  %v2765 = vrot.slane %v2764, 2
  %v2766 = vadd.f32 %v2764, %v2765
  %v2767 = vrot.slane %v2766, 1
  %v2768 = vadd.f32 %v2766, %v2767
  %v2769 = vrot.slane %v2736, 4
  %v2770 = vadd.f32 %v2736, %v2769
  %v2771 = vrot.slane %v2770, 2
  %v2772 = vadd.f32 %v2770, %v2771
  %v2773 = vrot.slane %v2772, 1
  %v2774 = vadd.f32 %v2772, %v2773
  %v2775 = vrot.slane %v2737, 4
  %v2776 = vadd.f32 %v2737, %v2775
  %v2777 = vrot.slane %v2776, 2
  %v2778 = vadd.f32 %v2776, %v2777
  %v2779 = vrot.slane %v2778, 1
  %v2780 = vadd.f32 %v2778, %v2779
  %v2781 = vrot.slane %v2738, 4
  %v2782 = vadd.f32 %v2738, %v2781
  %v2783 = vrot.slane %v2782, 2
  %v2784 = vadd.f32 %v2782, %v2783
  %v2785 = vrot.slane %v2784, 1
  %v2786 = vadd.f32 %v2784, %v2785
  %v2795 = vsel %vm1026, %v2750, %v2744
  %v2796 = vsel %vm1028, %v2756, %v2795
  %v2797 = vsel %vm1030, %v2762, %v2796
  %v2798 = vsel %vm1032, %v2768, %v2797
  %v2799 = vsel %vm1034, %v2774, %v2798
  %v2800 = vsel %vm1036, %v2780, %v2799
  %v2801 = vsel %vm1038, %v2786, %v2800
  %v2803 = vld [vmem:[%s9] sm:$0xff]
  %v2804 = vld [vmem:[%s9 + $0x8] sm:$0xff]
  %v2805 = vld [vmem:[%s9 + $0x10] sm:$0xff]
  %v2806 = vld [vmem:[%s9 + $0x18] sm:$0xff]
  %v2807 = vld [vmem:[%s9 + $0x20] sm:$0xff]
  %v2808 = vld [vmem:[%s9 + $0x28] sm:$0xff]
  %v2809 = vld [vmem:[%s9 + $0x30] sm:$0xff]
  %v2810 = vld [vmem:[%s9 + $0x38] sm:$0xff]
  %v2811 = vld [vmem:[%s9 + $0x40] sm:$0xff]
  %v2812 = vld [vmem:[%s9 + $0x48] sm:$0xff]
  %v2813 = vld [vmem:[%s9 + $0x50] sm:$0xff]
  %v2814 = vld [vmem:[%s9 + $0x58] sm:$0xff]
  %v2815 = vld [vmem:[%s9 + $0x60] sm:$0xff]
  %v2816 = vld [vmem:[%s9 + $0x68] sm:$0xff]
  %v2817 = vld [vmem:[%s9 + $0x70] sm:$0xff]
  %v2818 = vld [vmem:[%s9 + $0x78] sm:$0xff]
  %v2819 = vld [vmem:[%s9 + $0x80] sm:$0xff]
  %v2820 = vld [vmem:[%s9 + $0x88] sm:$0xff]
  %v2821 = vld [vmem:[%s9 + $0x90] sm:$0xff]
  %v2822 = vld [vmem:[%s9 + $0x98] sm:$0xff]
  %v2823 = vld [vmem:[%s9 + $0xa0] sm:$0xff]
  %v2824 = vld [vmem:[%s9 + $0xa8] sm:$0xff]
  %v2825 = vld [vmem:[%s9 + $0xb0] sm:$0xff]
  %v2826 = vld [vmem:[%s9 + $0xb8] sm:$0xff]
  %v2827 = vld [vmem:[%s9 + $0xc0] sm:$0xff]
  %v2828 = vld [vmem:[%s9 + $0xc8] sm:$0xff]
  %v2829 = vld [vmem:[%s9 + $0xd0] sm:$0xff]
  %v2830 = vld [vmem:[%s9 + $0xd8] sm:$0xff]
  %v2831 = vld [vmem:[%s9 + $0xe0] sm:$0xff]
  %v2832 = vld [vmem:[%s9 + $0xe8] sm:$0xff]
  %v2833 = vld [vmem:[%s9 + $0xf0] sm:$0xff]
  %v2834 = vld [vmem:[%s9 + $0xf8] sm:$0xff]
  %2835 = vmatprep.subr.mxu0 0.0
  %2836 = vmatpush1.msra.mxu0 %v2818
  %2837 = vmatprep.subr.mxu0 0.0
  %2838 = vmatpush1.msra.mxu0 %v2817
  %2839 = vmatprep.subr.mxu0 0.0
  %2840 = vmatpush1.msra.mxu0 %v2816
  %2841 = vmatprep.subr.mxu0 0.0
  %2842 = vmatpush1.msra.mxu0 %v2815
  %2843 = vmatprep.subr.mxu0 0.0
  %2844 = vmatpush1.msra.mxu0 %v2814
  %2845 = vmatprep.subr.mxu0 0.0
  %2846 = vmatpush1.msra.mxu0 %v2813
  %2847 = vmatprep.subr.mxu0 0.0
  %2848 = vmatpush1.msra.mxu0 %v2812
  %2849 = vmatprep.subr.mxu0 0.0
  %2850 = vmatpush1.msra.mxu0 %v2811
  %2851 = vmatprep.subr.mxu0 0.0
  %2852 = vmatpush1.msra.mxu0 %v2810
  %2853 = vmatprep.subr.mxu0 0.0
  %2854 = vmatpush1.msra.mxu0 %v2809
  %2855 = vmatprep.subr.mxu0 0.0
  %2856 = vmatpush1.msra.mxu0 %v2808
  %2857 = vmatprep.subr.mxu0 0.0
  %2858 = vmatpush1.msra.mxu0 %v2807
  %2859 = vmatprep.subr.mxu0 0.0
  %2860 = vmatpush1.msra.mxu0 %v2806
  %2861 = vmatprep.subr.mxu0 0.0
  %2862 = vmatpush1.msra.mxu0 %v2805
  %2863 = vmatprep.subr.mxu0 0.0
  %2864 = vmatpush1.msra.mxu0 %v2804
  %2865 = vmatprep.subr.mxu0 0.0
  %2866 = vmatpush1.msra.mxu0 %v2803
  %2867 = vmatprep.subr.mxu0 0.0
  %2868 = vmatpush2.msra.mxu0 %v2834
  %2869 = vmatprep.subr.mxu0 0.0
  %2870 = vmatpush2.msra.mxu0 %v2833
  %2871 = vmatprep.subr.mxu0 0.0
  %2872 = vmatpush2.msra.mxu0 %v2832
  %2873 = vmatprep.subr.mxu0 0.0
  %2874 = vmatpush2.msra.mxu0 %v2831
  %2875 = vmatprep.subr.mxu0 0.0
  %2876 = vmatpush2.msra.mxu0 %v2830
  %2877 = vmatprep.subr.mxu0 0.0
  %2878 = vmatpush2.msra.mxu0 %v2829
  %2879 = vmatprep.subr.mxu0 0.0
  %2880 = vmatpush2.msra.mxu0 %v2828
  %2881 = vmatprep.subr.mxu0 0.0
  %2882 = vmatpush2.msra.mxu0 %v2827
  %2883 = vmatprep.subr.mxu0 0.0
  %2884 = vmatpush2.msra.mxu0 %v2826
  %2885 = vmatprep.subr.mxu0 0.0
  %2886 = vmatpush2.msra.mxu0 %v2825
  %2887 = vmatprep.subr.mxu0 0.0
  %2888 = vmatpush2.msra.mxu0 %v2824
  %2889 = vmatprep.subr.mxu0 0.0
  %2890 = vmatpush2.msra.mxu0 %v2823
  %2891 = vmatprep.subr.mxu0 0.0
  %2892 = vmatpush2.msra.mxu0 %v2822
  %2893 = vmatprep.subr.mxu0 0.0
  %2894 = vmatpush2.msra.mxu0 %v2821
  %2895 = vmatprep.subr.mxu0 0.0
  %2896 = vmatpush2.msra.mxu0 %v2820
  %2897 = vmatprep.subr.mxu0 0.0
  %2898 = vmatpush2.msra.mxu0 %v2819
  %2899 = vmatprep.mubr.f32.mxu0 %v2392
  %2900 = vmatmul.mubr.f32.gmra.mxu0 %v2801
  %v2901 = vpop.f32.mrf.mxu0
  %v2902 = vadd.f32 0.0, %v2901
  %v2903 = vpop.f32.mrf.mxu0
  %2904 = vdwg.mxu0
  %v2905 = vtanh.pop %v2902
  %v2907 = vcombine.high %v2905, %v2905
  %v2909 = vunpack.c.l.s4 1966171168
  %v2910 = vunpack.c.0.s8 %v2909
  %v2911 = vlaneseq
  %v2912 = vshrl.u32 %v2911, 7
  %v2913 = vsub.s32 %v2910, %v2912
  %v2914 = vrot.slane %v2905, %v2913
  %v2916 = vunpack.c.l.s4 1966171168
  %v2917 = vunpack.c.0.s8 %v2916
  %v2918 = vlaneseq
  %v2919 = vshrl.u32 %v2918, 7
  %v2920 = vsub.s32 %v2917, %v2919
  %v2921 = vrot.slane %v2907, %v2920
  %v2922 = vcombine.high %v2914, %v2914
  %v2923 = vcombine.high %v2921, %v2921
  %v2925 = vunpack.c.l.s4 1966171168
  %v2926 = vunpack.c.0.s8 %v2925
  %v2927 = vlaneseq
  %v2928 = vshrl.u32 %v2927, 7
  %v2929 = vsub.s32 %v2926, %v2928
  %v2930 = vrot.slane %v2914, %v2929
  %v2932 = vunpack.c.l.s4 1966171168
  %v2933 = vunpack.c.0.s8 %v2932
  %v2934 = vlaneseq
  %v2935 = vshrl.u32 %v2934, 7
  %v2936 = vsub.s32 %v2933, %v2935
  %v2937 = vrot.slane %v2921, %v2936
  %v2939 = vunpack.c.l.s4 1966171168
  %v2940 = vunpack.c.0.s8 %v2939
  %v2941 = vlaneseq
  %v2942 = vshrl.u32 %v2941, 7
  %v2943 = vsub.s32 %v2940, %v2942
  %v2944 = vrot.slane %v2922, %v2943
  %v2946 = vunpack.c.l.s4 1966171168
  %v2947 = vunpack.c.0.s8 %v2946
  %v2948 = vlaneseq
  %v2949 = vshrl.u32 %v2948, 7
  %v2950 = vsub.s32 %v2947, %v2949
  %v2951 = vrot.slane %v2923, %v2950
  %v2952 = vcombine.high %v2930, %v2930
  %v2953 = vcombine.high %v2937, %v2937
  %v2954 = vcombine.high %v2944, %v2944
  %v2955 = vcombine.high %v2951, %v2951
  %2964 = vst [vmem:[%s10 + $0x2] sm:$0x1] %v2930
  %2965 = vst [vmem:[%s10 + $0xa] sm:$0x1] %v2944
  %2966 = vst [vmem:[%s10 + $0x12] sm:$0x1] %v2952
  %2967 = vst [vmem:[%s10 + $0x1a] sm:$0x1] %v2954
  %2968 = vst [vmem:[%s10 + $0x22] sm:$0x1] %v2937
  %2969 = vst [vmem:[%s10 + $0x2a] sm:$0x1] %v2951
  %2970 = vst [vmem:[%s10 + $0x32] sm:$0x1] %v2953
  %2971 = vst [vmem:[%s10 + $0x3a] sm:$0x1] %v2955
  %v2972 = vld [vmem:[#allocation2 + $0x60] sm:$0xff]
  %v2973 = vld [vmem:[#allocation2 + $0x68] sm:$0xff]
  %v2974 = vld [vmem:[#allocation2 + $0x70] sm:$0xff]
  %v2975 = vld [vmem:[#allocation2 + $0x78] sm:$0xff]
  %v2976 = vld [vmem:[%s8] sm:$0xff]
  %v2977 = vld [vmem:[%s8 + $0x8] sm:$0xff]
  %v2978 = vld [vmem:[%s8 + $0x10] sm:$0xff]
  %v2979 = vld [vmem:[%s8 + $0x18] sm:$0xff]
  %v2980 = vld [vmem:[%s8 + $0x20] sm:$0xff]
  %v2981 = vld [vmem:[%s8 + $0x28] sm:$0xff]
  %v2982 = vld [vmem:[%s8 + $0x30] sm:$0xff]
  %v2983 = vld [vmem:[%s8 + $0x38] sm:$0xff]
  %v2984 = vld [vmem:[%s8 + $0x40] sm:$0xff]
  %v2985 = vld [vmem:[%s8 + $0x48] sm:$0xff]
  %v2986 = vld [vmem:[%s8 + $0x50] sm:$0xff]
  %v2987 = vld [vmem:[%s8 + $0x58] sm:$0xff]
  %v2988 = vld [vmem:[%s8 + $0x60] sm:$0xff]
  %v2989 = vld [vmem:[%s8 + $0x68] sm:$0xff]
  %v2990 = vld [vmem:[%s8 + $0x70] sm:$0xff]
  %v2991 = vld [vmem:[%s8 + $0x78] sm:$0xff]
  %v2992 = vld [vmem:[%s8 + $0x80] sm:$0xff]
  %v2993 = vld [vmem:[%s8 + $0x88] sm:$0xff]
  %v2994 = vld [vmem:[%s8 + $0x90] sm:$0xff]
  %v2995 = vld [vmem:[%s8 + $0x98] sm:$0xff]
  %v2996 = vld [vmem:[%s8 + $0xa0] sm:$0xff]
  %v2997 = vld [vmem:[%s8 + $0xa8] sm:$0xff]
  %v2998 = vld [vmem:[%s8 + $0xb0] sm:$0xff]
  %v2999 = vld [vmem:[%s8 + $0xb8] sm:$0xff]
  %v3000 = vld [vmem:[%s8 + $0xc0] sm:$0xff]
  %v3001 = vld [vmem:[%s8 + $0xc8] sm:$0xff]
  %v3002 = vld [vmem:[%s8 + $0xd0] sm:$0xff]
  %v3003 = vld [vmem:[%s8 + $0xd8] sm:$0xff]
  %v3004 = vld [vmem:[%s8 + $0xe0] sm:$0xff]
  %v3005 = vld [vmem:[%s8 + $0xe8] sm:$0xff]
  %v3006 = vld [vmem:[%s8 + $0xf0] sm:$0xff]
  %v3007 = vld [vmem:[%s8 + $0xf8] sm:$0xff]
  %v3008 = vld [vmem:[%s8 + $0x100] sm:$0xff]
  %v3009 = vld [vmem:[%s8 + $0x108] sm:$0xff]
  %v3010 = vld [vmem:[%s8 + $0x110] sm:$0xff]
  %v3011 = vld [vmem:[%s8 + $0x118] sm:$0xff]
  %v3012 = vld [vmem:[%s8 + $0x120] sm:$0xff]
  %v3013 = vld [vmem:[%s8 + $0x128] sm:$0xff]
  %v3014 = vld [vmem:[%s8 + $0x130] sm:$0xff]
  %v3015 = vld [vmem:[%s8 + $0x138] sm:$0xff]
  %v3016 = vld [vmem:[%s8 + $0x140] sm:$0xff]
  %v3017 = vld [vmem:[%s8 + $0x148] sm:$0xff]
  %v3018 = vld [vmem:[%s8 + $0x150] sm:$0xff]
  %v3019 = vld [vmem:[%s8 + $0x158] sm:$0xff]
  %v3020 = vld [vmem:[%s8 + $0x160] sm:$0xff]
  %v3021 = vld [vmem:[%s8 + $0x168] sm:$0xff]
  %v3022 = vld [vmem:[%s8 + $0x170] sm:$0xff]
  %v3023 = vld [vmem:[%s8 + $0x178] sm:$0xff]
  %v3024 = vld [vmem:[%s8 + $0x180] sm:$0xff]
  %v3025 = vld [vmem:[%s8 + $0x188] sm:$0xff]
  %v3026 = vld [vmem:[%s8 + $0x190] sm:$0xff]
  %v3027 = vld [vmem:[%s8 + $0x198] sm:$0xff]
  %v3028 = vld [vmem:[%s8 + $0x1a0] sm:$0xff]
  %v3029 = vld [vmem:[%s8 + $0x1a8] sm:$0xff]
  %v3030 = vld [vmem:[%s8 + $0x1b0] sm:$0xff]
  %v3031 = vld [vmem:[%s8 + $0x1b8] sm:$0xff]
  %v3032 = vld [vmem:[%s8 + $0x1c0] sm:$0xff]
  %v3033 = vld [vmem:[%s8 + $0x1c8] sm:$0xff]
  %v3034 = vld [vmem:[%s8 + $0x1d0] sm:$0xff]
  %v3035 = vld [vmem:[%s8 + $0x1d8] sm:$0xff]
  %v3036 = vld [vmem:[%s8 + $0x1e0] sm:$0xff]
  %v3037 = vld [vmem:[%s8 + $0x1e8] sm:$0xff]
  %v3038 = vld [vmem:[%s8 + $0x1f0] sm:$0xff]
  %v3039 = vld [vmem:[%s8 + $0x1f8] sm:$0xff]
  %v3040 = vld [vmem:[%s8 + $0x200] sm:$0xff]
  %v3041 = vld [vmem:[%s8 + $0x208] sm:$0xff]
  %v3042 = vld [vmem:[%s8 + $0x210] sm:$0xff]
  %v3043 = vld [vmem:[%s8 + $0x218] sm:$0xff]
  %v3044 = vld [vmem:[%s8 + $0x220] sm:$0xff]
  %v3045 = vld [vmem:[%s8 + $0x228] sm:$0xff]
  %v3046 = vld [vmem:[%s8 + $0x230] sm:$0xff]
  %v3047 = vld [vmem:[%s8 + $0x238] sm:$0xff]
  %v3048 = vld [vmem:[%s8 + $0x240] sm:$0xff]
  %v3049 = vld [vmem:[%s8 + $0x248] sm:$0xff]
  %v3050 = vld [vmem:[%s8 + $0x250] sm:$0xff]
  %v3051 = vld [vmem:[%s8 + $0x258] sm:$0xff]
  %v3052 = vld [vmem:[%s8 + $0x260] sm:$0xff]
  %v3053 = vld [vmem:[%s8 + $0x268] sm:$0xff]
  %v3054 = vld [vmem:[%s8 + $0x270] sm:$0xff]
  %v3055 = vld [vmem:[%s8 + $0x278] sm:$0xff]
  %v3056 = vld [vmem:[%s8 + $0x280] sm:$0xff]
  %v3057 = vld [vmem:[%s8 + $0x288] sm:$0xff]
  %v3058 = vld [vmem:[%s8 + $0x290] sm:$0xff]
  %v3059 = vld [vmem:[%s8 + $0x298] sm:$0xff]
  %v3060 = vld [vmem:[%s8 + $0x2a0] sm:$0xff]
  %v3061 = vld [vmem:[%s8 + $0x2a8] sm:$0xff]
  %v3062 = vld [vmem:[%s8 + $0x2b0] sm:$0xff]
  %v3063 = vld [vmem:[%s8 + $0x2b8] sm:$0xff]
  %v3064 = vld [vmem:[%s8 + $0x2c0] sm:$0xff]
  %v3065 = vld [vmem:[%s8 + $0x2c8] sm:$0xff]
  %v3066 = vld [vmem:[%s8 + $0x2d0] sm:$0xff]
  %v3067 = vld [vmem:[%s8 + $0x2d8] sm:$0xff]
  %v3068 = vld [vmem:[%s8 + $0x2e0] sm:$0xff]
  %v3069 = vld [vmem:[%s8 + $0x2e8] sm:$0xff]
  %v3070 = vld [vmem:[%s8 + $0x2f0] sm:$0xff]
  %v3071 = vld [vmem:[%s8 + $0x2f8] sm:$0xff]
  %v3072 = vld [vmem:[%s8 + $0x300] sm:$0xff]
  %v3073 = vld [vmem:[%s8 + $0x308] sm:$0xff]
  %v3074 = vld [vmem:[%s8 + $0x310] sm:$0xff]
  %v3075 = vld [vmem:[%s8 + $0x318] sm:$0xff]
  %v3076 = vld [vmem:[%s8 + $0x320] sm:$0xff]
  %v3077 = vld [vmem:[%s8 + $0x328] sm:$0xff]
  %v3078 = vld [vmem:[%s8 + $0x330] sm:$0xff]
  %v3079 = vld [vmem:[%s8 + $0x338] sm:$0xff]
  %v3080 = vld [vmem:[%s8 + $0x340] sm:$0xff]
  %v3081 = vld [vmem:[%s8 + $0x348] sm:$0xff]
  %v3082 = vld [vmem:[%s8 + $0x350] sm:$0xff]
  %v3083 = vld [vmem:[%s8 + $0x358] sm:$0xff]
  %v3084 = vld [vmem:[%s8 + $0x360] sm:$0xff]
  %v3085 = vld [vmem:[%s8 + $0x368] sm:$0xff]
  %v3086 = vld [vmem:[%s8 + $0x370] sm:$0xff]
  %v3087 = vld [vmem:[%s8 + $0x378] sm:$0xff]
  %v3088 = vld [vmem:[%s8 + $0x380] sm:$0xff]
  %v3089 = vld [vmem:[%s8 + $0x388] sm:$0xff]
  %v3090 = vld [vmem:[%s8 + $0x390] sm:$0xff]
  %v3091 = vld [vmem:[%s8 + $0x398] sm:$0xff]
  %v3092 = vld [vmem:[%s8 + $0x3a0] sm:$0xff]
  %v3093 = vld [vmem:[%s8 + $0x3a8] sm:$0xff]
  %v3094 = vld [vmem:[%s8 + $0x3b0] sm:$0xff]
  %v3095 = vld [vmem:[%s8 + $0x3b8] sm:$0xff]
  %v3096 = vld [vmem:[%s8 + $0x3c0] sm:$0xff]
  %v3097 = vld [vmem:[%s8 + $0x3c8] sm:$0xff]
  %v3098 = vld [vmem:[%s8 + $0x3d0] sm:$0xff]
  %v3099 = vld [vmem:[%s8 + $0x3d8] sm:$0xff]
  %v3100 = vld [vmem:[%s8 + $0x3e0] sm:$0xff]
  %v3101 = vld [vmem:[%s8 + $0x3e8] sm:$0xff]
  %v3102 = vld [vmem:[%s8 + $0x3f0] sm:$0xff]
  %v3103 = vld [vmem:[%s8 + $0x3f8] sm:$0xff]
  %3104 = vmatprep.subr.mxu0 %v3037
  %3105 = vmatpush1.msra.mxu0 %v3036
  %3106 = vmatprep.subr.mxu0 %v3033
  %3107 = vmatpush1.msra.mxu0 %v3032
  %3108 = vmatprep.subr.mxu0 %v3029
  %3109 = vmatpush1.msra.mxu0 %v3028
  %3110 = vmatprep.subr.mxu0 %v3025
  %3111 = vmatpush1.msra.mxu0 %v3024
  %3112 = vmatprep.subr.mxu0 %v3021
  %3113 = vmatpush1.msra.mxu0 %v3020
  %3114 = vmatprep.subr.mxu0 %v3017
  %3115 = vmatpush1.msra.mxu0 %v3016
  %3116 = vmatprep.subr.mxu0 %v3013
  %3117 = vmatpush1.msra.mxu0 %v3012
  %3118 = vmatprep.subr.mxu0 %v3009
  %3119 = vmatpush1.msra.mxu0 %v3008
  %3120 = vmatprep.subr.mxu0 %v3005
  %3121 = vmatpush1.msra.mxu0 %v3004
  %3122 = vmatprep.subr.mxu0 %v3001
  %3123 = vmatpush1.msra.mxu0 %v3000
  %3124 = vmatprep.subr.mxu0 %v2997
  %3125 = vmatpush1.msra.mxu0 %v2996
  %3126 = vmatprep.subr.mxu0 %v2993
  %3127 = vmatpush1.msra.mxu0 %v2992
  %3128 = vmatprep.subr.mxu0 %v2989
  %3129 = vmatpush1.msra.mxu0 %v2988
  %3130 = vmatprep.subr.mxu0 %v2985
  %3131 = vmatpush1.msra.mxu0 %v2984
  %3132 = vmatprep.subr.mxu0 %v2981
  %3133 = vmatpush1.msra.mxu0 %v2980
  %3134 = vmatprep.subr.mxu0 %v2977
  %3135 = vmatpush1.msra.mxu0 %v2976
  %3136 = vmatprep.subr.mxu0 %v3101
  %3137 = vmatpush2.msra.mxu0 %v3100
  %3138 = vmatprep.subr.mxu0 %v3097
  %3139 = vmatpush2.msra.mxu0 %v3096
  %3140 = vmatprep.subr.mxu0 %v3093
  %3141 = vmatpush2.msra.mxu0 %v3092
  %3142 = vmatprep.subr.mxu0 %v3089
  %3143 = vmatpush2.msra.mxu0 %v3088
  %3144 = vmatprep.subr.mxu0 %v3085
  %3145 = vmatpush2.msra.mxu0 %v3084
  %3146 = vmatprep.subr.mxu0 %v3081
  %3147 = vmatpush2.msra.mxu0 %v3080
  %3148 = vmatprep.subr.mxu0 %v3077
  %3149 = vmatpush2.msra.mxu0 %v3076
  %3150 = vmatprep.subr.mxu0 %v3073
  %3151 = vmatpush2.msra.mxu0 %v3072
  %3152 = vmatprep.subr.mxu0 %v3069
  %3153 = vmatpush2.msra.mxu0 %v3068
  %3154 = vmatprep.subr.mxu0 %v3065
  %3155 = vmatpush2.msra.mxu0 %v3064
  %3156 = vmatprep.subr.mxu0 %v3061
  %3157 = vmatpush2.msra.mxu0 %v3060
  %3158 = vmatprep.subr.mxu0 %v3057
  %3159 = vmatpush2.msra.mxu0 %v3056
  %3160 = vmatprep.subr.mxu0 %v3053
  %3161 = vmatpush2.msra.mxu0 %v3052
  %3162 = vmatprep.subr.mxu0 %v3049
  %3163 = vmatpush2.msra.mxu0 %v3048
  %3164 = vmatprep.subr.mxu0 %v3045
  %3165 = vmatpush2.msra.mxu0 %v3044
  %3166 = vmatprep.subr.mxu0 %v3041
  %3167 = vmatpush2.msra.mxu0 %v3040
  %3168 = vmatprep.mubr.f32.mxu0 %v2392
  %3169 = vmatmul.mubr.f32.gmra.mxu0 %v2905
  %v3170 = vpop.f32.mrf.mxu0
  %v3171 = vadd.f32 0.0, %v3170
  %v3172 = vpop.f32.mrf.mxu0
  %v3173 = vadd.f32 0.0, %v3172
  %3174 = vdwg.mxu0
  %3175 = vmatprep.subr.mxu0 %v3039
  %3176 = vmatpush1.msra.mxu0 %v3038
  %3177 = vmatprep.subr.mxu0 %v3035
  %3178 = vmatpush1.msra.mxu0 %v3034
  %3179 = vmatprep.subr.mxu0 %v3031
  %3180 = vmatpush1.msra.mxu0 %v3030
  %3181 = vmatprep.subr.mxu0 %v3027
  %3182 = vmatpush1.msra.mxu0 %v3026
  %3183 = vmatprep.subr.mxu0 %v3023
  %3184 = vmatpush1.msra.mxu0 %v3022
  %3185 = vmatprep.subr.mxu0 %v3019
  %3186 = vmatpush1.msra.mxu0 %v3018
  %3187 = vmatprep.subr.mxu0 %v3015
  %3188 = vmatpush1.msra.mxu0 %v3014
  %3189 = vmatprep.subr.mxu0 %v3011
  %3190 = vmatpush1.msra.mxu0 %v3010
  %3191 = vmatprep.subr.mxu0 %v3007
  %3192 = vmatpush1.msra.mxu0 %v3006
  %3193 = vmatprep.subr.mxu0 %v3003
  %3194 = vmatpush1.msra.mxu0 %v3002
  %3195 = vmatprep.subr.mxu0 %v2999
  %3196 = vmatpush1.msra.mxu0 %v2998
  %3197 = vmatprep.subr.mxu0 %v2995
  %3198 = vmatpush1.msra.mxu0 %v2994
  %3199 = vmatprep.subr.mxu0 %v2991
  %3200 = vmatpush1.msra.mxu0 %v2990
  %3201 = vmatprep.subr.mxu0 %v2987
  %3202 = vmatpush1.msra.mxu0 %v2986
  %3203 = vmatprep.subr.mxu0 %v2983
  %3204 = vmatpush1.msra.mxu0 %v2982
  %3205 = vmatprep.subr.mxu0 %v2979
  %3206 = vmatpush1.msra.mxu0 %v2978
  %3207 = vmatprep.subr.mxu0 %v3103
  %3208 = vmatpush2.msra.mxu0 %v3102
  %3209 = vmatprep.subr.mxu0 %v3099
  %3210 = vmatpush2.msra.mxu0 %v3098
  %3211 = vmatprep.subr.mxu0 %v3095
  %3212 = vmatpush2.msra.mxu0 %v3094
  %3213 = vmatprep.subr.mxu0 %v3091
  %3214 = vmatpush2.msra.mxu0 %v3090
  %3215 = vmatprep.subr.mxu0 %v3087
  %3216 = vmatpush2.msra.mxu0 %v3086
  %3217 = vmatprep.subr.mxu0 %v3083
  %3218 = vmatpush2.msra.mxu0 %v3082
  %3219 = vmatprep.subr.mxu0 %v3079
  %3220 = vmatpush2.msra.mxu0 %v3078
  %3221 = vmatprep.subr.mxu0 %v3075
  %3222 = vmatpush2.msra.mxu0 %v3074
  %3223 = vmatprep.subr.mxu0 %v3071
  %3224 = vmatpush2.msra.mxu0 %v3070
  %3225 = vmatprep.subr.mxu0 %v3067
  %3226 = vmatpush2.msra.mxu0 %v3066
  %3227 = vmatprep.subr.mxu0 %v3063
  %3228 = vmatpush2.msra.mxu0 %v3062
  %3229 = vmatprep.subr.mxu0 %v3059
  %3230 = vmatpush2.msra.mxu0 %v3058
  %3231 = vmatprep.subr.mxu0 %v3055
  %3232 = vmatpush2.msra.mxu0 %v3054
  %3233 = vmatprep.subr.mxu0 %v3051
  %3234 = vmatpush2.msra.mxu0 %v3050
  %3235 = vmatprep.subr.mxu0 %v3047
  %3236 = vmatpush2.msra.mxu0 %v3046
  %3237 = vmatprep.subr.mxu0 %v3043
  %3238 = vmatpush2.msra.mxu0 %v3042
  %3239 = vmatprep.mubr.f32.mxu0 %v2392
  %3240 = vmatmul.mubr.f32.gmra.mxu0 %v2905
  %v3241 = vpop.f32.mrf.mxu0
  %v3242 = vadd.f32 0.0, %v3241
  %v3243 = vpop.f32.mrf.mxu0
  %v3244 = vadd.f32 0.0, %v3243
  %3245 = vdwg.mxu0
  %v3246 = vadd.f32 %v2972, %v3171
  %v3247 = vadd.f32 %v2973, %v3173
  %v3248 = vadd.f32 %v2974, %v3242
  %v3249 = vadd.f32 %v2975, %v3244
  %v3250 = vxor.u32 %v3246, 2147483648
  %v3251 = vmul.f32 %v3250, 1.442695
  %v3252 = vpow.pop %v3251
  %v3253 = vadd.f32 %v3252, 1.0
  %v3254 = vrcp.pop %v3253
  %v3255 = vmul.f32 1.0, %v3254
  %v3256 = vxor.u32 %v3247, 2147483648
  %v3257 = vmul.f32 %v3256, 1.442695
  %v3258 = vpow.pop %v3257
  %v3259 = vadd.f32 %v3258, 1.0
  %v3260 = vrcp.pop %v3259
  %v3261 = vmul.f32 1.0, %v3260
  %v3262 = vtanh.pop %v3248
  %v3263 = vxor.u32 %v3249, 2147483648
  %v3264 = vmul.f32 %v3263, 1.442695
  %v3265 = vpow.pop %v3264
  %v3266 = vadd.f32 %v3265, 1.0
  %v3267 = vrcp.pop %v3266
  %v3268 = vmul.f32 1.0, %v3267
  %v3269 = vmul.f32 %v3261, %v2390
  %v3270 = vmul.f32 %v3255, %v3262
  %v3271 = vadd.f32 %v3269, %v3270
  %v3272 = vtanh.pop %v3271
  %v3273 = vmul.f32 %v3268, %v3272
  %v3275 = vcombine.high %v3273, %v3273
  %v3277 = vunpack.c.l.s4 1966171168
  %v3278 = vunpack.c.0.s8 %v3277
  %v3279 = vlaneseq
  %v3280 = vshrl.u32 %v3279, 7
  %v3281 = vsub.s32 %v3278, %v3280
  %v3282 = vrot.slane %v3273, %v3281
  %v3284 = vunpack.c.l.s4 1966171168
  %v3285 = vunpack.c.0.s8 %v3284
  %v3286 = vlaneseq
  %v3287 = vshrl.u32 %v3286, 7
  %v3288 = vsub.s32 %v3285, %v3287
  %v3289 = vrot.slane %v3275, %v3288
  %v3290 = vcombine.high %v3282, %v3282
  %v3291 = vcombine.high %v3289, %v3289
  %v3293 = vunpack.c.l.s4 1966171168
  %v3294 = vunpack.c.0.s8 %v3293
  %v3295 = vlaneseq
  %v3296 = vshrl.u32 %v3295, 7
  %v3297 = vsub.s32 %v3294, %v3296
  %v3298 = vrot.slane %v3282, %v3297
  %v3300 = vunpack.c.l.s4 1966171168
  %v3301 = vunpack.c.0.s8 %v3300
  %v3302 = vlaneseq
  %v3303 = vshrl.u32 %v3302, 7
  %v3304 = vsub.s32 %v3301, %v3303
  %v3305 = vrot.slane %v3289, %v3304
  %v3307 = vunpack.c.l.s4 1966171168
  %v3308 = vunpack.c.0.s8 %v3307
  %v3309 = vlaneseq
  %v3310 = vshrl.u32 %v3309, 7
  %v3311 = vsub.s32 %v3308, %v3310
  %v3312 = vrot.slane %v3290, %v3311
  %v3314 = vunpack.c.l.s4 1966171168
  %v3315 = vunpack.c.0.s8 %v3314
  %v3316 = vlaneseq
  %v3317 = vshrl.u32 %v3316, 7
  %v3318 = vsub.s32 %v3315, %v3317
  %v3319 = vrot.slane %v3291, %v3318
  %v3320 = vcombine.high %v3298, %v3298
  %v3321 = vcombine.high %v3305, %v3305
  %v3322 = vcombine.high %v3312, %v3312
  %v3323 = vcombine.high %v3319, %v3319
  %v3324 = vld [vmem:[%s4] sm:$0xff]
  %v3325 = vld [vmem:[%s4 + $0x8] sm:$0xff]
  %v3326 = vld [vmem:[%s4 + $0x10] sm:$0xff]
  %v3327 = vld [vmem:[%s4 + $0x18] sm:$0xff]
  %v3328 = vld [vmem:[%s4 + $0x20] sm:$0xff]
  %v3329 = vld [vmem:[%s4 + $0x28] sm:$0xff]
  %v3330 = vld [vmem:[%s4 + $0x30] sm:$0xff]
  %v3331 = vld [vmem:[%s4 + $0x38] sm:$0xff]
  %v3332 = vlaneseq
  %v3333 = vshrl.u32 %v3332, 7
  %v3334 = vsub.s32 0, %v3333
  %v3335 = vrot.slane %v3298, %v3334
  %v3336 = vlaneseq
  %v3337 = vshrl.u32 %v3336, 7
  %v3338 = vsub.s32 0, %v3337
  %v3339 = vrot.slane %v3312, %v3338
  %v3340 = vlaneseq
  %v3341 = vshrl.u32 %v3340, 7
  %v3342 = vsub.s32 0, %v3341
  %v3343 = vrot.slane %v3320, %v3342
  %v3344 = vlaneseq
  %v3345 = vshrl.u32 %v3344, 7
  %v3346 = vsub.s32 0, %v3345
  %v3347 = vrot.slane %v3322, %v3346
  %v3348 = vlaneseq
  %v3349 = vshrl.u32 %v3348, 7
  %v3350 = vsub.s32 0, %v3349
  %v3351 = vrot.slane %v3305, %v3350
  %v3352 = vlaneseq
  %v3353 = vshrl.u32 %v3352, 7
  %v3354 = vsub.s32 0, %v3353
  %v3355 = vrot.slane %v3319, %v3354
  %v3356 = vlaneseq
  %v3357 = vshrl.u32 %v3356, 7
  %v3358 = vsub.s32 0, %v3357
  %v3359 = vrot.slane %v3321, %v3358
  %v3360 = vlaneseq
  %v3361 = vshrl.u32 %v3360, 7
  %v3362 = vsub.s32 0, %v3361
  %v3363 = vrot.slane %v3323, %v3362
  %v3372 = vmul.f32 %v3335, %v3324
  %v3373 = vmul.f32 %v3339, %v3325
  %v3374 = vmul.f32 %v3343, %v3326
  %v3375 = vmul.f32 %v3347, %v3327
  %v3376 = vmul.f32 %v3351, %v3328
  %v3377 = vmul.f32 %v3355, %v3329
  %v3378 = vmul.f32 %v3359, %v3330
  %v3379 = vmul.f32 %v3363, %v3331
  %3380 = vadd.xlane.f32.xlu0 %v3372
  %v3381 = vpop.xlane.xlu0 %3380
  %3382 = vadd.xlane.f32.xlu0 %v3373
  %v3383 = vpop.xlane.xlu0 %3382
  %3384 = vadd.xlane.f32.xlu0 %v3374
  %v3385 = vpop.xlane.xlu0 %3384
  %3386 = vadd.xlane.f32.xlu0 %v3375
  %v3387 = vpop.xlane.xlu0 %3386
  %3388 = vadd.xlane.f32.xlu0 %v3376
  %v3389 = vpop.xlane.xlu0 %3388
  %3390 = vadd.xlane.f32.xlu0 %v3377
  %v3391 = vpop.xlane.xlu0 %3390
  %3392 = vadd.xlane.f32.xlu0 %v3378
  %v3393 = vpop.xlane.xlu0 %3392
  %3394 = vadd.xlane.f32.xlu0 %v3379
  %v3395 = vpop.xlane.xlu0 %3394
  %v3396 = vld [vmem:[%s5] sm:$0xff]
  %v3397 = vld [vmem:[%s5 + $0x8] sm:$0xff]
  %v3398 = vld [vmem:[%s5 + $0x10] sm:$0xff]
  %v3399 = vld [vmem:[%s5 + $0x18] sm:$0xff]
  %v3400 = vld [vmem:[%s5 + $0x20] sm:$0xff]
  %v3401 = vld [vmem:[%s5 + $0x28] sm:$0xff]
  %v3402 = vld [vmem:[%s5 + $0x30] sm:$0xff]
  %v3403 = vld [vmem:[%s5 + $0x38] sm:$0xff]
  %v3404 = vadd.f32 %v3381, %v3396
  %v3405 = vadd.f32 %v3383, %v3397
  %v3406 = vadd.f32 %v3385, %v3398
  %v3407 = vadd.f32 %v3387, %v3399
  %v3408 = vadd.f32 %v3389, %v3400
  %v3409 = vadd.f32 %v3391, %v3401
  %v3410 = vadd.f32 %v3393, %v3402
  %v3411 = vadd.f32 %v3395, %v3403
  %v3412 = vsel %vm761, %v3404, -inf
  %v3413 = vrot.slane %v3412, 4
  %v3414 = vmax.f32 %v3412, %v3413
  %v3415 = vrot.slane %v3414, 2
  %v3416 = vmax.f32 %v3414, %v3415
  %v3417 = vrot.slane %v3416, 1
  %v3418 = vmax.f32 %v3416, %v3417
  %v3419 = vsel %vm761, %v3405, -inf
  %v3420 = vrot.slane %v3419, 4
  %v3421 = vmax.f32 %v3419, %v3420
  %v3422 = vrot.slane %v3421, 2
  %v3423 = vmax.f32 %v3421, %v3422
  %v3424 = vrot.slane %v3423, 1
  %v3425 = vmax.f32 %v3423, %v3424
  %v3426 = vsel %vm761, %v3406, -inf
  %v3427 = vrot.slane %v3426, 4
  %v3428 = vmax.f32 %v3426, %v3427
  %v3429 = vrot.slane %v3428, 2
  %v3430 = vmax.f32 %v3428, %v3429
  %v3431 = vrot.slane %v3430, 1
  %v3432 = vmax.f32 %v3430, %v3431
  %v3433 = vsel %vm761, %v3407, -inf
  %v3434 = vrot.slane %v3433, 4
  %v3435 = vmax.f32 %v3433, %v3434
  %v3436 = vrot.slane %v3435, 2
  %v3437 = vmax.f32 %v3435, %v3436
  %v3438 = vrot.slane %v3437, 1
  %v3439 = vmax.f32 %v3437, %v3438
  %v3440 = vsel %vm761, %v3408, -inf
  %v3441 = vrot.slane %v3440, 4
  %v3442 = vmax.f32 %v3440, %v3441
  %v3443 = vrot.slane %v3442, 2
  %v3444 = vmax.f32 %v3442, %v3443
  %v3445 = vrot.slane %v3444, 1
  %v3446 = vmax.f32 %v3444, %v3445
  %v3447 = vsel %vm761, %v3409, -inf
  %v3448 = vrot.slane %v3447, 4
  %v3449 = vmax.f32 %v3447, %v3448
  %v3450 = vrot.slane %v3449, 2
  %v3451 = vmax.f32 %v3449, %v3450
  %v3452 = vrot.slane %v3451, 1
  %v3453 = vmax.f32 %v3451, %v3452
  %v3454 = vsel %vm761, %v3410, -inf
  %v3455 = vrot.slane %v3454, 4
  %v3456 = vmax.f32 %v3454, %v3455
  %v3457 = vrot.slane %v3456, 2
  %v3458 = vmax.f32 %v3456, %v3457
  %v3459 = vrot.slane %v3458, 1
  %v3460 = vmax.f32 %v3458, %v3459
  %v3461 = vsel %vm761, %v3411, -inf
  %v3462 = vrot.slane %v3461, 4
  %v3463 = vmax.f32 %v3461, %v3462
  %v3464 = vrot.slane %v3463, 2
  %v3465 = vmax.f32 %v3463, %v3464
  %v3466 = vrot.slane %v3465, 1
  %v3467 = vmax.f32 %v3465, %v3466
  %v3468 = vsub.f32 %v3404, %v3418
  %v3469 = vsub.f32 %v3405, %v3425
  %v3470 = vsub.f32 %v3406, %v3432
  %v3471 = vsub.f32 %v3407, %v3439
  %v3472 = vsub.f32 %v3408, %v3446
  %v3473 = vsub.f32 %v3409, %v3453
  %v3474 = vsub.f32 %v3410, %v3460
  %v3475 = vsub.f32 %v3411, %v3467
  %v3476 = vmul.f32 %v3468, 1.442695
  %v3477 = vpow.pop %v3476
  %v3478 = vmul.f32 %v3469, 1.442695
  %v3479 = vpow.pop %v3478
  %v3480 = vmul.f32 %v3470, 1.442695
  %v3481 = vpow.pop %v3480
  %v3482 = vmul.f32 %v3471, 1.442695
  %v3483 = vpow.pop %v3482
  %v3484 = vmul.f32 %v3472, 1.442695
  %v3485 = vpow.pop %v3484
  %v3486 = vmul.f32 %v3473, 1.442695
  %v3487 = vpow.pop %v3486
  %v3488 = vmul.f32 %v3474, 1.442695
  %v3489 = vpow.pop %v3488
  %v3490 = vmul.f32 %v3475, 1.442695
  %v3491 = vpow.pop %v3490
  %v3492 = vsel %vm761, %v3477, 0.0
  %v3493 = vrot.slane %v3492, 4
  %v3494 = vadd.f32 %v3492, %v3493
  %v3495 = vrot.slane %v3494, 2
  %v3496 = vadd.f32 %v3494, %v3495
  %v3497 = vrot.slane %v3496, 1
  %v3498 = vadd.f32 %v3496, %v3497
  %v3499 = vsel %vm761, %v3479, 0.0
  %v3500 = vrot.slane %v3499, 4
  %v3501 = vadd.f32 %v3499, %v3500
  %v3502 = vrot.slane %v3501, 2
  %v3503 = vadd.f32 %v3501, %v3502
  %v3504 = vrot.slane %v3503, 1
  %v3505 = vadd.f32 %v3503, %v3504
  %v3506 = vsel %vm761, %v3481, 0.0
  %v3507 = vrot.slane %v3506, 4
  %v3508 = vadd.f32 %v3506, %v3507
  %v3509 = vrot.slane %v3508, 2
  %v3510 = vadd.f32 %v3508, %v3509
  %v3511 = vrot.slane %v3510, 1
  %v3512 = vadd.f32 %v3510, %v3511
  %v3513 = vsel %vm761, %v3483, 0.0
  %v3514 = vrot.slane %v3513, 4
  %v3515 = vadd.f32 %v3513, %v3514
  %v3516 = vrot.slane %v3515, 2
  %v3517 = vadd.f32 %v3515, %v3516
  %v3518 = vrot.slane %v3517, 1
  %v3519 = vadd.f32 %v3517, %v3518
  %v3520 = vsel %vm761, %v3485, 0.0
  %v3521 = vrot.slane %v3520, 4
  %v3522 = vadd.f32 %v3520, %v3521
  %v3523 = vrot.slane %v3522, 2
  %v3524 = vadd.f32 %v3522, %v3523
  %v3525 = vrot.slane %v3524, 1
  %v3526 = vadd.f32 %v3524, %v3525
  %v3527 = vsel %vm761, %v3487, 0.0
  %v3528 = vrot.slane %v3527, 4
  %v3529 = vadd.f32 %v3527, %v3528
  %v3530 = vrot.slane %v3529, 2
  %v3531 = vadd.f32 %v3529, %v3530
  %v3532 = vrot.slane %v3531, 1
  %v3533 = vadd.f32 %v3531, %v3532
  %v3534 = vsel %vm761, %v3489, 0.0
  %v3535 = vrot.slane %v3534, 4
  %v3536 = vadd.f32 %v3534, %v3535
  %v3537 = vrot.slane %v3536, 2
  %v3538 = vadd.f32 %v3536, %v3537
  %v3539 = vrot.slane %v3538, 1
  %v3540 = vadd.f32 %v3538, %v3539
  %v3541 = vsel %vm761, %v3491, 0.0
  %v3542 = vrot.slane %v3541, 4
  %v3543 = vadd.f32 %v3541, %v3542
  %v3544 = vrot.slane %v3543, 2
  %v3545 = vadd.f32 %v3543, %v3544
  %v3546 = vrot.slane %v3545, 1
  %v3547 = vadd.f32 %v3545, %v3546
  %v3548 = vrcp.pop %v3498
  %v3549 = vmul.f32 %v3477, %v3548
  %v3550 = vrcp.pop %v3505
  %v3551 = vmul.f32 %v3479, %v3550
  %v3552 = vrcp.pop %v3512
  %v3553 = vmul.f32 %v3481, %v3552
  %v3554 = vrcp.pop %v3519
  %v3555 = vmul.f32 %v3483, %v3554
  %v3556 = vrcp.pop %v3526
  %v3557 = vmul.f32 %v3485, %v3556
  %v3558 = vrcp.pop %v3533
  %v3559 = vmul.f32 %v3487, %v3558
  %v3560 = vrcp.pop %v3540
  %v3561 = vmul.f32 %v3489, %v3560
  %v3562 = vrcp.pop %v3547
  %v3563 = vmul.f32 %v3491, %v3562
  %v3564 = vld [vmem:[%s3] sm:$0xff]
  %v3565 = vld [vmem:[%s3 + $0x8] sm:$0xff]
  %v3566 = vld [vmem:[%s3 + $0x10] sm:$0xff]
  %v3567 = vld [vmem:[%s3 + $0x18] sm:$0xff]
  %v3568 = vld [vmem:[%s3 + $0x20] sm:$0xff]
  %v3569 = vld [vmem:[%s3 + $0x28] sm:$0xff]
  %v3570 = vld [vmem:[%s3 + $0x30] sm:$0xff]
  %v3571 = vld [vmem:[%s3 + $0x38] sm:$0xff]
  %3573 = vset.pattern.permute.xlu0 0
  %3574 = vperm.xlu0 %3573, %v3549
  %v3575 = vpop.permute.xlu0 %3574
  %3578 = vset.pattern.permute.xlu0 0
  %3579 = vperm.xlu0 %3578, %v3551
  %v3580 = vpop.permute.xlu0 %3579
  %3583 = vset.pattern.permute.xlu0 0
  %3584 = vperm.xlu0 %3583, %v3553
  %v3585 = vpop.permute.xlu0 %3584
  %3588 = vset.pattern.permute.xlu0 0
  %3589 = vperm.xlu0 %3588, %v3555
  %v3590 = vpop.permute.xlu0 %3589
  %3593 = vset.pattern.permute.xlu0 0
  %3594 = vperm.xlu0 %3593, %v3557
  %v3595 = vpop.permute.xlu0 %3594
  %3598 = vset.pattern.permute.xlu0 0
  %3599 = vperm.xlu0 %3598, %v3559
  %v3600 = vpop.permute.xlu0 %3599
  %3603 = vset.pattern.permute.xlu0 0
  %3604 = vperm.xlu0 %3603, %v3561
  %v3605 = vpop.permute.xlu0 %3604
  %3608 = vset.pattern.permute.xlu0 0
  %3609 = vperm.xlu0 %3608, %v3563
  %v3610 = vpop.permute.xlu0 %3609
  %v3612 = vmul.f32 %v3575, %v3564
  %v3613 = vmul.f32 %v3580, %v3565
  %v3614 = vmul.f32 %v3585, %v3566
  %v3615 = vmul.f32 %v3590, %v3567
  %v3616 = vmul.f32 %v3595, %v3568
  %v3617 = vmul.f32 %v3600, %v3569
  %v3618 = vmul.f32 %v3605, %v3570
  %v3619 = vmul.f32 %v3610, %v3571
  %v3620 = vrot.slane %v3612, 4
  %v3621 = vadd.f32 %v3612, %v3620
  %v3622 = vrot.slane %v3621, 2
  %v3623 = vadd.f32 %v3621, %v3622
  %v3624 = vrot.slane %v3623, 1
  %v3625 = vadd.f32 %v3623, %v3624
  %v3626 = vrot.slane %v3613, 4
  %v3627 = vadd.f32 %v3613, %v3626
  %v3628 = vrot.slane %v3627, 2
  %v3629 = vadd.f32 %v3627, %v3628
  %v3630 = vrot.slane %v3629, 1
  %v3631 = vadd.f32 %v3629, %v3630
  %v3632 = vrot.slane %v3614, 4
  %v3633 = vadd.f32 %v3614, %v3632
  %v3634 = vrot.slane %v3633, 2
  %v3635 = vadd.f32 %v3633, %v3634
  %v3636 = vrot.slane %v3635, 1
  %v3637 = vadd.f32 %v3635, %v3636
  %v3638 = vrot.slane %v3615, 4
  %v3639 = vadd.f32 %v3615, %v3638
  %v3640 = vrot.slane %v3639, 2
  %v3641 = vadd.f32 %v3639, %v3640
  %v3642 = vrot.slane %v3641, 1
  %v3643 = vadd.f32 %v3641, %v3642
  %v3644 = vrot.slane %v3616, 4
  %v3645 = vadd.f32 %v3616, %v3644
  %v3646 = vrot.slane %v3645, 2
  %v3647 = vadd.f32 %v3645, %v3646
  %v3648 = vrot.slane %v3647, 1
  %v3649 = vadd.f32 %v3647, %v3648
  %v3650 = vrot.slane %v3617, 4
  %v3651 = vadd.f32 %v3617, %v3650
  %v3652 = vrot.slane %v3651, 2
  %v3653 = vadd.f32 %v3651, %v3652
  %v3654 = vrot.slane %v3653, 1
  %v3655 = vadd.f32 %v3653, %v3654
  %v3656 = vrot.slane %v3618, 4
  %v3657 = vadd.f32 %v3618, %v3656
  %v3658 = vrot.slane %v3657, 2
  %v3659 = vadd.f32 %v3657, %v3658
  %v3660 = vrot.slane %v3659, 1
  %v3661 = vadd.f32 %v3659, %v3660
  %v3662 = vrot.slane %v3619, 4
  %v3663 = vadd.f32 %v3619, %v3662
  %v3664 = vrot.slane %v3663, 2
  %v3665 = vadd.f32 %v3663, %v3664
  %v3666 = vrot.slane %v3665, 1
  %v3667 = vadd.f32 %v3665, %v3666
  %v3676 = vsel %vm1026, %v3631, %v3625
  %v3677 = vsel %vm1028, %v3637, %v3676
  %v3678 = vsel %vm1030, %v3643, %v3677
  %v3679 = vsel %vm1032, %v3649, %v3678
  %v3680 = vsel %vm1034, %v3655, %v3679
  %v3681 = vsel %vm1036, %v3661, %v3680
  %v3682 = vsel %vm1038, %v3667, %v3681
  %v3684 = vld [vmem:[%s9] sm:$0xff]
  %v3685 = vld [vmem:[%s9 + $0x8] sm:$0xff]
  %v3686 = vld [vmem:[%s9 + $0x10] sm:$0xff]
  %v3687 = vld [vmem:[%s9 + $0x18] sm:$0xff]
  %v3688 = vld [vmem:[%s9 + $0x20] sm:$0xff]
  %v3689 = vld [vmem:[%s9 + $0x28] sm:$0xff]
  %v3690 = vld [vmem:[%s9 + $0x30] sm:$0xff]
  %v3691 = vld [vmem:[%s9 + $0x38] sm:$0xff]
  %v3692 = vld [vmem:[%s9 + $0x40] sm:$0xff]
  %v3693 = vld [vmem:[%s9 + $0x48] sm:$0xff]
  %v3694 = vld [vmem:[%s9 + $0x50] sm:$0xff]
  %v3695 = vld [vmem:[%s9 + $0x58] sm:$0xff]
  %v3696 = vld [vmem:[%s9 + $0x60] sm:$0xff]
  %v3697 = vld [vmem:[%s9 + $0x68] sm:$0xff]
  %v3698 = vld [vmem:[%s9 + $0x70] sm:$0xff]
  %v3699 = vld [vmem:[%s9 + $0x78] sm:$0xff]
  %v3700 = vld [vmem:[%s9 + $0x80] sm:$0xff]
  %v3701 = vld [vmem:[%s9 + $0x88] sm:$0xff]
  %v3702 = vld [vmem:[%s9 + $0x90] sm:$0xff]
  %v3703 = vld [vmem:[%s9 + $0x98] sm:$0xff]
  %v3704 = vld [vmem:[%s9 + $0xa0] sm:$0xff]
  %v3705 = vld [vmem:[%s9 + $0xa8] sm:$0xff]
  %v3706 = vld [vmem:[%s9 + $0xb0] sm:$0xff]
  %v3707 = vld [vmem:[%s9 + $0xb8] sm:$0xff]
  %v3708 = vld [vmem:[%s9 + $0xc0] sm:$0xff]
  %v3709 = vld [vmem:[%s9 + $0xc8] sm:$0xff]
  %v3710 = vld [vmem:[%s9 + $0xd0] sm:$0xff]
  %v3711 = vld [vmem:[%s9 + $0xd8] sm:$0xff]
  %v3712 = vld [vmem:[%s9 + $0xe0] sm:$0xff]
  %v3713 = vld [vmem:[%s9 + $0xe8] sm:$0xff]
  %v3714 = vld [vmem:[%s9 + $0xf0] sm:$0xff]
  %v3715 = vld [vmem:[%s9 + $0xf8] sm:$0xff]
  %3716 = vmatprep.subr.mxu0 0.0
  %3717 = vmatpush1.msra.mxu0 %v3699
  %3718 = vmatprep.subr.mxu0 0.0
  %3719 = vmatpush1.msra.mxu0 %v3698
  %3720 = vmatprep.subr.mxu0 0.0
  %3721 = vmatpush1.msra.mxu0 %v3697
  %3722 = vmatprep.subr.mxu0 0.0
  %3723 = vmatpush1.msra.mxu0 %v3696
  %3724 = vmatprep.subr.mxu0 0.0
  %3725 = vmatpush1.msra.mxu0 %v3695
  %3726 = vmatprep.subr.mxu0 0.0
  %3727 = vmatpush1.msra.mxu0 %v3694
  %3728 = vmatprep.subr.mxu0 0.0
  %3729 = vmatpush1.msra.mxu0 %v3693
  %3730 = vmatprep.subr.mxu0 0.0
  %3731 = vmatpush1.msra.mxu0 %v3692
  %3732 = vmatprep.subr.mxu0 0.0
  %3733 = vmatpush1.msra.mxu0 %v3691
  %3734 = vmatprep.subr.mxu0 0.0
  %3735 = vmatpush1.msra.mxu0 %v3690
  %3736 = vmatprep.subr.mxu0 0.0
  %3737 = vmatpush1.msra.mxu0 %v3689
  %3738 = vmatprep.subr.mxu0 0.0
  %3739 = vmatpush1.msra.mxu0 %v3688
  %3740 = vmatprep.subr.mxu0 0.0
  %3741 = vmatpush1.msra.mxu0 %v3687
  %3742 = vmatprep.subr.mxu0 0.0
  %3743 = vmatpush1.msra.mxu0 %v3686
  %3744 = vmatprep.subr.mxu0 0.0
  %3745 = vmatpush1.msra.mxu0 %v3685
  %3746 = vmatprep.subr.mxu0 0.0
  %3747 = vmatpush1.msra.mxu0 %v3684
  %3748 = vmatprep.subr.mxu0 0.0
  %3749 = vmatpush2.msra.mxu0 %v3715
  %3750 = vmatprep.subr.mxu0 0.0
  %3751 = vmatpush2.msra.mxu0 %v3714
  %3752 = vmatprep.subr.mxu0 0.0
  %3753 = vmatpush2.msra.mxu0 %v3713
  %3754 = vmatprep.subr.mxu0 0.0
  %3755 = vmatpush2.msra.mxu0 %v3712
  %3756 = vmatprep.subr.mxu0 0.0
  %3757 = vmatpush2.msra.mxu0 %v3711
  %3758 = vmatprep.subr.mxu0 0.0
  %3759 = vmatpush2.msra.mxu0 %v3710
  %3760 = vmatprep.subr.mxu0 0.0
  %3761 = vmatpush2.msra.mxu0 %v3709
  %3762 = vmatprep.subr.mxu0 0.0
  %3763 = vmatpush2.msra.mxu0 %v3708
  %3764 = vmatprep.subr.mxu0 0.0
  %3765 = vmatpush2.msra.mxu0 %v3707
  %3766 = vmatprep.subr.mxu0 0.0
  %3767 = vmatpush2.msra.mxu0 %v3706
  %3768 = vmatprep.subr.mxu0 0.0
  %3769 = vmatpush2.msra.mxu0 %v3705
  %3770 = vmatprep.subr.mxu0 0.0
  %3771 = vmatpush2.msra.mxu0 %v3704
  %3772 = vmatprep.subr.mxu0 0.0
  %3773 = vmatpush2.msra.mxu0 %v3703
  %3774 = vmatprep.subr.mxu0 0.0
  %3775 = vmatpush2.msra.mxu0 %v3702
  %3776 = vmatprep.subr.mxu0 0.0
  %3777 = vmatpush2.msra.mxu0 %v3701
  %3778 = vmatprep.subr.mxu0 0.0
  %3779 = vmatpush2.msra.mxu0 %v3700
  %3780 = vmatprep.mubr.f32.mxu0 %v3273
  %3781 = vmatmul.mubr.f32.gmra.mxu0 %v3682
  %v3782 = vpop.f32.mrf.mxu0
  %v3783 = vadd.f32 0.0, %v3782
  %v3784 = vpop.f32.mrf.mxu0
  %3785 = vdwg.mxu0
  %v3786 = vtanh.pop %v3783
  %v3788 = vcombine.high %v3786, %v3786
  %v3790 = vunpack.c.l.s4 1966171168
  %v3791 = vunpack.c.0.s8 %v3790
  %v3792 = vlaneseq
  %v3793 = vshrl.u32 %v3792, 7
  %v3794 = vsub.s32 %v3791, %v3793
  %v3795 = vrot.slane %v3786, %v3794
  %v3797 = vunpack.c.l.s4 1966171168
  %v3798 = vunpack.c.0.s8 %v3797
  %v3799 = vlaneseq
  %v3800 = vshrl.u32 %v3799, 7
  %v3801 = vsub.s32 %v3798, %v3800
  %v3802 = vrot.slane %v3788, %v3801
  %v3803 = vcombine.high %v3795, %v3795
  %v3804 = vcombine.high %v3802, %v3802
  %v3806 = vunpack.c.l.s4 1966171168
  %v3807 = vunpack.c.0.s8 %v3806
  %v3808 = vlaneseq
  %v3809 = vshrl.u32 %v3808, 7
  %v3810 = vsub.s32 %v3807, %v3809
  %v3811 = vrot.slane %v3795, %v3810
  %v3813 = vunpack.c.l.s4 1966171168
  %v3814 = vunpack.c.0.s8 %v3813
  %v3815 = vlaneseq
  %v3816 = vshrl.u32 %v3815, 7
  %v3817 = vsub.s32 %v3814, %v3816
  %v3818 = vrot.slane %v3802, %v3817
  %v3820 = vunpack.c.l.s4 1966171168
  %v3821 = vunpack.c.0.s8 %v3820
  %v3822 = vlaneseq
  %v3823 = vshrl.u32 %v3822, 7
  %v3824 = vsub.s32 %v3821, %v3823
  %v3825 = vrot.slane %v3803, %v3824
  %v3827 = vunpack.c.l.s4 1966171168
  %v3828 = vunpack.c.0.s8 %v3827
  %v3829 = vlaneseq
  %v3830 = vshrl.u32 %v3829, 7
  %v3831 = vsub.s32 %v3828, %v3830
  %v3832 = vrot.slane %v3804, %v3831
  %v3833 = vcombine.high %v3811, %v3811
  %v3834 = vcombine.high %v3818, %v3818
  %v3835 = vcombine.high %v3825, %v3825
  %v3836 = vcombine.high %v3832, %v3832
  %3845 = vst [vmem:[%s10 + $0x3] sm:$0x1] %v3811
  %3846 = vst [vmem:[%s10 + $0xb] sm:$0x1] %v3825
  %3847 = vst [vmem:[%s10 + $0x13] sm:$0x1] %v3833
  %3848 = vst [vmem:[%s10 + $0x1b] sm:$0x1] %v3835
  %3849 = vst [vmem:[%s10 + $0x23] sm:$0x1] %v3818
  %3850 = vst [vmem:[%s10 + $0x2b] sm:$0x1] %v3832
  %3851 = vst [vmem:[%s10 + $0x33] sm:$0x1] %v3834
  %3852 = vst [vmem:[%s10 + $0x3b] sm:$0x1] %v3836
  %v3853 = vld [vmem:[#allocation2 + $0x80] sm:$0xff]
  %v3854 = vld [vmem:[#allocation2 + $0x88] sm:$0xff]
  %v3855 = vld [vmem:[#allocation2 + $0x90] sm:$0xff]
  %v3856 = vld [vmem:[#allocation2 + $0x98] sm:$0xff]
  %v3857 = vld [vmem:[%s8] sm:$0xff]
  %v3858 = vld [vmem:[%s8 + $0x8] sm:$0xff]
  %v3859 = vld [vmem:[%s8 + $0x10] sm:$0xff]
  %v3860 = vld [vmem:[%s8 + $0x18] sm:$0xff]
  %v3861 = vld [vmem:[%s8 + $0x20] sm:$0xff]
  %v3862 = vld [vmem:[%s8 + $0x28] sm:$0xff]
  %v3863 = vld [vmem:[%s8 + $0x30] sm:$0xff]
  %v3864 = vld [vmem:[%s8 + $0x38] sm:$0xff]
  %v3865 = vld [vmem:[%s8 + $0x40] sm:$0xff]
  %v3866 = vld [vmem:[%s8 + $0x48] sm:$0xff]
  %v3867 = vld [vmem:[%s8 + $0x50] sm:$0xff]
  %v3868 = vld [vmem:[%s8 + $0x58] sm:$0xff]
  %v3869 = vld [vmem:[%s8 + $0x60] sm:$0xff]
  %v3870 = vld [vmem:[%s8 + $0x68] sm:$0xff]
  %v3871 = vld [vmem:[%s8 + $0x70] sm:$0xff]
  %v3872 = vld [vmem:[%s8 + $0x78] sm:$0xff]
  %v3873 = vld [vmem:[%s8 + $0x80] sm:$0xff]
  %v3874 = vld [vmem:[%s8 + $0x88] sm:$0xff]
  %v3875 = vld [vmem:[%s8 + $0x90] sm:$0xff]
  %v3876 = vld [vmem:[%s8 + $0x98] sm:$0xff]
  %v3877 = vld [vmem:[%s8 + $0xa0] sm:$0xff]
  %v3878 = vld [vmem:[%s8 + $0xa8] sm:$0xff]
  %v3879 = vld [vmem:[%s8 + $0xb0] sm:$0xff]
  %v3880 = vld [vmem:[%s8 + $0xb8] sm:$0xff]
  %v3881 = vld [vmem:[%s8 + $0xc0] sm:$0xff]
  %v3882 = vld [vmem:[%s8 + $0xc8] sm:$0xff]
  %v3883 = vld [vmem:[%s8 + $0xd0] sm:$0xff]
  %v3884 = vld [vmem:[%s8 + $0xd8] sm:$0xff]
  %v3885 = vld [vmem:[%s8 + $0xe0] sm:$0xff]
  %v3886 = vld [vmem:[%s8 + $0xe8] sm:$0xff]
  %v3887 = vld [vmem:[%s8 + $0xf0] sm:$0xff]
  %v3888 = vld [vmem:[%s8 + $0xf8] sm:$0xff]
  %v3889 = vld [vmem:[%s8 + $0x100] sm:$0xff]
  %v3890 = vld [vmem:[%s8 + $0x108] sm:$0xff]
  %v3891 = vld [vmem:[%s8 + $0x110] sm:$0xff]
  %v3892 = vld [vmem:[%s8 + $0x118] sm:$0xff]
  %v3893 = vld [vmem:[%s8 + $0x120] sm:$0xff]
  %v3894 = vld [vmem:[%s8 + $0x128] sm:$0xff]
  %v3895 = vld [vmem:[%s8 + $0x130] sm:$0xff]
  %v3896 = vld [vmem:[%s8 + $0x138] sm:$0xff]
  %v3897 = vld [vmem:[%s8 + $0x140] sm:$0xff]
  %v3898 = vld [vmem:[%s8 + $0x148] sm:$0xff]
  %v3899 = vld [vmem:[%s8 + $0x150] sm:$0xff]
  %v3900 = vld [vmem:[%s8 + $0x158] sm:$0xff]
  %v3901 = vld [vmem:[%s8 + $0x160] sm:$0xff]
  %v3902 = vld [vmem:[%s8 + $0x168] sm:$0xff]
  %v3903 = vld [vmem:[%s8 + $0x170] sm:$0xff]
  %v3904 = vld [vmem:[%s8 + $0x178] sm:$0xff]
  %v3905 = vld [vmem:[%s8 + $0x180] sm:$0xff]
  %v3906 = vld [vmem:[%s8 + $0x188] sm:$0xff]
  %v3907 = vld [vmem:[%s8 + $0x190] sm:$0xff]
  %v3908 = vld [vmem:[%s8 + $0x198] sm:$0xff]
  %v3909 = vld [vmem:[%s8 + $0x1a0] sm:$0xff]
  %v3910 = vld [vmem:[%s8 + $0x1a8] sm:$0xff]
  %v3911 = vld [vmem:[%s8 + $0x1b0] sm:$0xff]
  %v3912 = vld [vmem:[%s8 + $0x1b8] sm:$0xff]
  %v3913 = vld [vmem:[%s8 + $0x1c0] sm:$0xff]
  %v3914 = vld [vmem:[%s8 + $0x1c8] sm:$0xff]
  %v3915 = vld [vmem:[%s8 + $0x1d0] sm:$0xff]
  %v3916 = vld [vmem:[%s8 + $0x1d8] sm:$0xff]
  %v3917 = vld [vmem:[%s8 + $0x1e0] sm:$0xff]
  %v3918 = vld [vmem:[%s8 + $0x1e8] sm:$0xff]
  %v3919 = vld [vmem:[%s8 + $0x1f0] sm:$0xff]
  %v3920 = vld [vmem:[%s8 + $0x1f8] sm:$0xff]
  %v3921 = vld [vmem:[%s8 + $0x200] sm:$0xff]
  %v3922 = vld [vmem:[%s8 + $0x208] sm:$0xff]
  %v3923 = vld [vmem:[%s8 + $0x210] sm:$0xff]
  %v3924 = vld [vmem:[%s8 + $0x218] sm:$0xff]
  %v3925 = vld [vmem:[%s8 + $0x220] sm:$0xff]
  %v3926 = vld [vmem:[%s8 + $0x228] sm:$0xff]
  %v3927 = vld [vmem:[%s8 + $0x230] sm:$0xff]
  %v3928 = vld [vmem:[%s8 + $0x238] sm:$0xff]
  %v3929 = vld [vmem:[%s8 + $0x240] sm:$0xff]
  %v3930 = vld [vmem:[%s8 + $0x248] sm:$0xff]
  %v3931 = vld [vmem:[%s8 + $0x250] sm:$0xff]
  %v3932 = vld [vmem:[%s8 + $0x258] sm:$0xff]
  %v3933 = vld [vmem:[%s8 + $0x260] sm:$0xff]
  %v3934 = vld [vmem:[%s8 + $0x268] sm:$0xff]
  %v3935 = vld [vmem:[%s8 + $0x270] sm:$0xff]
  %v3936 = vld [vmem:[%s8 + $0x278] sm:$0xff]
  %v3937 = vld [vmem:[%s8 + $0x280] sm:$0xff]
  %v3938 = vld [vmem:[%s8 + $0x288] sm:$0xff]
  %v3939 = vld [vmem:[%s8 + $0x290] sm:$0xff]
  %v3940 = vld [vmem:[%s8 + $0x298] sm:$0xff]
  %v3941 = vld [vmem:[%s8 + $0x2a0] sm:$0xff]
  %v3942 = vld [vmem:[%s8 + $0x2a8] sm:$0xff]
  %v3943 = vld [vmem:[%s8 + $0x2b0] sm:$0xff]
  %v3944 = vld [vmem:[%s8 + $0x2b8] sm:$0xff]
  %v3945 = vld [vmem:[%s8 + $0x2c0] sm:$0xff]
  %v3946 = vld [vmem:[%s8 + $0x2c8] sm:$0xff]
  %v3947 = vld [vmem:[%s8 + $0x2d0] sm:$0xff]
  %v3948 = vld [vmem:[%s8 + $0x2d8] sm:$0xff]
  %v3949 = vld [vmem:[%s8 + $0x2e0] sm:$0xff]
  %v3950 = vld [vmem:[%s8 + $0x2e8] sm:$0xff]
  %v3951 = vld [vmem:[%s8 + $0x2f0] sm:$0xff]
  %v3952 = vld [vmem:[%s8 + $0x2f8] sm:$0xff]
  %v3953 = vld [vmem:[%s8 + $0x300] sm:$0xff]
  %v3954 = vld [vmem:[%s8 + $0x308] sm:$0xff]
  %v3955 = vld [vmem:[%s8 + $0x310] sm:$0xff]
  %v3956 = vld [vmem:[%s8 + $0x318] sm:$0xff]
  %v3957 = vld [vmem:[%s8 + $0x320] sm:$0xff]
  %v3958 = vld [vmem:[%s8 + $0x328] sm:$0xff]
  %v3959 = vld [vmem:[%s8 + $0x330] sm:$0xff]
  %v3960 = vld [vmem:[%s8 + $0x338] sm:$0xff]
  %v3961 = vld [vmem:[%s8 + $0x340] sm:$0xff]
  %v3962 = vld [vmem:[%s8 + $0x348] sm:$0xff]
  %v3963 = vld [vmem:[%s8 + $0x350] sm:$0xff]
  %v3964 = vld [vmem:[%s8 + $0x358] sm:$0xff]
  %v3965 = vld [vmem:[%s8 + $0x360] sm:$0xff]
  %v3966 = vld [vmem:[%s8 + $0x368] sm:$0xff]
  %v3967 = vld [vmem:[%s8 + $0x370] sm:$0xff]
  %v3968 = vld [vmem:[%s8 + $0x378] sm:$0xff]
  %v3969 = vld [vmem:[%s8 + $0x380] sm:$0xff]
  %v3970 = vld [vmem:[%s8 + $0x388] sm:$0xff]
  %v3971 = vld [vmem:[%s8 + $0x390] sm:$0xff]
  %v3972 = vld [vmem:[%s8 + $0x398] sm:$0xff]
  %v3973 = vld [vmem:[%s8 + $0x3a0] sm:$0xff]
  %v3974 = vld [vmem:[%s8 + $0x3a8] sm:$0xff]
  %v3975 = vld [vmem:[%s8 + $0x3b0] sm:$0xff]
  %v3976 = vld [vmem:[%s8 + $0x3b8] sm:$0xff]
  %v3977 = vld [vmem:[%s8 + $0x3c0] sm:$0xff]
  %v3978 = vld [vmem:[%s8 + $0x3c8] sm:$0xff]
  %v3979 = vld [vmem:[%s8 + $0x3d0] sm:$0xff]
  %v3980 = vld [vmem:[%s8 + $0x3d8] sm:$0xff]
  %v3981 = vld [vmem:[%s8 + $0x3e0] sm:$0xff]
  %v3982 = vld [vmem:[%s8 + $0x3e8] sm:$0xff]
  %v3983 = vld [vmem:[%s8 + $0x3f0] sm:$0xff]
  %v3984 = vld [vmem:[%s8 + $0x3f8] sm:$0xff]
  %3985 = vmatprep.subr.mxu0 %v3918
  %3986 = vmatpush1.msra.mxu0 %v3917
  %3987 = vmatprep.subr.mxu0 %v3914
  %3988 = vmatpush1.msra.mxu0 %v3913
  %3989 = vmatprep.subr.mxu0 %v3910
  %3990 = vmatpush1.msra.mxu0 %v3909
  %3991 = vmatprep.subr.mxu0 %v3906
  %3992 = vmatpush1.msra.mxu0 %v3905
  %3993 = vmatprep.subr.mxu0 %v3902
  %3994 = vmatpush1.msra.mxu0 %v3901
  %3995 = vmatprep.subr.mxu0 %v3898
  %3996 = vmatpush1.msra.mxu0 %v3897
  %3997 = vmatprep.subr.mxu0 %v3894
  %3998 = vmatpush1.msra.mxu0 %v3893
  %3999 = vmatprep.subr.mxu0 %v3890
  %4000 = vmatpush1.msra.mxu0 %v3889
  %4001 = vmatprep.subr.mxu0 %v3886
  %4002 = vmatpush1.msra.mxu0 %v3885
  %4003 = vmatprep.subr.mxu0 %v3882
  %4004 = vmatpush1.msra.mxu0 %v3881
  %4005 = vmatprep.subr.mxu0 %v3878
  %4006 = vmatpush1.msra.mxu0 %v3877
  %4007 = vmatprep.subr.mxu0 %v3874
  %4008 = vmatpush1.msra.mxu0 %v3873
  %4009 = vmatprep.subr.mxu0 %v3870
  %4010 = vmatpush1.msra.mxu0 %v3869
  %4011 = vmatprep.subr.mxu0 %v3866
  %4012 = vmatpush1.msra.mxu0 %v3865
  %4013 = vmatprep.subr.mxu0 %v3862
  %4014 = vmatpush1.msra.mxu0 %v3861
  %4015 = vmatprep.subr.mxu0 %v3858
  %4016 = vmatpush1.msra.mxu0 %v3857
  %4017 = vmatprep.subr.mxu0 %v3982
  %4018 = vmatpush2.msra.mxu0 %v3981
  %4019 = vmatprep.subr.mxu0 %v3978
  %4020 = vmatpush2.msra.mxu0 %v3977
  %4021 = vmatprep.subr.mxu0 %v3974
  %4022 = vmatpush2.msra.mxu0 %v3973
  %4023 = vmatprep.subr.mxu0 %v3970
  %4024 = vmatpush2.msra.mxu0 %v3969
  %4025 = vmatprep.subr.mxu0 %v3966
  %4026 = vmatpush2.msra.mxu0 %v3965
  %4027 = vmatprep.subr.mxu0 %v3962
  %4028 = vmatpush2.msra.mxu0 %v3961
  %4029 = vmatprep.subr.mxu0 %v3958
  %4030 = vmatpush2.msra.mxu0 %v3957
  %4031 = vmatprep.subr.mxu0 %v3954
  %4032 = vmatpush2.msra.mxu0 %v3953
  %4033 = vmatprep.subr.mxu0 %v3950
  %4034 = vmatpush2.msra.mxu0 %v3949
  %4035 = vmatprep.subr.mxu0 %v3946
  %4036 = vmatpush2.msra.mxu0 %v3945
  %4037 = vmatprep.subr.mxu0 %v3942
  %4038 = vmatpush2.msra.mxu0 %v3941
  %4039 = vmatprep.subr.mxu0 %v3938
  %4040 = vmatpush2.msra.mxu0 %v3937
  %4041 = vmatprep.subr.mxu0 %v3934
  %4042 = vmatpush2.msra.mxu0 %v3933
  %4043 = vmatprep.subr.mxu0 %v3930
  %4044 = vmatpush2.msra.mxu0 %v3929
  %4045 = vmatprep.subr.mxu0 %v3926
  %4046 = vmatpush2.msra.mxu0 %v3925
  %4047 = vmatprep.subr.mxu0 %v3922
  %4048 = vmatpush2.msra.mxu0 %v3921
  %4049 = vmatprep.mubr.f32.mxu0 %v3273
  %4050 = vmatmul.mubr.f32.gmra.mxu0 %v3786
  %v4051 = vpop.f32.mrf.mxu0
  %v4052 = vadd.f32 0.0, %v4051
  %v4053 = vpop.f32.mrf.mxu0
  %v4054 = vadd.f32 0.0, %v4053
  %4055 = vdwg.mxu0
  %4056 = vmatprep.subr.mxu0 %v3920
  %4057 = vmatpush1.msra.mxu0 %v3919
  %4058 = vmatprep.subr.mxu0 %v3916
  %4059 = vmatpush1.msra.mxu0 %v3915
  %4060 = vmatprep.subr.mxu0 %v3912
  %4061 = vmatpush1.msra.mxu0 %v3911
  %4062 = vmatprep.subr.mxu0 %v3908
  %4063 = vmatpush1.msra.mxu0 %v3907
  %4064 = vmatprep.subr.mxu0 %v3904
  %4065 = vmatpush1.msra.mxu0 %v3903
  %4066 = vmatprep.subr.mxu0 %v3900
  %4067 = vmatpush1.msra.mxu0 %v3899
  %4068 = vmatprep.subr.mxu0 %v3896
  %4069 = vmatpush1.msra.mxu0 %v3895
  %4070 = vmatprep.subr.mxu0 %v3892
  %4071 = vmatpush1.msra.mxu0 %v3891
  %4072 = vmatprep.subr.mxu0 %v3888
  %4073 = vmatpush1.msra.mxu0 %v3887
  %4074 = vmatprep.subr.mxu0 %v3884
  %4075 = vmatpush1.msra.mxu0 %v3883
  %4076 = vmatprep.subr.mxu0 %v3880
  %4077 = vmatpush1.msra.mxu0 %v3879
  %4078 = vmatprep.subr.mxu0 %v3876
  %4079 = vmatpush1.msra.mxu0 %v3875
  %4080 = vmatprep.subr.mxu0 %v3872
  %4081 = vmatpush1.msra.mxu0 %v3871
  %4082 = vmatprep.subr.mxu0 %v3868
  %4083 = vmatpush1.msra.mxu0 %v3867
  %4084 = vmatprep.subr.mxu0 %v3864
  %4085 = vmatpush1.msra.mxu0 %v3863
  %4086 = vmatprep.subr.mxu0 %v3860
  %4087 = vmatpush1.msra.mxu0 %v3859
  %4088 = vmatprep.subr.mxu0 %v3984
  %4089 = vmatpush2.msra.mxu0 %v3983
  %4090 = vmatprep.subr.mxu0 %v3980
  %4091 = vmatpush2.msra.mxu0 %v3979
  %4092 = vmatprep.subr.mxu0 %v3976
  %4093 = vmatpush2.msra.mxu0 %v3975
  %4094 = vmatprep.subr.mxu0 %v3972
  %4095 = vmatpush2.msra.mxu0 %v3971
  %4096 = vmatprep.subr.mxu0 %v3968
  %4097 = vmatpush2.msra.mxu0 %v3967
  %4098 = vmatprep.subr.mxu0 %v3964
  %4099 = vmatpush2.msra.mxu0 %v3963
  %4100 = vmatprep.subr.mxu0 %v3960
  %4101 = vmatpush2.msra.mxu0 %v3959
  %4102 = vmatprep.subr.mxu0 %v3956
  %4103 = vmatpush2.msra.mxu0 %v3955
  %4104 = vmatprep.subr.mxu0 %v3952
  %4105 = vmatpush2.msra.mxu0 %v3951
  %4106 = vmatprep.subr.mxu0 %v3948
  %4107 = vmatpush2.msra.mxu0 %v3947
  %4108 = vmatprep.subr.mxu0 %v3944
  %4109 = vmatpush2.msra.mxu0 %v3943
  %4110 = vmatprep.subr.mxu0 %v3940
  %4111 = vmatpush2.msra.mxu0 %v3939
  %4112 = vmatprep.subr.mxu0 %v3936
  %4113 = vmatpush2.msra.mxu0 %v3935
  %4114 = vmatprep.subr.mxu0 %v3932
  %4115 = vmatpush2.msra.mxu0 %v3931
  %4116 = vmatprep.subr.mxu0 %v3928
  %4117 = vmatpush2.msra.mxu0 %v3927
  %4118 = vmatprep.subr.mxu0 %v3924
  %4119 = vmatpush2.msra.mxu0 %v3923
  %4120 = vmatprep.mubr.f32.mxu0 %v3273
  %4121 = vmatmul.mubr.f32.gmra.mxu0 %v3786
  %v4122 = vpop.f32.mrf.mxu0
  %v4123 = vadd.f32 0.0, %v4122
  %v4124 = vpop.f32.mrf.mxu0
  %v4125 = vadd.f32 0.0, %v4124
  %4126 = vdwg.mxu0
  %v4127 = vadd.f32 %v3853, %v4052
  %v4128 = vadd.f32 %v3854, %v4054
  %v4129 = vadd.f32 %v3855, %v4123
  %v4130 = vadd.f32 %v3856, %v4125
  %v4131 = vxor.u32 %v4127, 2147483648
  %v4132 = vmul.f32 %v4131, 1.442695
  %v4133 = vpow.pop %v4132
  %v4134 = vadd.f32 %v4133, 1.0
  %v4135 = vrcp.pop %v4134
  %v4136 = vmul.f32 1.0, %v4135
  %v4137 = vxor.u32 %v4128, 2147483648
  %v4138 = vmul.f32 %v4137, 1.442695
  %v4139 = vpow.pop %v4138
  %v4140 = vadd.f32 %v4139, 1.0
  %v4141 = vrcp.pop %v4140
  %v4142 = vmul.f32 1.0, %v4141
  %v4143 = vtanh.pop %v4129
  %v4144 = vxor.u32 %v4130, 2147483648
  %v4145 = vmul.f32 %v4144, 1.442695
  %v4146 = vpow.pop %v4145
  %v4147 = vadd.f32 %v4146, 1.0
  %v4148 = vrcp.pop %v4147
  %v4149 = vmul.f32 1.0, %v4148
  %v4150 = vmul.f32 %v4142, %v3271
  %v4151 = vmul.f32 %v4136, %v4143
  %v4152 = vadd.f32 %v4150, %v4151
  %v4153 = vtanh.pop %v4152
  %v4154 = vmul.f32 %v4149, %v4153
  %v4156 = vcombine.high %v4154, %v4154
  %v4158 = vunpack.c.l.s4 1966171168
  %v4159 = vunpack.c.0.s8 %v4158
  %v4160 = vlaneseq
  %v4161 = vshrl.u32 %v4160, 7
  %v4162 = vsub.s32 %v4159, %v4161
  %v4163 = vrot.slane %v4154, %v4162
  %v4165 = vunpack.c.l.s4 1966171168
  %v4166 = vunpack.c.0.s8 %v4165
  %v4167 = vlaneseq
  %v4168 = vshrl.u32 %v4167, 7
  %v4169 = vsub.s32 %v4166, %v4168
  %v4170 = vrot.slane %v4156, %v4169
  %v4171 = vcombine.high %v4163, %v4163
  %v4172 = vcombine.high %v4170, %v4170
  %v4174 = vunpack.c.l.s4 1966171168
  %v4175 = vunpack.c.0.s8 %v4174
  %v4176 = vlaneseq
  %v4177 = vshrl.u32 %v4176, 7
  %v4178 = vsub.s32 %v4175, %v4177
  %v4179 = vrot.slane %v4163, %v4178
  %v4181 = vunpack.c.l.s4 1966171168
  %v4182 = vunpack.c.0.s8 %v4181
  %v4183 = vlaneseq
  %v4184 = vshrl.u32 %v4183, 7
  %v4185 = vsub.s32 %v4182, %v4184
  %v4186 = vrot.slane %v4170, %v4185
  %v4188 = vunpack.c.l.s4 1966171168
  %v4189 = vunpack.c.0.s8 %v4188
  %v4190 = vlaneseq
  %v4191 = vshrl.u32 %v4190, 7
  %v4192 = vsub.s32 %v4189, %v4191
  %v4193 = vrot.slane %v4171, %v4192
  %v4195 = vunpack.c.l.s4 1966171168
  %v4196 = vunpack.c.0.s8 %v4195
  %v4197 = vlaneseq
  %v4198 = vshrl.u32 %v4197, 7
  %v4199 = vsub.s32 %v4196, %v4198
  %v4200 = vrot.slane %v4172, %v4199
  %v4201 = vcombine.high %v4179, %v4179
  %v4202 = vcombine.high %v4186, %v4186
  %v4203 = vcombine.high %v4193, %v4193
  %v4204 = vcombine.high %v4200, %v4200
  %v4205 = vld [vmem:[%s4] sm:$0xff]
  %v4206 = vld [vmem:[%s4 + $0x8] sm:$0xff]
  %v4207 = vld [vmem:[%s4 + $0x10] sm:$0xff]
  %v4208 = vld [vmem:[%s4 + $0x18] sm:$0xff]
  %v4209 = vld [vmem:[%s4 + $0x20] sm:$0xff]
  %v4210 = vld [vmem:[%s4 + $0x28] sm:$0xff]
  %v4211 = vld [vmem:[%s4 + $0x30] sm:$0xff]
  %v4212 = vld [vmem:[%s4 + $0x38] sm:$0xff]
  %v4213 = vlaneseq
  %v4214 = vshrl.u32 %v4213, 7
  %v4215 = vsub.s32 0, %v4214
  %v4216 = vrot.slane %v4179, %v4215
  %v4217 = vlaneseq
  %v4218 = vshrl.u32 %v4217, 7
  %v4219 = vsub.s32 0, %v4218
  %v4220 = vrot.slane %v4193, %v4219
  %v4221 = vlaneseq
  %v4222 = vshrl.u32 %v4221, 7
  %v4223 = vsub.s32 0, %v4222
  %v4224 = vrot.slane %v4201, %v4223
  %v4225 = vlaneseq
  %v4226 = vshrl.u32 %v4225, 7
  %v4227 = vsub.s32 0, %v4226
  %v4228 = vrot.slane %v4203, %v4227
  %v4229 = vlaneseq
  %v4230 = vshrl.u32 %v4229, 7
  %v4231 = vsub.s32 0, %v4230
  %v4232 = vrot.slane %v4186, %v4231
  %v4233 = vlaneseq
  %v4234 = vshrl.u32 %v4233, 7
  %v4235 = vsub.s32 0, %v4234
  %v4236 = vrot.slane %v4200, %v4235
  %v4237 = vlaneseq
  %v4238 = vshrl.u32 %v4237, 7
  %v4239 = vsub.s32 0, %v4238
  %v4240 = vrot.slane %v4202, %v4239
  %v4241 = vlaneseq
  %v4242 = vshrl.u32 %v4241, 7
  %v4243 = vsub.s32 0, %v4242
  %v4244 = vrot.slane %v4204, %v4243
  %v4253 = vmul.f32 %v4216, %v4205
  %v4254 = vmul.f32 %v4220, %v4206
  %v4255 = vmul.f32 %v4224, %v4207
  %v4256 = vmul.f32 %v4228, %v4208
  %v4257 = vmul.f32 %v4232, %v4209
  %v4258 = vmul.f32 %v4236, %v4210
  %v4259 = vmul.f32 %v4240, %v4211
  %v4260 = vmul.f32 %v4244, %v4212
  %4261 = vadd.xlane.f32.xlu0 %v4253
  %v4262 = vpop.xlane.xlu0 %4261
  %4263 = vadd.xlane.f32.xlu0 %v4254
  %v4264 = vpop.xlane.xlu0 %4263
  %4265 = vadd.xlane.f32.xlu0 %v4255
  %v4266 = vpop.xlane.xlu0 %4265
  %4267 = vadd.xlane.f32.xlu0 %v4256
  %v4268 = vpop.xlane.xlu0 %4267
  %4269 = vadd.xlane.f32.xlu0 %v4257
  %v4270 = vpop.xlane.xlu0 %4269
  %4271 = vadd.xlane.f32.xlu0 %v4258
  %v4272 = vpop.xlane.xlu0 %4271
  %4273 = vadd.xlane.f32.xlu0 %v4259
  %v4274 = vpop.xlane.xlu0 %4273
  %4275 = vadd.xlane.f32.xlu0 %v4260
  %v4276 = vpop.xlane.xlu0 %4275
  %v4277 = vld [vmem:[%s5] sm:$0xff]
  %v4278 = vld [vmem:[%s5 + $0x8] sm:$0xff]
  %v4279 = vld [vmem:[%s5 + $0x10] sm:$0xff]
  %v4280 = vld [vmem:[%s5 + $0x18] sm:$0xff]
  %v4281 = vld [vmem:[%s5 + $0x20] sm:$0xff]
  %v4282 = vld [vmem:[%s5 + $0x28] sm:$0xff]
  %v4283 = vld [vmem:[%s5 + $0x30] sm:$0xff]
  %v4284 = vld [vmem:[%s5 + $0x38] sm:$0xff]
  %v4285 = vadd.f32 %v4262, %v4277
  %v4286 = vadd.f32 %v4264, %v4278
  %v4287 = vadd.f32 %v4266, %v4279
  %v4288 = vadd.f32 %v4268, %v4280
  %v4289 = vadd.f32 %v4270, %v4281
  %v4290 = vadd.f32 %v4272, %v4282
  %v4291 = vadd.f32 %v4274, %v4283
  %v4292 = vadd.f32 %v4276, %v4284
  %v4293 = vsel %vm761, %v4285, -inf
  %v4294 = vrot.slane %v4293, 4
  %v4295 = vmax.f32 %v4293, %v4294
  %v4296 = vrot.slane %v4295, 2
  %v4297 = vmax.f32 %v4295, %v4296
  %v4298 = vrot.slane %v4297, 1
  %v4299 = vmax.f32 %v4297, %v4298
  %v4300 = vsel %vm761, %v4286, -inf
  %v4301 = vrot.slane %v4300, 4
  %v4302 = vmax.f32 %v4300, %v4301
  %v4303 = vrot.slane %v4302, 2
  %v4304 = vmax.f32 %v4302, %v4303
  %v4305 = vrot.slane %v4304, 1
  %v4306 = vmax.f32 %v4304, %v4305
  %v4307 = vsel %vm761, %v4287, -inf
  %v4308 = vrot.slane %v4307, 4
  %v4309 = vmax.f32 %v4307, %v4308
  %v4310 = vrot.slane %v4309, 2
  %v4311 = vmax.f32 %v4309, %v4310
  %v4312 = vrot.slane %v4311, 1
  %v4313 = vmax.f32 %v4311, %v4312
  %v4314 = vsel %vm761, %v4288, -inf
  %v4315 = vrot.slane %v4314, 4
  %v4316 = vmax.f32 %v4314, %v4315
  %v4317 = vrot.slane %v4316, 2
  %v4318 = vmax.f32 %v4316, %v4317
  %v4319 = vrot.slane %v4318, 1
  %v4320 = vmax.f32 %v4318, %v4319
  %v4321 = vsel %vm761, %v4289, -inf
  %v4322 = vrot.slane %v4321, 4
  %v4323 = vmax.f32 %v4321, %v4322
  %v4324 = vrot.slane %v4323, 2
  %v4325 = vmax.f32 %v4323, %v4324
  %v4326 = vrot.slane %v4325, 1
  %v4327 = vmax.f32 %v4325, %v4326
  %v4328 = vsel %vm761, %v4290, -inf
  %v4329 = vrot.slane %v4328, 4
  %v4330 = vmax.f32 %v4328, %v4329
  %v4331 = vrot.slane %v4330, 2
  %v4332 = vmax.f32 %v4330, %v4331
  %v4333 = vrot.slane %v4332, 1
  %v4334 = vmax.f32 %v4332, %v4333
  %v4335 = vsel %vm761, %v4291, -inf
  %v4336 = vrot.slane %v4335, 4
  %v4337 = vmax.f32 %v4335, %v4336
  %v4338 = vrot.slane %v4337, 2
  %v4339 = vmax.f32 %v4337, %v4338
  %v4340 = vrot.slane %v4339, 1
  %v4341 = vmax.f32 %v4339, %v4340
  %v4342 = vsel %vm761, %v4292, -inf
  %v4343 = vrot.slane %v4342, 4
  %v4344 = vmax.f32 %v4342, %v4343
  %v4345 = vrot.slane %v4344, 2
  %v4346 = vmax.f32 %v4344, %v4345
  %v4347 = vrot.slane %v4346, 1
  %v4348 = vmax.f32 %v4346, %v4347
  %v4349 = vsub.f32 %v4285, %v4299
  %v4350 = vsub.f32 %v4286, %v4306
  %v4351 = vsub.f32 %v4287, %v4313
  %v4352 = vsub.f32 %v4288, %v4320
  %v4353 = vsub.f32 %v4289, %v4327
  %v4354 = vsub.f32 %v4290, %v4334
  %v4355 = vsub.f32 %v4291, %v4341
  %v4356 = vsub.f32 %v4292, %v4348
  %v4357 = vmul.f32 %v4349, 1.442695
  %v4358 = vpow.pop %v4357
  %v4359 = vmul.f32 %v4350, 1.442695
  %v4360 = vpow.pop %v4359
  %v4361 = vmul.f32 %v4351, 1.442695
  %v4362 = vpow.pop %v4361
  %v4363 = vmul.f32 %v4352, 1.442695
  %v4364 = vpow.pop %v4363
  %v4365 = vmul.f32 %v4353, 1.442695
  %v4366 = vpow.pop %v4365
  %v4367 = vmul.f32 %v4354, 1.442695
  %v4368 = vpow.pop %v4367
  %v4369 = vmul.f32 %v4355, 1.442695
  %v4370 = vpow.pop %v4369
  %v4371 = vmul.f32 %v4356, 1.442695
  %v4372 = vpow.pop %v4371
  %v4373 = vsel %vm761, %v4358, 0.0
  %v4374 = vrot.slane %v4373, 4
  %v4375 = vadd.f32 %v4373, %v4374
  %v4376 = vrot.slane %v4375, 2
  %v4377 = vadd.f32 %v4375, %v4376
  %v4378 = vrot.slane %v4377, 1
  %v4379 = vadd.f32 %v4377, %v4378
  %v4380 = vsel %vm761, %v4360, 0.0
  %v4381 = vrot.slane %v4380, 4
  %v4382 = vadd.f32 %v4380, %v4381
  %v4383 = vrot.slane %v4382, 2
  %v4384 = vadd.f32 %v4382, %v4383
  %v4385 = vrot.slane %v4384, 1
  %v4386 = vadd.f32 %v4384, %v4385
  %v4387 = vsel %vm761, %v4362, 0.0
  %v4388 = vrot.slane %v4387, 4
  %v4389 = vadd.f32 %v4387, %v4388
  %v4390 = vrot.slane %v4389, 2
  %v4391 = vadd.f32 %v4389, %v4390
  %v4392 = vrot.slane %v4391, 1
  %v4393 = vadd.f32 %v4391, %v4392
  %v4394 = vsel %vm761, %v4364, 0.0
  %v4395 = vrot.slane %v4394, 4
  %v4396 = vadd.f32 %v4394, %v4395
  %v4397 = vrot.slane %v4396, 2
  %v4398 = vadd.f32 %v4396, %v4397
  %v4399 = vrot.slane %v4398, 1
  %v4400 = vadd.f32 %v4398, %v4399
  %v4401 = vsel %vm761, %v4366, 0.0
  %v4402 = vrot.slane %v4401, 4
  %v4403 = vadd.f32 %v4401, %v4402
  %v4404 = vrot.slane %v4403, 2
  %v4405 = vadd.f32 %v4403, %v4404
  %v4406 = vrot.slane %v4405, 1
  %v4407 = vadd.f32 %v4405, %v4406
  %v4408 = vsel %vm761, %v4368, 0.0
  %v4409 = vrot.slane %v4408, 4
  %v4410 = vadd.f32 %v4408, %v4409
  %v4411 = vrot.slane %v4410, 2
  %v4412 = vadd.f32 %v4410, %v4411
  %v4413 = vrot.slane %v4412, 1
  %v4414 = vadd.f32 %v4412, %v4413
  %v4415 = vsel %vm761, %v4370, 0.0
  %v4416 = vrot.slane %v4415, 4
  %v4417 = vadd.f32 %v4415, %v4416
  %v4418 = vrot.slane %v4417, 2
  %v4419 = vadd.f32 %v4417, %v4418
  %v4420 = vrot.slane %v4419, 1
  %v4421 = vadd.f32 %v4419, %v4420
  %v4422 = vsel %vm761, %v4372, 0.0
  %v4423 = vrot.slane %v4422, 4
  %v4424 = vadd.f32 %v4422, %v4423
  %v4425 = vrot.slane %v4424, 2
  %v4426 = vadd.f32 %v4424, %v4425
  %v4427 = vrot.slane %v4426, 1
  %v4428 = vadd.f32 %v4426, %v4427
  %v4429 = vrcp.pop %v4379
  %v4430 = vmul.f32 %v4358, %v4429
  %v4431 = vrcp.pop %v4386
  %v4432 = vmul.f32 %v4360, %v4431
  %v4433 = vrcp.pop %v4393
  %v4434 = vmul.f32 %v4362, %v4433
  %v4435 = vrcp.pop %v4400
  %v4436 = vmul.f32 %v4364, %v4435
  %v4437 = vrcp.pop %v4407
  %v4438 = vmul.f32 %v4366, %v4437
  %v4439 = vrcp.pop %v4414
  %v4440 = vmul.f32 %v4368, %v4439
  %v4441 = vrcp.pop %v4421
  %v4442 = vmul.f32 %v4370, %v4441
  %v4443 = vrcp.pop %v4428
  %v4444 = vmul.f32 %v4372, %v4443
  %v4445 = vld [vmem:[%s3] sm:$0xff]
  %v4446 = vld [vmem:[%s3 + $0x8] sm:$0xff]
  %v4447 = vld [vmem:[%s3 + $0x10] sm:$0xff]
  %v4448 = vld [vmem:[%s3 + $0x18] sm:$0xff]
  %v4449 = vld [vmem:[%s3 + $0x20] sm:$0xff]
  %v4450 = vld [vmem:[%s3 + $0x28] sm:$0xff]
  %v4451 = vld [vmem:[%s3 + $0x30] sm:$0xff]
  %v4452 = vld [vmem:[%s3 + $0x38] sm:$0xff]
  %4454 = vset.pattern.permute.xlu0 0
  %4455 = vperm.xlu0 %4454, %v4430
  %v4456 = vpop.permute.xlu0 %4455
  %4459 = vset.pattern.permute.xlu0 0
  %4460 = vperm.xlu0 %4459, %v4432
  %v4461 = vpop.permute.xlu0 %4460
  %4464 = vset.pattern.permute.xlu0 0
  %4465 = vperm.xlu0 %4464, %v4434
  %v4466 = vpop.permute.xlu0 %4465
  %4469 = vset.pattern.permute.xlu0 0
  %4470 = vperm.xlu0 %4469, %v4436
  %v4471 = vpop.permute.xlu0 %4470
  %4474 = vset.pattern.permute.xlu0 0
  %4475 = vperm.xlu0 %4474, %v4438
  %v4476 = vpop.permute.xlu0 %4475
  %4479 = vset.pattern.permute.xlu0 0
  %4480 = vperm.xlu0 %4479, %v4440
  %v4481 = vpop.permute.xlu0 %4480
  %4484 = vset.pattern.permute.xlu0 0
  %4485 = vperm.xlu0 %4484, %v4442
  %v4486 = vpop.permute.xlu0 %4485
  %4489 = vset.pattern.permute.xlu0 0
  %4490 = vperm.xlu0 %4489, %v4444
  %v4491 = vpop.permute.xlu0 %4490
  %v4493 = vmul.f32 %v4456, %v4445
  %v4494 = vmul.f32 %v4461, %v4446
  %v4495 = vmul.f32 %v4466, %v4447
  %v4496 = vmul.f32 %v4471, %v4448
  %v4497 = vmul.f32 %v4476, %v4449
  %v4498 = vmul.f32 %v4481, %v4450
  %v4499 = vmul.f32 %v4486, %v4451
  %v4500 = vmul.f32 %v4491, %v4452
  %v4501 = vrot.slane %v4493, 4
  %v4502 = vadd.f32 %v4493, %v4501
  %v4503 = vrot.slane %v4502, 2
  %v4504 = vadd.f32 %v4502, %v4503
  %v4505 = vrot.slane %v4504, 1
  %v4506 = vadd.f32 %v4504, %v4505
  %v4507 = vrot.slane %v4494, 4
  %v4508 = vadd.f32 %v4494, %v4507
  %v4509 = vrot.slane %v4508, 2
  %v4510 = vadd.f32 %v4508, %v4509
  %v4511 = vrot.slane %v4510, 1
  %v4512 = vadd.f32 %v4510, %v4511
  %v4513 = vrot.slane %v4495, 4
  %v4514 = vadd.f32 %v4495, %v4513
  %v4515 = vrot.slane %v4514, 2
  %v4516 = vadd.f32 %v4514, %v4515
  %v4517 = vrot.slane %v4516, 1
  %v4518 = vadd.f32 %v4516, %v4517
  %v4519 = vrot.slane %v4496, 4
  %v4520 = vadd.f32 %v4496, %v4519
  %v4521 = vrot.slane %v4520, 2
  %v4522 = vadd.f32 %v4520, %v4521
  %v4523 = vrot.slane %v4522, 1
  %v4524 = vadd.f32 %v4522, %v4523
  %v4525 = vrot.slane %v4497, 4
  %v4526 = vadd.f32 %v4497, %v4525
  %v4527 = vrot.slane %v4526, 2
  %v4528 = vadd.f32 %v4526, %v4527
  %v4529 = vrot.slane %v4528, 1
  %v4530 = vadd.f32 %v4528, %v4529
  %v4531 = vrot.slane %v4498, 4
  %v4532 = vadd.f32 %v4498, %v4531
  %v4533 = vrot.slane %v4532, 2
  %v4534 = vadd.f32 %v4532, %v4533
  %v4535 = vrot.slane %v4534, 1
  %v4536 = vadd.f32 %v4534, %v4535
  %v4537 = vrot.slane %v4499, 4
  %v4538 = vadd.f32 %v4499, %v4537
  %v4539 = vrot.slane %v4538, 2
  %v4540 = vadd.f32 %v4538, %v4539
  %v4541 = vrot.slane %v4540, 1
  %v4542 = vadd.f32 %v4540, %v4541
  %v4543 = vrot.slane %v4500, 4
  %v4544 = vadd.f32 %v4500, %v4543
  %v4545 = vrot.slane %v4544, 2
  %v4546 = vadd.f32 %v4544, %v4545
  %v4547 = vrot.slane %v4546, 1
  %v4548 = vadd.f32 %v4546, %v4547
  %v4557 = vsel %vm1026, %v4512, %v4506
  %v4558 = vsel %vm1028, %v4518, %v4557
  %v4559 = vsel %vm1030, %v4524, %v4558
  %v4560 = vsel %vm1032, %v4530, %v4559
  %v4561 = vsel %vm1034, %v4536, %v4560
  %v4562 = vsel %vm1036, %v4542, %v4561
  %v4563 = vsel %vm1038, %v4548, %v4562
  %v4565 = vld [vmem:[%s9] sm:$0xff]
  %v4566 = vld [vmem:[%s9 + $0x8] sm:$0xff]
  %v4567 = vld [vmem:[%s9 + $0x10] sm:$0xff]
  %v4568 = vld [vmem:[%s9 + $0x18] sm:$0xff]
  %v4569 = vld [vmem:[%s9 + $0x20] sm:$0xff]
  %v4570 = vld [vmem:[%s9 + $0x28] sm:$0xff]
  %v4571 = vld [vmem:[%s9 + $0x30] sm:$0xff]
  %v4572 = vld [vmem:[%s9 + $0x38] sm:$0xff]
  %v4573 = vld [vmem:[%s9 + $0x40] sm:$0xff]
  %v4574 = vld [vmem:[%s9 + $0x48] sm:$0xff]
  %v4575 = vld [vmem:[%s9 + $0x50] sm:$0xff]
  %v4576 = vld [vmem:[%s9 + $0x58] sm:$0xff]
  %v4577 = vld [vmem:[%s9 + $0x60] sm:$0xff]
  %v4578 = vld [vmem:[%s9 + $0x68] sm:$0xff]
  %v4579 = vld [vmem:[%s9 + $0x70] sm:$0xff]
  %v4580 = vld [vmem:[%s9 + $0x78] sm:$0xff]
  %v4581 = vld [vmem:[%s9 + $0x80] sm:$0xff]
  %v4582 = vld [vmem:[%s9 + $0x88] sm:$0xff]
  %v4583 = vld [vmem:[%s9 + $0x90] sm:$0xff]
  %v4584 = vld [vmem:[%s9 + $0x98] sm:$0xff]
  %v4585 = vld [vmem:[%s9 + $0xa0] sm:$0xff]
  %v4586 = vld [vmem:[%s9 + $0xa8] sm:$0xff]
  %v4587 = vld [vmem:[%s9 + $0xb0] sm:$0xff]
  %v4588 = vld [vmem:[%s9 + $0xb8] sm:$0xff]
  %v4589 = vld [vmem:[%s9 + $0xc0] sm:$0xff]
  %v4590 = vld [vmem:[%s9 + $0xc8] sm:$0xff]
  %v4591 = vld [vmem:[%s9 + $0xd0] sm:$0xff]
  %v4592 = vld [vmem:[%s9 + $0xd8] sm:$0xff]
  %v4593 = vld [vmem:[%s9 + $0xe0] sm:$0xff]
  %v4594 = vld [vmem:[%s9 + $0xe8] sm:$0xff]
  %v4595 = vld [vmem:[%s9 + $0xf0] sm:$0xff]
  %v4596 = vld [vmem:[%s9 + $0xf8] sm:$0xff]
  %4597 = vmatprep.subr.mxu0 0.0
  %4598 = vmatpush1.msra.mxu0 %v4580
  %4599 = vmatprep.subr.mxu0 0.0
  %4600 = vmatpush1.msra.mxu0 %v4579
  %4601 = vmatprep.subr.mxu0 0.0
  %4602 = vmatpush1.msra.mxu0 %v4578
  %4603 = vmatprep.subr.mxu0 0.0
  %4604 = vmatpush1.msra.mxu0 %v4577
  %4605 = vmatprep.subr.mxu0 0.0
  %4606 = vmatpush1.msra.mxu0 %v4576
  %4607 = vmatprep.subr.mxu0 0.0
  %4608 = vmatpush1.msra.mxu0 %v4575
  %4609 = vmatprep.subr.mxu0 0.0
  %4610 = vmatpush1.msra.mxu0 %v4574
  %4611 = vmatprep.subr.mxu0 0.0
  %4612 = vmatpush1.msra.mxu0 %v4573
  %4613 = vmatprep.subr.mxu0 0.0
  %4614 = vmatpush1.msra.mxu0 %v4572
  %4615 = vmatprep.subr.mxu0 0.0
  %4616 = vmatpush1.msra.mxu0 %v4571
  %4617 = vmatprep.subr.mxu0 0.0
  %4618 = vmatpush1.msra.mxu0 %v4570
  %4619 = vmatprep.subr.mxu0 0.0
  %4620 = vmatpush1.msra.mxu0 %v4569
  %4621 = vmatprep.subr.mxu0 0.0
  %4622 = vmatpush1.msra.mxu0 %v4568
  %4623 = vmatprep.subr.mxu0 0.0
  %4624 = vmatpush1.msra.mxu0 %v4567
  %4625 = vmatprep.subr.mxu0 0.0
  %4626 = vmatpush1.msra.mxu0 %v4566
  %4627 = vmatprep.subr.mxu0 0.0
  %4628 = vmatpush1.msra.mxu0 %v4565
  %4629 = vmatprep.subr.mxu0 0.0
  %4630 = vmatpush2.msra.mxu0 %v4596
  %4631 = vmatprep.subr.mxu0 0.0
  %4632 = vmatpush2.msra.mxu0 %v4595
  %4633 = vmatprep.subr.mxu0 0.0
  %4634 = vmatpush2.msra.mxu0 %v4594
  %4635 = vmatprep.subr.mxu0 0.0
  %4636 = vmatpush2.msra.mxu0 %v4593
  %4637 = vmatprep.subr.mxu0 0.0
  %4638 = vmatpush2.msra.mxu0 %v4592
  %4639 = vmatprep.subr.mxu0 0.0
  %4640 = vmatpush2.msra.mxu0 %v4591
  %4641 = vmatprep.subr.mxu0 0.0
  %4642 = vmatpush2.msra.mxu0 %v4590
  %4643 = vmatprep.subr.mxu0 0.0
  %4644 = vmatpush2.msra.mxu0 %v4589
  %4645 = vmatprep.subr.mxu0 0.0
  %4646 = vmatpush2.msra.mxu0 %v4588
  %4647 = vmatprep.subr.mxu0 0.0
  %4648 = vmatpush2.msra.mxu0 %v4587
  %4649 = vmatprep.subr.mxu0 0.0
  %4650 = vmatpush2.msra.mxu0 %v4586
  %4651 = vmatprep.subr.mxu0 0.0
  %4652 = vmatpush2.msra.mxu0 %v4585
  %4653 = vmatprep.subr.mxu0 0.0
  %4654 = vmatpush2.msra.mxu0 %v4584
  %4655 = vmatprep.subr.mxu0 0.0
  %4656 = vmatpush2.msra.mxu0 %v4583
  %4657 = vmatprep.subr.mxu0 0.0
  %4658 = vmatpush2.msra.mxu0 %v4582
  %4659 = vmatprep.subr.mxu0 0.0
  %4660 = vmatpush2.msra.mxu0 %v4581
  %4661 = vmatprep.mubr.f32.mxu0 %v4154
  %4662 = vmatmul.mubr.f32.gmra.mxu0 %v4563
  %v4663 = vpop.f32.mrf.mxu0
  %v4664 = vadd.f32 0.0, %v4663
  %v4665 = vpop.f32.mrf.mxu0
  %4666 = vdwg.mxu0
  %v4667 = vtanh.pop %v4664
  %v4669 = vcombine.high %v4667, %v4667
  %v4671 = vunpack.c.l.s4 1966171168
  %v4672 = vunpack.c.0.s8 %v4671
  %v4673 = vlaneseq
  %v4674 = vshrl.u32 %v4673, 7
  %v4675 = vsub.s32 %v4672, %v4674
  %v4676 = vrot.slane %v4667, %v4675
  %v4678 = vunpack.c.l.s4 1966171168
  %v4679 = vunpack.c.0.s8 %v4678
  %v4680 = vlaneseq
  %v4681 = vshrl.u32 %v4680, 7
  %v4682 = vsub.s32 %v4679, %v4681
  %v4683 = vrot.slane %v4669, %v4682
  %v4684 = vcombine.high %v4676, %v4676
  %v4685 = vcombine.high %v4683, %v4683
  %v4687 = vunpack.c.l.s4 1966171168
  %v4688 = vunpack.c.0.s8 %v4687
  %v4689 = vlaneseq
  %v4690 = vshrl.u32 %v4689, 7
  %v4691 = vsub.s32 %v4688, %v4690
  %v4692 = vrot.slane %v4676, %v4691
  %v4694 = vunpack.c.l.s4 1966171168
  %v4695 = vunpack.c.0.s8 %v4694
  %v4696 = vlaneseq
  %v4697 = vshrl.u32 %v4696, 7
  %v4698 = vsub.s32 %v4695, %v4697
  %v4699 = vrot.slane %v4683, %v4698
  %v4701 = vunpack.c.l.s4 1966171168
  %v4702 = vunpack.c.0.s8 %v4701
  %v4703 = vlaneseq
  %v4704 = vshrl.u32 %v4703, 7
  %v4705 = vsub.s32 %v4702, %v4704
  %v4706 = vrot.slane %v4684, %v4705
  %v4708 = vunpack.c.l.s4 1966171168
  %v4709 = vunpack.c.0.s8 %v4708
  %v4710 = vlaneseq
  %v4711 = vshrl.u32 %v4710, 7
  %v4712 = vsub.s32 %v4709, %v4711
  %v4713 = vrot.slane %v4685, %v4712
  %v4714 = vcombine.high %v4692, %v4692
  %v4715 = vcombine.high %v4699, %v4699
  %v4716 = vcombine.high %v4706, %v4706
  %v4717 = vcombine.high %v4713, %v4713
  %4726 = vst [vmem:[%s10 + $0x4] sm:$0x1] %v4692
  %4727 = vst [vmem:[%s10 + $0xc] sm:$0x1] %v4706
  %4728 = vst [vmem:[%s10 + $0x14] sm:$0x1] %v4714
  %4729 = vst [vmem:[%s10 + $0x1c] sm:$0x1] %v4716
  %4730 = vst [vmem:[%s10 + $0x24] sm:$0x1] %v4699
  %4731 = vst [vmem:[%s10 + $0x2c] sm:$0x1] %v4713
  %4732 = vst [vmem:[%s10 + $0x34] sm:$0x1] %v4715
  %4733 = vst [vmem:[%s10 + $0x3c] sm:$0x1] %v4717
  %v4734 = vld [vmem:[#allocation2 + $0xa0] sm:$0xff]
  %v4735 = vld [vmem:[#allocation2 + $0xa8] sm:$0xff]
  %v4736 = vld [vmem:[#allocation2 + $0xb0] sm:$0xff]
  %v4737 = vld [vmem:[#allocation2 + $0xb8] sm:$0xff]
  %v4738 = vld [vmem:[%s8] sm:$0xff]
  %v4739 = vld [vmem:[%s8 + $0x8] sm:$0xff]
  %v4740 = vld [vmem:[%s8 + $0x10] sm:$0xff]
  %v4741 = vld [vmem:[%s8 + $0x18] sm:$0xff]
  %v4742 = vld [vmem:[%s8 + $0x20] sm:$0xff]
  %v4743 = vld [vmem:[%s8 + $0x28] sm:$0xff]
  %v4744 = vld [vmem:[%s8 + $0x30] sm:$0xff]
  %v4745 = vld [vmem:[%s8 + $0x38] sm:$0xff]
  %v4746 = vld [vmem:[%s8 + $0x40] sm:$0xff]
  %v4747 = vld [vmem:[%s8 + $0x48] sm:$0xff]
  %v4748 = vld [vmem:[%s8 + $0x50] sm:$0xff]
  %v4749 = vld [vmem:[%s8 + $0x58] sm:$0xff]
  %v4750 = vld [vmem:[%s8 + $0x60] sm:$0xff]
  %v4751 = vld [vmem:[%s8 + $0x68] sm:$0xff]
  %v4752 = vld [vmem:[%s8 + $0x70] sm:$0xff]
  %v4753 = vld [vmem:[%s8 + $0x78] sm:$0xff]
  %v4754 = vld [vmem:[%s8 + $0x80] sm:$0xff]
  %v4755 = vld [vmem:[%s8 + $0x88] sm:$0xff]
  %v4756 = vld [vmem:[%s8 + $0x90] sm:$0xff]
  %v4757 = vld [vmem:[%s8 + $0x98] sm:$0xff]
  %v4758 = vld [vmem:[%s8 + $0xa0] sm:$0xff]
  %v4759 = vld [vmem:[%s8 + $0xa8] sm:$0xff]
  %v4760 = vld [vmem:[%s8 + $0xb0] sm:$0xff]
  %v4761 = vld [vmem:[%s8 + $0xb8] sm:$0xff]
  %v4762 = vld [vmem:[%s8 + $0xc0] sm:$0xff]
  %v4763 = vld [vmem:[%s8 + $0xc8] sm:$0xff]
  %v4764 = vld [vmem:[%s8 + $0xd0] sm:$0xff]
  %v4765 = vld [vmem:[%s8 + $0xd8] sm:$0xff]
  %v4766 = vld [vmem:[%s8 + $0xe0] sm:$0xff]
  %v4767 = vld [vmem:[%s8 + $0xe8] sm:$0xff]
  %v4768 = vld [vmem:[%s8 + $0xf0] sm:$0xff]
  %v4769 = vld [vmem:[%s8 + $0xf8] sm:$0xff]
  %v4770 = vld [vmem:[%s8 + $0x100] sm:$0xff]
  %v4771 = vld [vmem:[%s8 + $0x108] sm:$0xff]
  %v4772 = vld [vmem:[%s8 + $0x110] sm:$0xff]
  %v4773 = vld [vmem:[%s8 + $0x118] sm:$0xff]
  %v4774 = vld [vmem:[%s8 + $0x120] sm:$0xff]
  %v4775 = vld [vmem:[%s8 + $0x128] sm:$0xff]
  %v4776 = vld [vmem:[%s8 + $0x130] sm:$0xff]
  %v4777 = vld [vmem:[%s8 + $0x138] sm:$0xff]
  %v4778 = vld [vmem:[%s8 + $0x140] sm:$0xff]
  %v4779 = vld [vmem:[%s8 + $0x148] sm:$0xff]
  %v4780 = vld [vmem:[%s8 + $0x150] sm:$0xff]
  %v4781 = vld [vmem:[%s8 + $0x158] sm:$0xff]
  %v4782 = vld [vmem:[%s8 + $0x160] sm:$0xff]
  %v4783 = vld [vmem:[%s8 + $0x168] sm:$0xff]
  %v4784 = vld [vmem:[%s8 + $0x170] sm:$0xff]
  %v4785 = vld [vmem:[%s8 + $0x178] sm:$0xff]
  %v4786 = vld [vmem:[%s8 + $0x180] sm:$0xff]
  %v4787 = vld [vmem:[%s8 + $0x188] sm:$0xff]
  %v4788 = vld [vmem:[%s8 + $0x190] sm:$0xff]
  %v4789 = vld [vmem:[%s8 + $0x198] sm:$0xff]
  %v4790 = vld [vmem:[%s8 + $0x1a0] sm:$0xff]
  %v4791 = vld [vmem:[%s8 + $0x1a8] sm:$0xff]
  %v4792 = vld [vmem:[%s8 + $0x1b0] sm:$0xff]
  %v4793 = vld [vmem:[%s8 + $0x1b8] sm:$0xff]
  %v4794 = vld [vmem:[%s8 + $0x1c0] sm:$0xff]
  %v4795 = vld [vmem:[%s8 + $0x1c8] sm:$0xff]
  %v4796 = vld [vmem:[%s8 + $0x1d0] sm:$0xff]
  %v4797 = vld [vmem:[%s8 + $0x1d8] sm:$0xff]
  %v4798 = vld [vmem:[%s8 + $0x1e0] sm:$0xff]
  %v4799 = vld [vmem:[%s8 + $0x1e8] sm:$0xff]
  %v4800 = vld [vmem:[%s8 + $0x1f0] sm:$0xff]
  %v4801 = vld [vmem:[%s8 + $0x1f8] sm:$0xff]
  %v4802 = vld [vmem:[%s8 + $0x200] sm:$0xff]
  %v4803 = vld [vmem:[%s8 + $0x208] sm:$0xff]
  %v4804 = vld [vmem:[%s8 + $0x210] sm:$0xff]
  %v4805 = vld [vmem:[%s8 + $0x218] sm:$0xff]
  %v4806 = vld [vmem:[%s8 + $0x220] sm:$0xff]
  %v4807 = vld [vmem:[%s8 + $0x228] sm:$0xff]
  %v4808 = vld [vmem:[%s8 + $0x230] sm:$0xff]
  %v4809 = vld [vmem:[%s8 + $0x238] sm:$0xff]
  %v4810 = vld [vmem:[%s8 + $0x240] sm:$0xff]
  %v4811 = vld [vmem:[%s8 + $0x248] sm:$0xff]
  %v4812 = vld [vmem:[%s8 + $0x250] sm:$0xff]
  %v4813 = vld [vmem:[%s8 + $0x258] sm:$0xff]
  %v4814 = vld [vmem:[%s8 + $0x260] sm:$0xff]
  %v4815 = vld [vmem:[%s8 + $0x268] sm:$0xff]
  %v4816 = vld [vmem:[%s8 + $0x270] sm:$0xff]
  %v4817 = vld [vmem:[%s8 + $0x278] sm:$0xff]
  %v4818 = vld [vmem:[%s8 + $0x280] sm:$0xff]
  %v4819 = vld [vmem:[%s8 + $0x288] sm:$0xff]
  %v4820 = vld [vmem:[%s8 + $0x290] sm:$0xff]
  %v4821 = vld [vmem:[%s8 + $0x298] sm:$0xff]
  %v4822 = vld [vmem:[%s8 + $0x2a0] sm:$0xff]
  %v4823 = vld [vmem:[%s8 + $0x2a8] sm:$0xff]
  %v4824 = vld [vmem:[%s8 + $0x2b0] sm:$0xff]
  %v4825 = vld [vmem:[%s8 + $0x2b8] sm:$0xff]
  %v4826 = vld [vmem:[%s8 + $0x2c0] sm:$0xff]
  %v4827 = vld [vmem:[%s8 + $0x2c8] sm:$0xff]
  %v4828 = vld [vmem:[%s8 + $0x2d0] sm:$0xff]
  %v4829 = vld [vmem:[%s8 + $0x2d8] sm:$0xff]
  %v4830 = vld [vmem:[%s8 + $0x2e0] sm:$0xff]
  %v4831 = vld [vmem:[%s8 + $0x2e8] sm:$0xff]
  %v4832 = vld [vmem:[%s8 + $0x2f0] sm:$0xff]
  %v4833 = vld [vmem:[%s8 + $0x2f8] sm:$0xff]
  %v4834 = vld [vmem:[%s8 + $0x300] sm:$0xff]
  %v4835 = vld [vmem:[%s8 + $0x308] sm:$0xff]
  %v4836 = vld [vmem:[%s8 + $0x310] sm:$0xff]
  %v4837 = vld [vmem:[%s8 + $0x318] sm:$0xff]
  %v4838 = vld [vmem:[%s8 + $0x320] sm:$0xff]
  %v4839 = vld [vmem:[%s8 + $0x328] sm:$0xff]
  %v4840 = vld [vmem:[%s8 + $0x330] sm:$0xff]
  %v4841 = vld [vmem:[%s8 + $0x338] sm:$0xff]
  %v4842 = vld [vmem:[%s8 + $0x340] sm:$0xff]
  %v4843 = vld [vmem:[%s8 + $0x348] sm:$0xff]
  %v4844 = vld [vmem:[%s8 + $0x350] sm:$0xff]
  %v4845 = vld [vmem:[%s8 + $0x358] sm:$0xff]
  %v4846 = vld [vmem:[%s8 + $0x360] sm:$0xff]
  %v4847 = vld [vmem:[%s8 + $0x368] sm:$0xff]
  %v4848 = vld [vmem:[%s8 + $0x370] sm:$0xff]
  %v4849 = vld [vmem:[%s8 + $0x378] sm:$0xff]
  %v4850 = vld [vmem:[%s8 + $0x380] sm:$0xff]
  %v4851 = vld [vmem:[%s8 + $0x388] sm:$0xff]
  %v4852 = vld [vmem:[%s8 + $0x390] sm:$0xff]
  %v4853 = vld [vmem:[%s8 + $0x398] sm:$0xff]
  %v4854 = vld [vmem:[%s8 + $0x3a0] sm:$0xff]
  %v4855 = vld [vmem:[%s8 + $0x3a8] sm:$0xff]
  %v4856 = vld [vmem:[%s8 + $0x3b0] sm:$0xff]
  %v4857 = vld [vmem:[%s8 + $0x3b8] sm:$0xff]
  %v4858 = vld [vmem:[%s8 + $0x3c0] sm:$0xff]
  %v4859 = vld [vmem:[%s8 + $0x3c8] sm:$0xff]
  %v4860 = vld [vmem:[%s8 + $0x3d0] sm:$0xff]
  %v4861 = vld [vmem:[%s8 + $0x3d8] sm:$0xff]
  %v4862 = vld [vmem:[%s8 + $0x3e0] sm:$0xff]
  %v4863 = vld [vmem:[%s8 + $0x3e8] sm:$0xff]
  %v4864 = vld [vmem:[%s8 + $0x3f0] sm:$0xff]
  %v4865 = vld [vmem:[%s8 + $0x3f8] sm:$0xff]
  %4866 = vmatprep.subr.mxu0 %v4799
  %4867 = vmatpush1.msra.mxu0 %v4798
  %4868 = vmatprep.subr.mxu0 %v4795
  %4869 = vmatpush1.msra.mxu0 %v4794
  %4870 = vmatprep.subr.mxu0 %v4791
  %4871 = vmatpush1.msra.mxu0 %v4790
  %4872 = vmatprep.subr.mxu0 %v4787
  %4873 = vmatpush1.msra.mxu0 %v4786
  %4874 = vmatprep.subr.mxu0 %v4783
  %4875 = vmatpush1.msra.mxu0 %v4782
  %4876 = vmatprep.subr.mxu0 %v4779
  %4877 = vmatpush1.msra.mxu0 %v4778
  %4878 = vmatprep.subr.mxu0 %v4775
  %4879 = vmatpush1.msra.mxu0 %v4774
  %4880 = vmatprep.subr.mxu0 %v4771
  %4881 = vmatpush1.msra.mxu0 %v4770
  %4882 = vmatprep.subr.mxu0 %v4767
  %4883 = vmatpush1.msra.mxu0 %v4766
  %4884 = vmatprep.subr.mxu0 %v4763
  %4885 = vmatpush1.msra.mxu0 %v4762
  %4886 = vmatprep.subr.mxu0 %v4759
  %4887 = vmatpush1.msra.mxu0 %v4758
  %4888 = vmatprep.subr.mxu0 %v4755
  %4889 = vmatpush1.msra.mxu0 %v4754
  %4890 = vmatprep.subr.mxu0 %v4751
  %4891 = vmatpush1.msra.mxu0 %v4750
  %4892 = vmatprep.subr.mxu0 %v4747
  %4893 = vmatpush1.msra.mxu0 %v4746
  %4894 = vmatprep.subr.mxu0 %v4743
  %4895 = vmatpush1.msra.mxu0 %v4742
  %4896 = vmatprep.subr.mxu0 %v4739
  %4897 = vmatpush1.msra.mxu0 %v4738
  %4898 = vmatprep.subr.mxu0 %v4863
  %4899 = vmatpush2.msra.mxu0 %v4862
  %4900 = vmatprep.subr.mxu0 %v4859
  %4901 = vmatpush2.msra.mxu0 %v4858
  %4902 = vmatprep.subr.mxu0 %v4855
  %4903 = vmatpush2.msra.mxu0 %v4854
  %4904 = vmatprep.subr.mxu0 %v4851
  %4905 = vmatpush2.msra.mxu0 %v4850
  %4906 = vmatprep.subr.mxu0 %v4847
  %4907 = vmatpush2.msra.mxu0 %v4846
  %4908 = vmatprep.subr.mxu0 %v4843
  %4909 = vmatpush2.msra.mxu0 %v4842
  %4910 = vmatprep.subr.mxu0 %v4839
  %4911 = vmatpush2.msra.mxu0 %v4838
  %4912 = vmatprep.subr.mxu0 %v4835
  %4913 = vmatpush2.msra.mxu0 %v4834
  %4914 = vmatprep.subr.mxu0 %v4831
  %4915 = vmatpush2.msra.mxu0 %v4830
  %4916 = vmatprep.subr.mxu0 %v4827
  %4917 = vmatpush2.msra.mxu0 %v4826
  %4918 = vmatprep.subr.mxu0 %v4823
  %4919 = vmatpush2.msra.mxu0 %v4822
  %4920 = vmatprep.subr.mxu0 %v4819
  %4921 = vmatpush2.msra.mxu0 %v4818
  %4922 = vmatprep.subr.mxu0 %v4815
  %4923 = vmatpush2.msra.mxu0 %v4814
  %4924 = vmatprep.subr.mxu0 %v4811
  %4925 = vmatpush2.msra.mxu0 %v4810
  %4926 = vmatprep.subr.mxu0 %v4807
  %4927 = vmatpush2.msra.mxu0 %v4806
  %4928 = vmatprep.subr.mxu0 %v4803
  %4929 = vmatpush2.msra.mxu0 %v4802
  %4930 = vmatprep.mubr.f32.mxu0 %v4154
  %4931 = vmatmul.mubr.f32.gmra.mxu0 %v4667
  %v4932 = vpop.f32.mrf.mxu0
  %v4933 = vadd.f32 0.0, %v4932
  %v4934 = vpop.f32.mrf.mxu0
  %v4935 = vadd.f32 0.0, %v4934
  %4936 = vdwg.mxu0
  %4937 = vmatprep.subr.mxu0 %v4801
  %4938 = vmatpush1.msra.mxu0 %v4800
  %4939 = vmatprep.subr.mxu0 %v4797
  %4940 = vmatpush1.msra.mxu0 %v4796
  %4941 = vmatprep.subr.mxu0 %v4793
  %4942 = vmatpush1.msra.mxu0 %v4792
  %4943 = vmatprep.subr.mxu0 %v4789
  %4944 = vmatpush1.msra.mxu0 %v4788
  %4945 = vmatprep.subr.mxu0 %v4785
  %4946 = vmatpush1.msra.mxu0 %v4784
  %4947 = vmatprep.subr.mxu0 %v4781
  %4948 = vmatpush1.msra.mxu0 %v4780
  %4949 = vmatprep.subr.mxu0 %v4777
  %4950 = vmatpush1.msra.mxu0 %v4776
  %4951 = vmatprep.subr.mxu0 %v4773
  %4952 = vmatpush1.msra.mxu0 %v4772
  %4953 = vmatprep.subr.mxu0 %v4769
  %4954 = vmatpush1.msra.mxu0 %v4768
  %4955 = vmatprep.subr.mxu0 %v4765
  %4956 = vmatpush1.msra.mxu0 %v4764
  %4957 = vmatprep.subr.mxu0 %v4761
  %4958 = vmatpush1.msra.mxu0 %v4760
  %4959 = vmatprep.subr.mxu0 %v4757
  %4960 = vmatpush1.msra.mxu0 %v4756
  %4961 = vmatprep.subr.mxu0 %v4753
  %4962 = vmatpush1.msra.mxu0 %v4752
  %4963 = vmatprep.subr.mxu0 %v4749
  %4964 = vmatpush1.msra.mxu0 %v4748
  %4965 = vmatprep.subr.mxu0 %v4745
  %4966 = vmatpush1.msra.mxu0 %v4744
  %4967 = vmatprep.subr.mxu0 %v4741
  %4968 = vmatpush1.msra.mxu0 %v4740
  %4969 = vmatprep.subr.mxu0 %v4865
  %4970 = vmatpush2.msra.mxu0 %v4864
  %4971 = vmatprep.subr.mxu0 %v4861
  %4972 = vmatpush2.msra.mxu0 %v4860
  %4973 = vmatprep.subr.mxu0 %v4857
  %4974 = vmatpush2.msra.mxu0 %v4856
  %4975 = vmatprep.subr.mxu0 %v4853
  %4976 = vmatpush2.msra.mxu0 %v4852
  %4977 = vmatprep.subr.mxu0 %v4849
  %4978 = vmatpush2.msra.mxu0 %v4848
  %4979 = vmatprep.subr.mxu0 %v4845
  %4980 = vmatpush2.msra.mxu0 %v4844
  %4981 = vmatprep.subr.mxu0 %v4841
  %4982 = vmatpush2.msra.mxu0 %v4840
  %4983 = vmatprep.subr.mxu0 %v4837
  %4984 = vmatpush2.msra.mxu0 %v4836
  %4985 = vmatprep.subr.mxu0 %v4833
  %4986 = vmatpush2.msra.mxu0 %v4832
  %4987 = vmatprep.subr.mxu0 %v4829
  %4988 = vmatpush2.msra.mxu0 %v4828
  %4989 = vmatprep.subr.mxu0 %v4825
  %4990 = vmatpush2.msra.mxu0 %v4824
  %4991 = vmatprep.subr.mxu0 %v4821
  %4992 = vmatpush2.msra.mxu0 %v4820
  %4993 = vmatprep.subr.mxu0 %v4817
  %4994 = vmatpush2.msra.mxu0 %v4816
  %4995 = vmatprep.subr.mxu0 %v4813
  %4996 = vmatpush2.msra.mxu0 %v4812
  %4997 = vmatprep.subr.mxu0 %v4809
  %4998 = vmatpush2.msra.mxu0 %v4808
  %4999 = vmatprep.subr.mxu0 %v4805
  %5000 = vmatpush2.msra.mxu0 %v4804
  %5001 = vmatprep.mubr.f32.mxu0 %v4154
  %5002 = vmatmul.mubr.f32.gmra.mxu0 %v4667
  %v5003 = vpop.f32.mrf.mxu0
  %v5004 = vadd.f32 0.0, %v5003
  %v5005 = vpop.f32.mrf.mxu0
  %v5006 = vadd.f32 0.0, %v5005
  %5007 = vdwg.mxu0
  %v5008 = vadd.f32 %v4734, %v4933
  %v5009 = vadd.f32 %v4735, %v4935
  %v5010 = vadd.f32 %v4736, %v5004
  %v5011 = vadd.f32 %v4737, %v5006
  %v5012 = vxor.u32 %v5008, 2147483648
  %v5013 = vmul.f32 %v5012, 1.442695
  %v5014 = vpow.pop %v5013
  %v5015 = vadd.f32 %v5014, 1.0
  %v5016 = vrcp.pop %v5015
  %v5017 = vmul.f32 1.0, %v5016
  %v5018 = vxor.u32 %v5009, 2147483648
  %v5019 = vmul.f32 %v5018, 1.442695
  %v5020 = vpow.pop %v5019
  %v5021 = vadd.f32 %v5020, 1.0
  %v5022 = vrcp.pop %v5021
  %v5023 = vmul.f32 1.0, %v5022
  %v5024 = vtanh.pop %v5010
  %v5025 = vxor.u32 %v5011, 2147483648
  %v5026 = vmul.f32 %v5025, 1.442695
  %v5027 = vpow.pop %v5026
  %v5028 = vadd.f32 %v5027, 1.0
  %v5029 = vrcp.pop %v5028
  %v5030 = vmul.f32 1.0, %v5029
  %v5031 = vmul.f32 %v5023, %v4152
  %v5032 = vmul.f32 %v5017, %v5024
  %v5033 = vadd.f32 %v5031, %v5032
  %v5034 = vtanh.pop %v5033
  %v5035 = vmul.f32 %v5030, %v5034
  %v5037 = vcombine.high %v5035, %v5035
  %v5039 = vunpack.c.l.s4 1966171168
  %v5040 = vunpack.c.0.s8 %v5039
  %v5041 = vlaneseq
  %v5042 = vshrl.u32 %v5041, 7
  %v5043 = vsub.s32 %v5040, %v5042
  %v5044 = vrot.slane %v5035, %v5043
  %v5046 = vunpack.c.l.s4 1966171168
  %v5047 = vunpack.c.0.s8 %v5046
  %v5048 = vlaneseq
  %v5049 = vshrl.u32 %v5048, 7
  %v5050 = vsub.s32 %v5047, %v5049
  %v5051 = vrot.slane %v5037, %v5050
  %v5052 = vcombine.high %v5044, %v5044
  %v5053 = vcombine.high %v5051, %v5051
  %v5055 = vunpack.c.l.s4 1966171168
  %v5056 = vunpack.c.0.s8 %v5055
  %v5057 = vlaneseq
  %v5058 = vshrl.u32 %v5057, 7
  %v5059 = vsub.s32 %v5056, %v5058
  %v5060 = vrot.slane %v5044, %v5059
  %v5062 = vunpack.c.l.s4 1966171168
  %v5063 = vunpack.c.0.s8 %v5062
  %v5064 = vlaneseq
  %v5065 = vshrl.u32 %v5064, 7
  %v5066 = vsub.s32 %v5063, %v5065
  %v5067 = vrot.slane %v5051, %v5066
  %v5069 = vunpack.c.l.s4 1966171168
  %v5070 = vunpack.c.0.s8 %v5069
  %v5071 = vlaneseq
  %v5072 = vshrl.u32 %v5071, 7
  %v5073 = vsub.s32 %v5070, %v5072
  %v5074 = vrot.slane %v5052, %v5073
  %v5076 = vunpack.c.l.s4 1966171168
  %v5077 = vunpack.c.0.s8 %v5076
  %v5078 = vlaneseq
  %v5079 = vshrl.u32 %v5078, 7
  %v5080 = vsub.s32 %v5077, %v5079
  %v5081 = vrot.slane %v5053, %v5080
  %v5082 = vcombine.high %v5060, %v5060
  %v5083 = vcombine.high %v5067, %v5067
  %v5084 = vcombine.high %v5074, %v5074
  %v5085 = vcombine.high %v5081, %v5081
  %v5086 = vld [vmem:[%s4] sm:$0xff]
  %v5087 = vld [vmem:[%s4 + $0x8] sm:$0xff]
  %v5088 = vld [vmem:[%s4 + $0x10] sm:$0xff]
  %v5089 = vld [vmem:[%s4 + $0x18] sm:$0xff]
  %v5090 = vld [vmem:[%s4 + $0x20] sm:$0xff]
  %v5091 = vld [vmem:[%s4 + $0x28] sm:$0xff]
  %v5092 = vld [vmem:[%s4 + $0x30] sm:$0xff]
  %v5093 = vld [vmem:[%s4 + $0x38] sm:$0xff]
  %v5094 = vlaneseq
  %v5095 = vshrl.u32 %v5094, 7
  %v5096 = vsub.s32 0, %v5095
  %v5097 = vrot.slane %v5060, %v5096
  %v5098 = vlaneseq
  %v5099 = vshrl.u32 %v5098, 7
  %v5100 = vsub.s32 0, %v5099
  %v5101 = vrot.slane %v5074, %v5100
  %v5102 = vlaneseq
  %v5103 = vshrl.u32 %v5102, 7
  %v5104 = vsub.s32 0, %v5103
  %v5105 = vrot.slane %v5082, %v5104
  %v5106 = vlaneseq
  %v5107 = vshrl.u32 %v5106, 7
  %v5108 = vsub.s32 0, %v5107
  %v5109 = vrot.slane %v5084, %v5108
  %v5110 = vlaneseq
  %v5111 = vshrl.u32 %v5110, 7
  %v5112 = vsub.s32 0, %v5111
  %v5113 = vrot.slane %v5067, %v5112
  %v5114 = vlaneseq
  %v5115 = vshrl.u32 %v5114, 7
  %v5116 = vsub.s32 0, %v5115
  %v5117 = vrot.slane %v5081, %v5116
  %v5118 = vlaneseq
  %v5119 = vshrl.u32 %v5118, 7
  %v5120 = vsub.s32 0, %v5119
  %v5121 = vrot.slane %v5083, %v5120
  %v5122 = vlaneseq
  %v5123 = vshrl.u32 %v5122, 7
  %v5124 = vsub.s32 0, %v5123
  %v5125 = vrot.slane %v5085, %v5124
  %v5134 = vmul.f32 %v5097, %v5086
  %v5135 = vmul.f32 %v5101, %v5087
  %v5136 = vmul.f32 %v5105, %v5088
  %v5137 = vmul.f32 %v5109, %v5089
  %v5138 = vmul.f32 %v5113, %v5090
  %v5139 = vmul.f32 %v5117, %v5091
  %v5140 = vmul.f32 %v5121, %v5092
  %v5141 = vmul.f32 %v5125, %v5093
  %5142 = vadd.xlane.f32.xlu0 %v5134
  %v5143 = vpop.xlane.xlu0 %5142
  %5144 = vadd.xlane.f32.xlu0 %v5135
  %v5145 = vpop.xlane.xlu0 %5144
  %5146 = vadd.xlane.f32.xlu0 %v5136
  %v5147 = vpop.xlane.xlu0 %5146
  %5148 = vadd.xlane.f32.xlu0 %v5137
  %v5149 = vpop.xlane.xlu0 %5148
  %5150 = vadd.xlane.f32.xlu0 %v5138
  %v5151 = vpop.xlane.xlu0 %5150
  %5152 = vadd.xlane.f32.xlu0 %v5139
  %v5153 = vpop.xlane.xlu0 %5152
  %5154 = vadd.xlane.f32.xlu0 %v5140
  %v5155 = vpop.xlane.xlu0 %5154
  %5156 = vadd.xlane.f32.xlu0 %v5141
  %v5157 = vpop.xlane.xlu0 %5156
  %v5158 = vld [vmem:[%s5] sm:$0xff]
  %v5159 = vld [vmem:[%s5 + $0x8] sm:$0xff]
  %v5160 = vld [vmem:[%s5 + $0x10] sm:$0xff]
  %v5161 = vld [vmem:[%s5 + $0x18] sm:$0xff]
  %v5162 = vld [vmem:[%s5 + $0x20] sm:$0xff]
  %v5163 = vld [vmem:[%s5 + $0x28] sm:$0xff]
  %v5164 = vld [vmem:[%s5 + $0x30] sm:$0xff]
  %v5165 = vld [vmem:[%s5 + $0x38] sm:$0xff]
  %v5166 = vadd.f32 %v5143, %v5158
  %v5167 = vadd.f32 %v5145, %v5159
  %v5168 = vadd.f32 %v5147, %v5160
  %v5169 = vadd.f32 %v5149, %v5161
  %v5170 = vadd.f32 %v5151, %v5162
  %v5171 = vadd.f32 %v5153, %v5163
  %v5172 = vadd.f32 %v5155, %v5164
  %v5173 = vadd.f32 %v5157, %v5165
  %v5174 = vsel %vm761, %v5166, -inf
  %v5175 = vrot.slane %v5174, 4
  %v5176 = vmax.f32 %v5174, %v5175
  %v5177 = vrot.slane %v5176, 2
  %v5178 = vmax.f32 %v5176, %v5177
  %v5179 = vrot.slane %v5178, 1
  %v5180 = vmax.f32 %v5178, %v5179
  %v5181 = vsel %vm761, %v5167, -inf
  %v5182 = vrot.slane %v5181, 4
  %v5183 = vmax.f32 %v5181, %v5182
  %v5184 = vrot.slane %v5183, 2
  %v5185 = vmax.f32 %v5183, %v5184
  %v5186 = vrot.slane %v5185, 1
  %v5187 = vmax.f32 %v5185, %v5186
  %v5188 = vsel %vm761, %v5168, -inf
  %v5189 = vrot.slane %v5188, 4
  %v5190 = vmax.f32 %v5188, %v5189
  %v5191 = vrot.slane %v5190, 2
  %v5192 = vmax.f32 %v5190, %v5191
  %v5193 = vrot.slane %v5192, 1
  %v5194 = vmax.f32 %v5192, %v5193
  %v5195 = vsel %vm761, %v5169, -inf
  %v5196 = vrot.slane %v5195, 4
  %v5197 = vmax.f32 %v5195, %v5196
  %v5198 = vrot.slane %v5197, 2
  %v5199 = vmax.f32 %v5197, %v5198
  %v5200 = vrot.slane %v5199, 1
  %v5201 = vmax.f32 %v5199, %v5200
  %v5202 = vsel %vm761, %v5170, -inf
  %v5203 = vrot.slane %v5202, 4
  %v5204 = vmax.f32 %v5202, %v5203
  %v5205 = vrot.slane %v5204, 2
  %v5206 = vmax.f32 %v5204, %v5205
  %v5207 = vrot.slane %v5206, 1
  %v5208 = vmax.f32 %v5206, %v5207
  %v5209 = vsel %vm761, %v5171, -inf
  %v5210 = vrot.slane %v5209, 4
  %v5211 = vmax.f32 %v5209, %v5210
  %v5212 = vrot.slane %v5211, 2
  %v5213 = vmax.f32 %v5211, %v5212
  %v5214 = vrot.slane %v5213, 1
  %v5215 = vmax.f32 %v5213, %v5214
  %v5216 = vsel %vm761, %v5172, -inf
  %v5217 = vrot.slane %v5216, 4
  %v5218 = vmax.f32 %v5216, %v5217
  %v5219 = vrot.slane %v5218, 2
  %v5220 = vmax.f32 %v5218, %v5219
  %v5221 = vrot.slane %v5220, 1
  %v5222 = vmax.f32 %v5220, %v5221
  %v5223 = vsel %vm761, %v5173, -inf
  %v5224 = vrot.slane %v5223, 4
  %v5225 = vmax.f32 %v5223, %v5224
  %v5226 = vrot.slane %v5225, 2
  %v5227 = vmax.f32 %v5225, %v5226
  %v5228 = vrot.slane %v5227, 1
  %v5229 = vmax.f32 %v5227, %v5228
  %v5230 = vsub.f32 %v5166, %v5180
  %v5231 = vsub.f32 %v5167, %v5187
  %v5232 = vsub.f32 %v5168, %v5194
  %v5233 = vsub.f32 %v5169, %v5201
  %v5234 = vsub.f32 %v5170, %v5208
  %v5235 = vsub.f32 %v5171, %v5215
  %v5236 = vsub.f32 %v5172, %v5222
  %v5237 = vsub.f32 %v5173, %v5229
  %v5238 = vmul.f32 %v5230, 1.442695
  %v5239 = vpow.pop %v5238
  %v5240 = vmul.f32 %v5231, 1.442695
  %v5241 = vpow.pop %v5240
  %v5242 = vmul.f32 %v5232, 1.442695
  %v5243 = vpow.pop %v5242
  %v5244 = vmul.f32 %v5233, 1.442695
  %v5245 = vpow.pop %v5244
  %v5246 = vmul.f32 %v5234, 1.442695
  %v5247 = vpow.pop %v5246
  %v5248 = vmul.f32 %v5235, 1.442695
  %v5249 = vpow.pop %v5248
  %v5250 = vmul.f32 %v5236, 1.442695
  %v5251 = vpow.pop %v5250
  %v5252 = vmul.f32 %v5237, 1.442695
  %v5253 = vpow.pop %v5252
  %v5254 = vsel %vm761, %v5239, 0.0
  %v5255 = vrot.slane %v5254, 4
  %v5256 = vadd.f32 %v5254, %v5255
  %v5257 = vrot.slane %v5256, 2
  %v5258 = vadd.f32 %v5256, %v5257
  %v5259 = vrot.slane %v5258, 1
  %v5260 = vadd.f32 %v5258, %v5259
  %v5261 = vsel %vm761, %v5241, 0.0
  %v5262 = vrot.slane %v5261, 4
  %v5263 = vadd.f32 %v5261, %v5262
  %v5264 = vrot.slane %v5263, 2
  %v5265 = vadd.f32 %v5263, %v5264
  %v5266 = vrot.slane %v5265, 1
  %v5267 = vadd.f32 %v5265, %v5266
  %v5268 = vsel %vm761, %v5243, 0.0
  %v5269 = vrot.slane %v5268, 4
  %v5270 = vadd.f32 %v5268, %v5269
  %v5271 = vrot.slane %v5270, 2
  %v5272 = vadd.f32 %v5270, %v5271
  %v5273 = vrot.slane %v5272, 1
  %v5274 = vadd.f32 %v5272, %v5273
  %v5275 = vsel %vm761, %v5245, 0.0
  %v5276 = vrot.slane %v5275, 4
  %v5277 = vadd.f32 %v5275, %v5276
  %v5278 = vrot.slane %v5277, 2
  %v5279 = vadd.f32 %v5277, %v5278
  %v5280 = vrot.slane %v5279, 1
  %v5281 = vadd.f32 %v5279, %v5280
  %v5282 = vsel %vm761, %v5247, 0.0
  %v5283 = vrot.slane %v5282, 4
  %v5284 = vadd.f32 %v5282, %v5283
  %v5285 = vrot.slane %v5284, 2
  %v5286 = vadd.f32 %v5284, %v5285
  %v5287 = vrot.slane %v5286, 1
  %v5288 = vadd.f32 %v5286, %v5287
  %v5289 = vsel %vm761, %v5249, 0.0
  %v5290 = vrot.slane %v5289, 4
  %v5291 = vadd.f32 %v5289, %v5290
  %v5292 = vrot.slane %v5291, 2
  %v5293 = vadd.f32 %v5291, %v5292
  %v5294 = vrot.slane %v5293, 1
  %v5295 = vadd.f32 %v5293, %v5294
  %v5296 = vsel %vm761, %v5251, 0.0
  %v5297 = vrot.slane %v5296, 4
  %v5298 = vadd.f32 %v5296, %v5297
  %v5299 = vrot.slane %v5298, 2
  %v5300 = vadd.f32 %v5298, %v5299
  %v5301 = vrot.slane %v5300, 1
  %v5302 = vadd.f32 %v5300, %v5301
  %v5303 = vsel %vm761, %v5253, 0.0
  %v5304 = vrot.slane %v5303, 4
  %v5305 = vadd.f32 %v5303, %v5304
  %v5306 = vrot.slane %v5305, 2
  %v5307 = vadd.f32 %v5305, %v5306
  %v5308 = vrot.slane %v5307, 1
  %v5309 = vadd.f32 %v5307, %v5308
  %v5310 = vrcp.pop %v5260
  %v5311 = vmul.f32 %v5239, %v5310
  %v5312 = vrcp.pop %v5267
  %v5313 = vmul.f32 %v5241, %v5312
  %v5314 = vrcp.pop %v5274
  %v5315 = vmul.f32 %v5243, %v5314
  %v5316 = vrcp.pop %v5281
  %v5317 = vmul.f32 %v5245, %v5316
  %v5318 = vrcp.pop %v5288
  %v5319 = vmul.f32 %v5247, %v5318
  %v5320 = vrcp.pop %v5295
  %v5321 = vmul.f32 %v5249, %v5320
  %v5322 = vrcp.pop %v5302
  %v5323 = vmul.f32 %v5251, %v5322
  %v5324 = vrcp.pop %v5309
  %v5325 = vmul.f32 %v5253, %v5324
  %v5326 = vld [vmem:[%s3] sm:$0xff]
  %v5327 = vld [vmem:[%s3 + $0x8] sm:$0xff]
  %v5328 = vld [vmem:[%s3 + $0x10] sm:$0xff]
  %v5329 = vld [vmem:[%s3 + $0x18] sm:$0xff]
  %v5330 = vld [vmem:[%s3 + $0x20] sm:$0xff]
  %v5331 = vld [vmem:[%s3 + $0x28] sm:$0xff]
  %v5332 = vld [vmem:[%s3 + $0x30] sm:$0xff]
  %v5333 = vld [vmem:[%s3 + $0x38] sm:$0xff]
  %5335 = vset.pattern.permute.xlu0 0
  %5336 = vperm.xlu0 %5335, %v5311
  %v5337 = vpop.permute.xlu0 %5336
  %5340 = vset.pattern.permute.xlu0 0
  %5341 = vperm.xlu0 %5340, %v5313
  %v5342 = vpop.permute.xlu0 %5341
  %5345 = vset.pattern.permute.xlu0 0
  %5346 = vperm.xlu0 %5345, %v5315
  %v5347 = vpop.permute.xlu0 %5346
  %5350 = vset.pattern.permute.xlu0 0
  %5351 = vperm.xlu0 %5350, %v5317
  %v5352 = vpop.permute.xlu0 %5351
  %5355 = vset.pattern.permute.xlu0 0
  %5356 = vperm.xlu0 %5355, %v5319
  %v5357 = vpop.permute.xlu0 %5356
  %5360 = vset.pattern.permute.xlu0 0
  %5361 = vperm.xlu0 %5360, %v5321
  %v5362 = vpop.permute.xlu0 %5361
  %5365 = vset.pattern.permute.xlu0 0
  %5366 = vperm.xlu0 %5365, %v5323
  %v5367 = vpop.permute.xlu0 %5366
  %5370 = vset.pattern.permute.xlu0 0
  %5371 = vperm.xlu0 %5370, %v5325
  %v5372 = vpop.permute.xlu0 %5371
  %v5374 = vmul.f32 %v5337, %v5326
  %v5375 = vmul.f32 %v5342, %v5327
  %v5376 = vmul.f32 %v5347, %v5328
  %v5377 = vmul.f32 %v5352, %v5329
  %v5378 = vmul.f32 %v5357, %v5330
  %v5379 = vmul.f32 %v5362, %v5331
  %v5380 = vmul.f32 %v5367, %v5332
  %v5381 = vmul.f32 %v5372, %v5333
  %v5382 = vrot.slane %v5374, 4
  %v5383 = vadd.f32 %v5374, %v5382
  %v5384 = vrot.slane %v5383, 2
  %v5385 = vadd.f32 %v5383, %v5384
  %v5386 = vrot.slane %v5385, 1
  %v5387 = vadd.f32 %v5385, %v5386
  %v5388 = vrot.slane %v5375, 4
  %v5389 = vadd.f32 %v5375, %v5388
  %v5390 = vrot.slane %v5389, 2
  %v5391 = vadd.f32 %v5389, %v5390
  %v5392 = vrot.slane %v5391, 1
  %v5393 = vadd.f32 %v5391, %v5392
  %v5394 = vrot.slane %v5376, 4
  %v5395 = vadd.f32 %v5376, %v5394
  %v5396 = vrot.slane %v5395, 2
  %v5397 = vadd.f32 %v5395, %v5396
  %v5398 = vrot.slane %v5397, 1
  %v5399 = vadd.f32 %v5397, %v5398
  %v5400 = vrot.slane %v5377, 4
  %v5401 = vadd.f32 %v5377, %v5400
  %v5402 = vrot.slane %v5401, 2
  %v5403 = vadd.f32 %v5401, %v5402
  %v5404 = vrot.slane %v5403, 1
  %v5405 = vadd.f32 %v5403, %v5404
  %v5406 = vrot.slane %v5378, 4
  %v5407 = vadd.f32 %v5378, %v5406
  %v5408 = vrot.slane %v5407, 2
  %v5409 = vadd.f32 %v5407, %v5408
  %v5410 = vrot.slane %v5409, 1
  %v5411 = vadd.f32 %v5409, %v5410
  %v5412 = vrot.slane %v5379, 4
  %v5413 = vadd.f32 %v5379, %v5412
  %v5414 = vrot.slane %v5413, 2
  %v5415 = vadd.f32 %v5413, %v5414
  %v5416 = vrot.slane %v5415, 1
  %v5417 = vadd.f32 %v5415, %v5416
  %v5418 = vrot.slane %v5380, 4
  %v5419 = vadd.f32 %v5380, %v5418
  %v5420 = vrot.slane %v5419, 2
  %v5421 = vadd.f32 %v5419, %v5420
  %v5422 = vrot.slane %v5421, 1
  %v5423 = vadd.f32 %v5421, %v5422
  %v5424 = vrot.slane %v5381, 4
  %v5425 = vadd.f32 %v5381, %v5424
  %v5426 = vrot.slane %v5425, 2
  %v5427 = vadd.f32 %v5425, %v5426
  %v5428 = vrot.slane %v5427, 1
  %v5429 = vadd.f32 %v5427, %v5428
  %v5438 = vsel %vm1026, %v5393, %v5387
  %v5439 = vsel %vm1028, %v5399, %v5438
  %v5440 = vsel %vm1030, %v5405, %v5439
  %v5441 = vsel %vm1032, %v5411, %v5440
  %v5442 = vsel %vm1034, %v5417, %v5441
  %v5443 = vsel %vm1036, %v5423, %v5442
  %v5444 = vsel %vm1038, %v5429, %v5443
  %v5446 = vld [vmem:[%s9] sm:$0xff]
  %v5447 = vld [vmem:[%s9 + $0x8] sm:$0xff]
  %v5448 = vld [vmem:[%s9 + $0x10] sm:$0xff]
  %v5449 = vld [vmem:[%s9 + $0x18] sm:$0xff]
  %v5450 = vld [vmem:[%s9 + $0x20] sm:$0xff]
  %v5451 = vld [vmem:[%s9 + $0x28] sm:$0xff]
  %v5452 = vld [vmem:[%s9 + $0x30] sm:$0xff]
  %v5453 = vld [vmem:[%s9 + $0x38] sm:$0xff]
  %v5454 = vld [vmem:[%s9 + $0x40] sm:$0xff]
  %v5455 = vld [vmem:[%s9 + $0x48] sm:$0xff]
  %v5456 = vld [vmem:[%s9 + $0x50] sm:$0xff]
  %v5457 = vld [vmem:[%s9 + $0x58] sm:$0xff]
  %v5458 = vld [vmem:[%s9 + $0x60] sm:$0xff]
  %v5459 = vld [vmem:[%s9 + $0x68] sm:$0xff]
  %v5460 = vld [vmem:[%s9 + $0x70] sm:$0xff]
  %v5461 = vld [vmem:[%s9 + $0x78] sm:$0xff]
  %v5462 = vld [vmem:[%s9 + $0x80] sm:$0xff]
  %v5463 = vld [vmem:[%s9 + $0x88] sm:$0xff]
  %v5464 = vld [vmem:[%s9 + $0x90] sm:$0xff]
  %v5465 = vld [vmem:[%s9 + $0x98] sm:$0xff]
  %v5466 = vld [vmem:[%s9 + $0xa0] sm:$0xff]
  %v5467 = vld [vmem:[%s9 + $0xa8] sm:$0xff]
  %v5468 = vld [vmem:[%s9 + $0xb0] sm:$0xff]
  %v5469 = vld [vmem:[%s9 + $0xb8] sm:$0xff]
  %v5470 = vld [vmem:[%s9 + $0xc0] sm:$0xff]
  %v5471 = vld [vmem:[%s9 + $0xc8] sm:$0xff]
  %v5472 = vld [vmem:[%s9 + $0xd0] sm:$0xff]
  %v5473 = vld [vmem:[%s9 + $0xd8] sm:$0xff]
  %v5474 = vld [vmem:[%s9 + $0xe0] sm:$0xff]
  %v5475 = vld [vmem:[%s9 + $0xe8] sm:$0xff]
  %v5476 = vld [vmem:[%s9 + $0xf0] sm:$0xff]
  %v5477 = vld [vmem:[%s9 + $0xf8] sm:$0xff]
  %5478 = vmatprep.subr.mxu0 0.0
  %5479 = vmatpush1.msra.mxu0 %v5461
  %5480 = vmatprep.subr.mxu0 0.0
  %5481 = vmatpush1.msra.mxu0 %v5460
  %5482 = vmatprep.subr.mxu0 0.0
  %5483 = vmatpush1.msra.mxu0 %v5459
  %5484 = vmatprep.subr.mxu0 0.0
  %5485 = vmatpush1.msra.mxu0 %v5458
  %5486 = vmatprep.subr.mxu0 0.0
  %5487 = vmatpush1.msra.mxu0 %v5457
  %5488 = vmatprep.subr.mxu0 0.0
  %5489 = vmatpush1.msra.mxu0 %v5456
  %5490 = vmatprep.subr.mxu0 0.0
  %5491 = vmatpush1.msra.mxu0 %v5455
  %5492 = vmatprep.subr.mxu0 0.0
  %5493 = vmatpush1.msra.mxu0 %v5454
  %5494 = vmatprep.subr.mxu0 0.0
  %5495 = vmatpush1.msra.mxu0 %v5453
  %5496 = vmatprep.subr.mxu0 0.0
  %5497 = vmatpush1.msra.mxu0 %v5452
  %5498 = vmatprep.subr.mxu0 0.0
  %5499 = vmatpush1.msra.mxu0 %v5451
  %5500 = vmatprep.subr.mxu0 0.0
  %5501 = vmatpush1.msra.mxu0 %v5450
  %5502 = vmatprep.subr.mxu0 0.0
  %5503 = vmatpush1.msra.mxu0 %v5449
  %5504 = vmatprep.subr.mxu0 0.0
  %5505 = vmatpush1.msra.mxu0 %v5448
  %5506 = vmatprep.subr.mxu0 0.0
  %5507 = vmatpush1.msra.mxu0 %v5447
  %5508 = vmatprep.subr.mxu0 0.0
  %5509 = vmatpush1.msra.mxu0 %v5446
  %5510 = vmatprep.subr.mxu0 0.0
  %5511 = vmatpush2.msra.mxu0 %v5477
  %5512 = vmatprep.subr.mxu0 0.0
  %5513 = vmatpush2.msra.mxu0 %v5476
  %5514 = vmatprep.subr.mxu0 0.0
  %5515 = vmatpush2.msra.mxu0 %v5475
  %5516 = vmatprep.subr.mxu0 0.0
  %5517 = vmatpush2.msra.mxu0 %v5474
  %5518 = vmatprep.subr.mxu0 0.0
  %5519 = vmatpush2.msra.mxu0 %v5473
  %5520 = vmatprep.subr.mxu0 0.0
  %5521 = vmatpush2.msra.mxu0 %v5472
  %5522 = vmatprep.subr.mxu0 0.0
  %5523 = vmatpush2.msra.mxu0 %v5471
  %5524 = vmatprep.subr.mxu0 0.0
  %5525 = vmatpush2.msra.mxu0 %v5470
  %5526 = vmatprep.subr.mxu0 0.0
  %5527 = vmatpush2.msra.mxu0 %v5469
  %5528 = vmatprep.subr.mxu0 0.0
  %5529 = vmatpush2.msra.mxu0 %v5468
  %5530 = vmatprep.subr.mxu0 0.0
  %5531 = vmatpush2.msra.mxu0 %v5467
  %5532 = vmatprep.subr.mxu0 0.0
  %5533 = vmatpush2.msra.mxu0 %v5466
  %5534 = vmatprep.subr.mxu0 0.0
  %5535 = vmatpush2.msra.mxu0 %v5465
  %5536 = vmatprep.subr.mxu0 0.0
  %5537 = vmatpush2.msra.mxu0 %v5464
  %5538 = vmatprep.subr.mxu0 0.0
  %5539 = vmatpush2.msra.mxu0 %v5463
  %5540 = vmatprep.subr.mxu0 0.0
  %5541 = vmatpush2.msra.mxu0 %v5462
  %5542 = vmatprep.mubr.f32.mxu0 %v5035
  %5543 = vmatmul.mubr.f32.gmra.mxu0 %v5444
  %v5544 = vpop.f32.mrf.mxu0
  %v5545 = vadd.f32 0.0, %v5544
  %v5546 = vpop.f32.mrf.mxu0
  %5547 = vdwg.mxu0
  %v5548 = vtanh.pop %v5545
  %v5550 = vcombine.high %v5548, %v5548
  %v5552 = vunpack.c.l.s4 1966171168
  %v5553 = vunpack.c.0.s8 %v5552
  %v5554 = vlaneseq
  %v5555 = vshrl.u32 %v5554, 7
  %v5556 = vsub.s32 %v5553, %v5555
  %v5557 = vrot.slane %v5548, %v5556
  %v5559 = vunpack.c.l.s4 1966171168
  %v5560 = vunpack.c.0.s8 %v5559
  %v5561 = vlaneseq
  %v5562 = vshrl.u32 %v5561, 7
  %v5563 = vsub.s32 %v5560, %v5562
  %v5564 = vrot.slane %v5550, %v5563
  %v5565 = vcombine.high %v5557, %v5557
  %v5566 = vcombine.high %v5564, %v5564
  %v5568 = vunpack.c.l.s4 1966171168
  %v5569 = vunpack.c.0.s8 %v5568
  %v5570 = vlaneseq
  %v5571 = vshrl.u32 %v5570, 7
  %v5572 = vsub.s32 %v5569, %v5571
  %v5573 = vrot.slane %v5557, %v5572
  %v5575 = vunpack.c.l.s4 1966171168
  %v5576 = vunpack.c.0.s8 %v5575
  %v5577 = vlaneseq
  %v5578 = vshrl.u32 %v5577, 7
  %v5579 = vsub.s32 %v5576, %v5578
  %v5580 = vrot.slane %v5564, %v5579
  %v5582 = vunpack.c.l.s4 1966171168
  %v5583 = vunpack.c.0.s8 %v5582
  %v5584 = vlaneseq
  %v5585 = vshrl.u32 %v5584, 7
  %v5586 = vsub.s32 %v5583, %v5585
  %v5587 = vrot.slane %v5565, %v5586
  %v5589 = vunpack.c.l.s4 1966171168
  %v5590 = vunpack.c.0.s8 %v5589
  %v5591 = vlaneseq
  %v5592 = vshrl.u32 %v5591, 7
  %v5593 = vsub.s32 %v5590, %v5592
  %v5594 = vrot.slane %v5566, %v5593
  %v5595 = vcombine.high %v5573, %v5573
  %v5596 = vcombine.high %v5580, %v5580
  %v5597 = vcombine.high %v5587, %v5587
  %v5598 = vcombine.high %v5594, %v5594
  %5607 = vst [vmem:[%s10 + $0x5] sm:$0x1] %v5573
  %5608 = vst [vmem:[%s10 + $0xd] sm:$0x1] %v5587
  %5609 = vst [vmem:[%s10 + $0x15] sm:$0x1] %v5595
  %5610 = vst [vmem:[%s10 + $0x1d] sm:$0x1] %v5597
  %5611 = vst [vmem:[%s10 + $0x25] sm:$0x1] %v5580
  %5612 = vst [vmem:[%s10 + $0x2d] sm:$0x1] %v5594
  %5613 = vst [vmem:[%s10 + $0x35] sm:$0x1] %v5596
  %5614 = vst [vmem:[%s10 + $0x3d] sm:$0x1] %v5598
  %5615 = vst [vmem:[%s11] sm:$0xff] %v5035
  %5616 = vst [vmem:[%s12] sm:$0xff] %v5033
  // Predicated region
  $region42: #{cc_decoder_forward.1} parent=0 // pred_check
    _
  $region43: #{cc_decoder_forward.1} parent=0 // pred_check_branch
    %5618 = sbr.rel (0) target = $region45
  $region44: #{cc_decoder_forward.1} parent=0 // pred_region
    _
  $region45: #{cc_decoder_forward.1} parent=0 // pred_fallthru
    _
  // Predicated region
  $region46: #{cc_decoder_forward.1} parent=0 // pred_check
    _
  $region47: #{cc_decoder_forward.1} parent=0 // pred_check_branch
    %5620 = sbr.rel (0) target = $region49
  $region48: #{cc_decoder_forward.1} parent=0 // pred_region
    _
  $region49: #{cc_decoder_forward.1} parent=0 // pred_fallthru
    _
  // Predicated region
  $region50: #{cc_decoder_forward.1} parent=0 // pred_check
    _
  $region51: #{cc_decoder_forward.1} parent=0 // pred_check_branch
    %5622 = sbr.rel (0) target = $region53
  $region52: #{cc_decoder_forward.1} parent=0 // pred_region
    _
  $region53: #{cc_decoder_forward.1} parent=0 // pred_fallthru
    _
  // Predicated region
  $region54: #{cc_decoder_forward.1} parent=0 // pred_check
    _
  $region55: #{cc_decoder_forward.1} parent=0 // pred_check_branch
    %5624 = sbr.rel (0) target = $region57
  $region56: #{cc_decoder_forward.1} parent=0 // pred_region
    _
  $region57: #{cc_decoder_forward.1} parent=0 // pred_fallthru
    _
  // Predicated region
  $region58: #{cc_decoder_forward.1} parent=0 // pred_check
    _
  $region59: #{cc_decoder_forward.1} parent=0 // pred_check_branch
    %5626 = sbr.rel (0) target = $region61
  $region60: #{cc_decoder_forward.1} parent=0 // pred_region
    _
  $region61: #{cc_decoder_forward.1} parent=0 // pred_fallthru
    _
  // Predicated region
  $region62: #{cc_decoder_forward.1} parent=0 // pred_check
    _
  $region63: #{cc_decoder_forward.1} parent=0 // pred_check_branch
    %5628 = sbr.rel (0) target = $region65
  $region64: #{cc_decoder_forward.1} parent=0 // pred_region
    _
  $region65: #{cc_decoder_forward.1} parent=0 // pred_fallthru
    _

</llo_original>
